<compile_context>
chip_gen: v6e
topology: v6e:2x2x1
jax: 0.10.0
libtpu: 0.0.40
codegen_flags: <defaults>
</compile_context>

<pallas_src>
import math

import jax
import jax.numpy as jnp
from jax import lax
from jax.experimental import pallas as pl
from jax.experimental.pallas import tpu as pltpu

# ---------------- small BERT config (scaled down from bert-base) -------------
VOCAB = 128
MAX_POS = 16
TYPE_VOCAB = 2
HIDDEN = 128            # bert-base-chinese uses 768; scaled down, still 128-lane
N_LAYERS = 2
N_HEADS = 2
HEAD_DIM = HIDDEN // N_HEADS     # 64
HEAD_PAD = 128                   # per-head width padded to a full lane tile
INTERMEDIATE = 256
N_CLASSES = 5
CLS_PAD = 128                    # classifier lanes padded to a full 128 tile
OUT_ROWS = 8                     # classifier sublanes padded to a full 8 tile
LN_EPS = 1e-12


# ---------------------------- in-kernel helpers -------------------------------
def _gelu(x):
    # TODO(synk): HF BERT default is erf-GELU; tanh approx differs by ~1e-3.
    c = math.sqrt(2.0 / math.pi)
    return 0.5 * x * (1.0 + jnp.tanh(c * (x + 0.044715 * x * x * x)))


def _layernorm(x, g, b):
    mu = jnp.mean(x, axis=-1, keepdims=True)
    xc = x - mu
    var = jnp.mean(xc * xc, axis=-1, keepdims=True)
    return xc * lax.rsqrt(var + LN_EPS) * g + b


def _bf(x):
    return x.astype(jnp.bfloat16)


# ------------------------------ fused kernel ---------------------------------
def _bert_kernel(x_ref, bias_ref, eg_ref, eb_ref,
                 wqkv_ref, bqkv_ref, wo_ref, bo_ref, ln1g_ref, ln1b_ref,
                 w1_ref, b1_ref, w2_ref, b2_ref, ln2g_ref, ln2b_ref,
                 poolw_ref, poolb_ref, clsw_ref, clsb_ref,
                 out_ref):
    # one batch element per grid step
    # embeddings (word + pos + type pre-added in wrapper) -> LayerNorm
    x = _layernorm(x_ref[0], eg_ref[...], eb_ref[...])          # (S, H) f32
    bias_b = bias_ref[0]                                         # (1, S) additive mask
    # embedding dropout is identity at inference

    for l in range(N_LAYERS):
        # fused QKV projection; head-major, lane-padded columns; scale folded into Q
        qkv = jnp.dot(_bf(x), wqkv_ref[l],
                      preferred_element_type=jnp.float32) + bqkv_ref[l]
        qkv = _bf(qkv)                                           # one full-width cast

        ctx_heads = []
        for h in range(N_HEADS):
            # each slice below is a 128-lane-aligned tile (zero-padded tail cols)
            q = qkv[:, (0 * N_HEADS + h) * HEAD_PAD:(0 * N_HEADS + h + 1) * HEAD_PAD]
            k = qkv[:, (1 * N_HEADS + h) * HEAD_PAD:(1 * N_HEADS + h + 1) * HEAD_PAD]
            v = qkv[:, (2 * N_HEADS + h) * HEAD_PAD:(2 * N_HEADS + h + 1) * HEAD_PAD]
            # q @ k^T via dot_general contracting the last axes (padded cols are 0)
            s = lax.dot_general(q, k, (((1,), (1,)), ((), ())),
                                preferred_element_type=jnp.float32)   # (S, S)
            s = s + bias_b
            m = jnp.max(s, axis=-1, keepdims=True)
            p = jnp.exp(s - m)
            p = p * pl.reciprocal(jnp.sum(p, axis=-1, keepdims=True), approx=True)
            ctx_heads.append(jnp.dot(_bf(p), v,
                                     preferred_element_type=jnp.float32))  # (S, HEAD_PAD)
        # lane-aligned concat (each piece is a full 128-lane tile, pad cols are 0)
        ctx = jnp.concatenate(ctx_heads, axis=-1)                # (S, nH*HEAD_PAD)

        attn_out = jnp.dot(_bf(ctx), wo_ref[l],
                           preferred_element_type=jnp.float32) + bo_ref[l]
        x = _layernorm(attn_out + x, ln1g_ref[l], ln1b_ref[l])

        h1 = _gelu(jnp.dot(_bf(x), w1_ref[l],
                           preferred_element_type=jnp.float32) + b1_ref[l])
        ff = jnp.dot(_bf(h1), w2_ref[l],
                     preferred_element_type=jnp.float32) + b2_ref[l]
        x = _layernorm(ff + x, ln2g_ref[l], ln2b_ref[l])

    # pooler (dense + tanh on [CLS]) -> dropout (identity, eval) -> Linear -> ReLU
    cls = x[0:1, :]                                              # (1, H) aligned slice
    pooled = jnp.tanh(jnp.dot(_bf(cls), poolw_ref[...],
                              preferred_element_type=jnp.float32) + poolb_ref[...])
    logits = jnp.dot(_bf(pooled), clsw_ref[...],
                     preferred_element_type=jnp.float32) + clsb_ref[...]
    # full (8,128) lane/sublane-dense unmasked store; wrapper slices row 0
    out_ref[0] = jnp.broadcast_to(jnp.maximum(logits, 0.0), (OUT_ROWS, CLS_PAD))


# ------------------------ parameters (deterministic) -------------------------
def init_params(key):
    keys = iter(jax.random.split(key, 64))

    def w(shape, scale=0.02):
        return (scale * jax.random.normal(next(keys), shape)).astype(jnp.float32)

    zeros = lambda s: jnp.zeros(s, jnp.float32)
    ones = lambda s: jnp.ones(s, jnp.float32)

    attn_scale = 1.0 / math.sqrt(HEAD_DIM)

    def pack_cols(mat):
        # (R, H): split columns per head, zero-pad each head Dh -> HEAD_PAD
        parts = []
        for h in range(N_HEADS):
            blk = mat[:, h * HEAD_DIM:(h + 1) * HEAD_DIM]
            parts.append(jnp.pad(blk, ((0, 0), (0, HEAD_PAD - HEAD_DIM))))
        return jnp.concatenate(parts, axis=-1)                   # (R, nH*HEAD_PAD)

    def pack_rows(mat):
        # (H, H): split rows per head, zero-pad each head Dh -> HEAD_PAD
        parts = []
        for h in range(N_HEADS):
            blk = mat[h * HEAD_DIM:(h + 1) * HEAD_DIM, :]
            parts.append(jnp.pad(blk, ((0, HEAD_PAD - HEAD_DIM), (0, 0))))
        return jnp.concatenate(parts, axis=0)                    # (nH*HEAD_PAD, H)

    def layer_qkv():
        wq, wk, wv = w((HIDDEN, HIDDEN)), w((HIDDEN, HIDDEN)), w((HIDDEN, HIDDEN))
        bq, bk, bv = zeros((1, HIDDEN)), zeros((1, HIDDEN)), zeros((1, HIDDEN))
        # fold 1/sqrt(Dh) into Q weight + bias at init (free at runtime)
        wp = jnp.concatenate([pack_cols(wq * attn_scale),
                              pack_cols(wk), pack_cols(wv)], axis=-1)
        bp = jnp.concatenate([pack_cols(bq * attn_scale),
                              pack_cols(bk), pack_cols(bv)], axis=-1)
        return wp.astype(jnp.bfloat16), bp

    qkv_pairs = [layer_qkv() for _ in range(N_LAYERS)]

    params = {
        "word_emb": w((VOCAB, HIDDEN)),
        "pos_emb": w((MAX_POS, HIDDEN)),
        "type_emb": w((TYPE_VOCAB, HIDDEN)),
        "emb_ln_g": ones((1, HIDDEN)), "emb_ln_b": zeros((1, HIDDEN)),
        # (L, H, 3*nH*HEAD_PAD) bf16, head-major lane-padded, scale folded into Q
        "wqkv": jnp.stack([p[0] for p in qkv_pairs], axis=0),
        "bqkv": jnp.stack([p[1] for p in qkv_pairs], axis=0),    # (L, 1, 3*nH*HEAD_PAD)
        # (L, nH*HEAD_PAD, H) bf16, rows padded to match the padded head contexts
        "wo": jnp.stack([pack_rows(w((HIDDEN, HIDDEN))).astype(jnp.bfloat16)
                         for _ in range(N_LAYERS)], axis=0),
        "bo": zeros((N_LAYERS, 1, HIDDEN)),
        "ln1_g": ones((N_LAYERS, 1, HIDDEN)), "ln1_b": zeros((N_LAYERS, 1, HIDDEN)),
        "w1": jnp.stack([w((HIDDEN, INTERMEDIATE)).astype(jnp.bfloat16)
                         for _ in range(N_LAYERS)], axis=0),
        "b1": zeros((N_LAYERS, 1, INTERMEDIATE)),
        "w2": jnp.stack([w((INTERMEDIATE, HIDDEN)).astype(jnp.bfloat16)
                         for _ in range(N_LAYERS)], axis=0),
        "b2": zeros((N_LAYERS, 1, HIDDEN)),
        "ln2_g": ones((N_LAYERS, 1, HIDDEN)), "ln2_b": zeros((N_LAYERS, 1, HIDDEN)),
        "pool_w": w((HIDDEN, HIDDEN)).astype(jnp.bfloat16), "pool_b": zeros((1, HIDDEN)),
        # classifier weight/bias padded to 128 lanes; extra columns are zero
        "cls_w": jnp.pad(w((HIDDEN, N_CLASSES)),
                         ((0, 0), (0, CLS_PAD - N_CLASSES))).astype(jnp.bfloat16),
        "cls_b": zeros((1, CLS_PAD)),
    }
    return params


# ------------------------------ forward pass ---------------------------------
def bert_classifier_forward(params, input_ids, mask):
    B, S = input_ids.shape
    H = HIDDEN

    # token-id gather + pos/type broadcast-add: cheap XLA glue around the kernel
    we = jnp.take(params["word_emb"], input_ids.reshape(-1), axis=0).reshape(B, S, H)
    pos_type = params["pos_emb"][:S] + params["type_emb"][0][None, :]     # (S, H)
    x = we + pos_type[None, :, :]                                         # (B, S, H)
    # additive attention mask: 0 where attended, -10000 where masked
    bias = ((1.0 - mask.astype(jnp.float32)) * -10000.0).reshape(B, 1, S)

    args = (x, bias, params["emb_ln_g"], params["emb_ln_b"],
            params["wqkv"], params["bqkv"], params["wo"], params["bo"],
            params["ln1_g"], params["ln1_b"],
            params["w1"], params["b1"], params["w2"], params["b2"],
            params["ln2_g"], params["ln2_b"],
            params["pool_w"], params["pool_b"], params["cls_w"], params["cls_b"])

    def rep_spec(shape):           # weights: same block every step -> resident
        zero = (0,) * len(shape)
        return pl.BlockSpec(shape, lambda b, z=zero: z)

    in_specs = [
        pl.BlockSpec((1, S, H), lambda b: (b, 0, 0)),       # per-batch activations
        pl.BlockSpec((1, 1, S), lambda b: (b, 0, 0)),       # per-batch mask bias
    ] + [rep_spec(a.shape) for a in args[2:]]

    out = pl.pallas_call(
        _bert_kernel,
        out_shape=jax.ShapeDtypeStruct((B, OUT_ROWS, CLS_PAD), jnp.float32),
        grid=(B,),
        in_specs=in_specs,
        out_specs=pl.BlockSpec((1, OUT_ROWS, CLS_PAD), lambda b: (b, 0, 0)),
        compiler_params=pltpu.CompilerParams(
            dimension_semantics=("parallel",)),               # megacore on v7x
    )(*args)

    return out[:, 0, :N_CLASSES]                              # (B, 5)


# ---------------------------------- main -------------------------------------
if __name__ == "__main__":
    B, S = 2, 8
    key = jax.random.PRNGKey(0)
    pkey, ikey = jax.random.split(key)

    params = init_params(pkey)
    input_ids = jax.random.randint(ikey, (B, S), 0, VOCAB, dtype=jnp.int32)
    mask = jnp.array([[1, 1, 1, 1, 1, 1, 1, 1],
                      [1, 1, 1, 1, 1, 1, 0, 0]], dtype=jnp.int32)

    out = jax.jit(bert_classifier_forward)(params, input_ids, mask)
    out = jax.block_until_ready(out)
    assert out.shape == (B, N_CLASSES)
    assert bool(jnp.all(out >= 0.0))     # final ReLU
    print("KERNEL_OK")
</pallas_src>

<mosaic_0001>
module attributes {stable_mosaic.version = 11 : i64} {
  func.func @_bert_kernel(%arg0: i32, %arg1: memref<1x8x128xf32, #tpu.memory_space<vmem>>, %arg2: memref<1x1x8xf32, #tpu.memory_space<vmem>>, %arg3: memref<1x128xf32, #tpu.memory_space<vmem>>, %arg4: memref<1x128xf32, #tpu.memory_space<vmem>>, %arg5: memref<2x128x768xbf16, #tpu.memory_space<vmem>>, %arg6: memref<2x1x768xf32, #tpu.memory_space<vmem>>, %arg7: memref<2x256x128xbf16, #tpu.memory_space<vmem>>, %arg8: memref<2x1x128xf32, #tpu.memory_space<vmem>>, %arg9: memref<2x1x128xf32, #tpu.memory_space<vmem>>, %arg10: memref<2x1x128xf32, #tpu.memory_space<vmem>>, %arg11: memref<2x128x256xbf16, #tpu.memory_space<vmem>>, %arg12: memref<2x1x256xf32, #tpu.memory_space<vmem>>, %arg13: memref<2x256x128xbf16, #tpu.memory_space<vmem>>, %arg14: memref<2x1x128xf32, #tpu.memory_space<vmem>>, %arg15: memref<2x1x128xf32, #tpu.memory_space<vmem>>, %arg16: memref<2x1x128xf32, #tpu.memory_space<vmem>>, %arg17: memref<128x128xbf16, #tpu.memory_space<vmem>>, %arg18: memref<1x128xf32, #tpu.memory_space<vmem>>, %arg19: memref<128x128xbf16, #tpu.memory_space<vmem>>, %arg20: memref<1x128xf32, #tpu.memory_space<vmem>>, %arg21: memref<1x8x128xf32, #tpu.memory_space<vmem>>) attributes {dimension_semantics = [#tpu.dimension_semantics<parallel>], iteration_bounds = array<i64: 2>, scalar_prefetch = 0 : i64, scratch_operands = 0 : i64, tpu.core_type = #tpu.core_type<tc>, window_params = [{transform_indices = @transform_0, window_bounds = array<i64: 1, 8, 128>}, {transform_indices = @transform_1, window_bounds = array<i64: 1, 1, 8>}, {pipeline_mode = #tpu.pipeline_mode<synchronous>, transform_indices = @transform_2, window_bounds = array<i64: 1, 128>}, {pipeline_mode = #tpu.pipeline_mode<synchronous>, transform_indices = @transform_3, window_bounds = array<i64: 1, 128>}, {pipeline_mode = #tpu.pipeline_mode<synchronous>, transform_indices = @transform_4, window_bounds = array<i64: 2, 128, 768>}, {pipeline_mode = #tpu.pipeline_mode<synchronous>, transform_indices = @transform_5, window_bounds = array<i64: 2, 1, 768>}, {pipeline_mode = #tpu.pipeline_mode<synchronous>, transform_indices = @transform_6, window_bounds = array<i64: 2, 256, 128>}, {pipeline_mode = #tpu.pipeline_mode<synchronous>, transform_indices = @transform_7, window_bounds = array<i64: 2, 1, 128>}, {pipeline_mode = #tpu.pipeline_mode<synchronous>, transform_indices = @transform_8, window_bounds = array<i64: 2, 1, 128>}, {pipeline_mode = #tpu.pipeline_mode<synchronous>, transform_indices = @transform_9, window_bounds = array<i64: 2, 1, 128>}, {pipeline_mode = #tpu.pipeline_mode<synchronous>, transform_indices = @transform_10, window_bounds = array<i64: 2, 128, 256>}, {pipeline_mode = #tpu.pipeline_mode<synchronous>, transform_indices = @transform_11, window_bounds = array<i64: 2, 1, 256>}, {pipeline_mode = #tpu.pipeline_mode<synchronous>, transform_indices = @transform_12, window_bounds = array<i64: 2, 256, 128>}, {pipeline_mode = #tpu.pipeline_mode<synchronous>, transform_indices = @transform_13, window_bounds = array<i64: 2, 1, 128>}, {pipeline_mode = #tpu.pipeline_mode<synchronous>, transform_indices = @transform_14, window_bounds = array<i64: 2, 1, 128>}, {pipeline_mode = #tpu.pipeline_mode<synchronous>, transform_indices = @transform_15, window_bounds = array<i64: 2, 1, 128>}, {pipeline_mode = #tpu.pipeline_mode<synchronous>, transform_indices = @transform_16, window_bounds = array<i64: 128, 128>}, {pipeline_mode = #tpu.pipeline_mode<synchronous>, transform_indices = @transform_17, window_bounds = array<i64: 1, 128>}, {pipeline_mode = #tpu.pipeline_mode<synchronous>, transform_indices = @transform_18, window_bounds = array<i64: 128, 128>}, {pipeline_mode = #tpu.pipeline_mode<synchronous>, transform_indices = @transform_19, window_bounds = array<i64: 1, 128>}, {transform_indices = @transform_20, window_bounds = array<i64: 1, 8, 128>}]} {
    %c0 = arith.constant 0 : index
    %c0_0 = arith.constant 0 : index
    %c0_1 = arith.constant 0 : index
    %0 = vector.load %arg1[%c0, %c0_0, %c0_1] : memref<1x8x128xf32, #tpu.memory_space<vmem>>, vector<1x8x128xf32>
    %1 = vector.shape_cast %0 : vector<1x8x128xf32> to vector<8x128xf32>
    %c0_2 = arith.constant 0 : index
    %c0_3 = arith.constant 0 : index
    %2 = vector.load %arg3[%c0_2, %c0_3] : memref<1x128xf32, #tpu.memory_space<vmem>>, vector<1x128xf32>
    %c0_4 = arith.constant 0 : index
    %c0_5 = arith.constant 0 : index
    %3 = vector.load %arg4[%c0_4, %c0_5] : memref<1x128xf32, #tpu.memory_space<vmem>>, vector<1x128xf32>
    %cst = arith.constant dense<0.000000e+00> : vector<8xf32>
    %4 = vector.multi_reduction <add>, %1, %cst [1] : vector<8x128xf32> to vector<8xf32>
    %5 = vector.shape_cast %4 : vector<8xf32> to vector<8x1xf32>
    %cst_6 = arith.constant 1.280000e+02 : f32
    %6 = vector.broadcast %cst_6 : f32 to vector<8x1xf32>
    %7 = arith.divf %5, %6 : vector<8x1xf32>
    %8 = vector.broadcast %7 : vector<8x1xf32> to vector<8x128xf32>
    %9 = arith.subf %1, %8 : vector<8x128xf32>
    %10 = arith.mulf %9, %9 : vector<8x128xf32>
    %cst_7 = arith.constant dense<0.000000e+00> : vector<8xf32>
    %11 = vector.multi_reduction <add>, %10, %cst_7 [1] : vector<8x128xf32> to vector<8xf32>
    %12 = vector.shape_cast %11 : vector<8xf32> to vector<8x1xf32>
    %cst_8 = arith.constant 1.280000e+02 : f32
    %13 = vector.broadcast %cst_8 : f32 to vector<8x1xf32>
    %14 = arith.divf %12, %13 : vector<8x1xf32>
    %cst_9 = arith.constant 9.99999996E-13 : f32
    %15 = vector.broadcast %cst_9 : f32 to vector<8x1xf32>
    %16 = arith.addf %14, %15 : vector<8x1xf32>
    %17 = math.rsqrt %16 : vector<8x1xf32>
    %18 = vector.broadcast %17 : vector<8x1xf32> to vector<8x128xf32>
    %19 = arith.mulf %9, %18 : vector<8x128xf32>
    %20 = vector.broadcast %2 : vector<1x128xf32> to vector<8x128xf32>
    %21 = arith.mulf %19, %20 : vector<8x128xf32>
    %22 = vector.broadcast %3 : vector<1x128xf32> to vector<8x128xf32>
    %23 = arith.addf %21, %22 : vector<8x128xf32>
    %c0_10 = arith.constant 0 : index
    %c0_11 = arith.constant 0 : index
    %c0_12 = arith.constant 0 : index
    %24 = vector.load %arg2[%c0_10, %c0_11, %c0_12] : memref<1x1x8xf32, #tpu.memory_space<vmem>>, vector<1x1x8xf32>
    %25 = vector.shape_cast %24 : vector<1x1x8xf32> to vector<1x8xf32>
    %26 = arith.truncf %23 : vector<8x128xf32> to vector<8x128xbf16>
    %c0_13 = arith.constant 0 : index
    %c0_14 = arith.constant 0 : index
    %c0_15 = arith.constant 0 : index
    %27 = vector.load %arg5[%c0_13, %c0_14, %c0_15] : memref<2x128x768xbf16, #tpu.memory_space<vmem>>, vector<1x128x768xbf16>
    %28 = vector.shape_cast %27 : vector<1x128x768xbf16> to vector<128x768xbf16>
    %cst_16 = arith.constant dense<0.000000e+00> : vector<8x768xf32>
    %29 = tpu.matmul %26, %28, %cst_16 {dimension_numbers = #tpu.dot_dimension_numbers<[1], [0], [0], [1], [0, 0, 1, 1], [], []>} : vector<8x128xbf16>, vector<128x768xbf16>, vector<8x768xf32> -> vector<8x768xf32>
    %c0_17 = arith.constant 0 : index
    %c0_18 = arith.constant 0 : index
    %c0_19 = arith.constant 0 : index
    %30 = vector.load %arg6[%c0_17, %c0_18, %c0_19] : memref<2x1x768xf32, #tpu.memory_space<vmem>>, vector<1x1x768xf32>
    %31 = vector.shape_cast %30 : vector<1x1x768xf32> to vector<1x768xf32>
    %32 = vector.broadcast %31 : vector<1x768xf32> to vector<8x768xf32>
    %33 = arith.addf %29, %32 : vector<8x768xf32>
    %34 = arith.truncf %33 : vector<8x768xf32> to vector<8x768xbf16>
    %35 = vector.extract_strided_slice %34 {offsets = [0, 0], sizes = [8, 128], strides = [1, 1]} : vector<8x768xbf16> to vector<8x128xbf16>
    %36 = vector.extract_strided_slice %34 {offsets = [0, 256], sizes = [8, 128], strides = [1, 1]} : vector<8x768xbf16> to vector<8x128xbf16>
    %37 = vector.extract_strided_slice %34 {offsets = [0, 512], sizes = [8, 128], strides = [1, 1]} : vector<8x768xbf16> to vector<8x128xbf16>
    %cst_20 = arith.constant dense<0.000000e+00> : vector<8x8xf32>
    %38 = tpu.matmul %35, %36, %cst_20 {dimension_numbers = #tpu.dot_dimension_numbers<[1], [1], [0], [0], [0, 0, 1, 0], [], []>} : vector<8x128xbf16>, vector<8x128xbf16>, vector<8x8xf32> -> vector<8x8xf32>
    %39 = vector.broadcast %25 : vector<1x8xf32> to vector<8x8xf32>
    %40 = arith.addf %38, %39 : vector<8x8xf32>
    %cst_21 = arith.constant dense<0xFF800000> : vector<8xf32>
    %41 = vector.multi_reduction <maximumf>, %40, %cst_21 [1] : vector<8x8xf32> to vector<8xf32>
    %42 = vector.shape_cast %41 : vector<8xf32> to vector<8x1xf32>
    %43 = vector.broadcast %42 : vector<8x1xf32> to vector<8x8xf32>
    %44 = arith.subf %40, %43 : vector<8x8xf32>
    %45 = math.exp %44 : vector<8x8xf32>
    %cst_22 = arith.constant dense<0.000000e+00> : vector<8xf32>
    %46 = vector.multi_reduction <add>, %45, %cst_22 [1] : vector<8x8xf32> to vector<8xf32>
    %47 = vector.shape_cast %46 : vector<8xf32> to vector<8x1xf32>
    %48 = tpu.reciprocal %47 {approx = true} : vector<8x1xf32> -> vector<8x1xf32>
    %49 = vector.broadcast %48 : vector<8x1xf32> to vector<8x8xf32>
    %50 = arith.mulf %45, %49 : vector<8x8xf32>
    %51 = arith.truncf %50 : vector<8x8xf32> to vector<8x8xbf16>
    %cst_23 = arith.constant dense<0.000000e+00> : vector<8x128xf32>
    %52 = tpu.matmul %51, %37, %cst_23 {dimension_numbers = #tpu.dot_dimension_numbers<[1], [0], [0], [1], [0, 0, 1, 1], [], []>} : vector<8x8xbf16>, vector<8x128xbf16>, vector<8x128xf32> -> vector<8x128xf32>
    %53 = vector.extract_strided_slice %34 {offsets = [0, 128], sizes = [8, 128], strides = [1, 1]} : vector<8x768xbf16> to vector<8x128xbf16>
    %54 = vector.extract_strided_slice %34 {offsets = [0, 384], sizes = [8, 128], strides = [1, 1]} : vector<8x768xbf16> to vector<8x128xbf16>
    %55 = vector.extract_strided_slice %34 {offsets = [0, 640], sizes = [8, 128], strides = [1, 1]} : vector<8x768xbf16> to vector<8x128xbf16>
    %cst_24 = arith.constant dense<0.000000e+00> : vector<8x8xf32>
    %56 = tpu.matmul %53, %54, %cst_24 {dimension_numbers = #tpu.dot_dimension_numbers<[1], [1], [0], [0], [0, 0, 1, 0], [], []>} : vector<8x128xbf16>, vector<8x128xbf16>, vector<8x8xf32> -> vector<8x8xf32>
    %57 = vector.broadcast %25 : vector<1x8xf32> to vector<8x8xf32>
    %58 = arith.addf %56, %57 : vector<8x8xf32>
    %cst_25 = arith.constant dense<0xFF800000> : vector<8xf32>
    %59 = vector.multi_reduction <maximumf>, %58, %cst_25 [1] : vector<8x8xf32> to vector<8xf32>
    %60 = vector.shape_cast %59 : vector<8xf32> to vector<8x1xf32>
    %61 = vector.broadcast %60 : vector<8x1xf32> to vector<8x8xf32>
    %62 = arith.subf %58, %61 : vector<8x8xf32>
    %63 = math.exp %62 : vector<8x8xf32>
    %cst_26 = arith.constant dense<0.000000e+00> : vector<8xf32>
    %64 = vector.multi_reduction <add>, %63, %cst_26 [1] : vector<8x8xf32> to vector<8xf32>
    %65 = vector.shape_cast %64 : vector<8xf32> to vector<8x1xf32>
    %66 = tpu.reciprocal %65 {approx = true} : vector<8x1xf32> -> vector<8x1xf32>
    %67 = vector.broadcast %66 : vector<8x1xf32> to vector<8x8xf32>
    %68 = arith.mulf %63, %67 : vector<8x8xf32>
    %69 = arith.truncf %68 : vector<8x8xf32> to vector<8x8xbf16>
    %cst_27 = arith.constant dense<0.000000e+00> : vector<8x128xf32>
    %70 = tpu.matmul %69, %55, %cst_27 {dimension_numbers = #tpu.dot_dimension_numbers<[1], [0], [0], [1], [0, 0, 1, 1], [], []>} : vector<8x8xbf16>, vector<8x128xbf16>, vector<8x128xf32> -> vector<8x128xf32>
    %71 = tpu.concatenate %52, %70 in 1 : vector<8x128xf32>, vector<8x128xf32> -> vector<8x256xf32>
    %72 = arith.truncf %71 : vector<8x256xf32> to vector<8x256xbf16>
    %c0_28 = arith.constant 0 : index
    %c0_29 = arith.constant 0 : index
    %c0_30 = arith.constant 0 : index
    %73 = vector.load %arg7[%c0_28, %c0_29, %c0_30] : memref<2x256x128xbf16, #tpu.memory_space<vmem>>, vector<1x256x128xbf16>
    %74 = vector.shape_cast %73 : vector<1x256x128xbf16> to vector<256x128xbf16>
    %cst_31 = arith.constant dense<0.000000e+00> : vector<8x128xf32>
    %75 = tpu.matmul %72, %74, %cst_31 {dimension_numbers = #tpu.dot_dimension_numbers<[1], [0], [0], [1], [0, 0, 1, 1], [], []>} : vector<8x256xbf16>, vector<256x128xbf16>, vector<8x128xf32> -> vector<8x128xf32>
    %c0_32 = arith.constant 0 : index
    %c0_33 = arith.constant 0 : index
    %c0_34 = arith.constant 0 : index
    %76 = vector.load %arg8[%c0_32, %c0_33, %c0_34] : memref<2x1x128xf32, #tpu.memory_space<vmem>>, vector<1x1x128xf32>
    %77 = vector.shape_cast %76 : vector<1x1x128xf32> to vector<1x128xf32>
    %78 = vector.broadcast %77 : vector<1x128xf32> to vector<8x128xf32>
    %79 = arith.addf %75, %78 : vector<8x128xf32>
    %80 = arith.addf %79, %23 : vector<8x128xf32>
    %c0_35 = arith.constant 0 : index
    %c0_36 = arith.constant 0 : index
    %c0_37 = arith.constant 0 : index
    %81 = vector.load %arg9[%c0_35, %c0_36, %c0_37] : memref<2x1x128xf32, #tpu.memory_space<vmem>>, vector<1x1x128xf32>
    %82 = vector.shape_cast %81 : vector<1x1x128xf32> to vector<1x128xf32>
    %c0_38 = arith.constant 0 : index
    %c0_39 = arith.constant 0 : index
    %c0_40 = arith.constant 0 : index
    %83 = vector.load %arg10[%c0_38, %c0_39, %c0_40] : memref<2x1x128xf32, #tpu.memory_space<vmem>>, vector<1x1x128xf32>
    %84 = vector.shape_cast %83 : vector<1x1x128xf32> to vector<1x128xf32>
    %cst_41 = arith.constant dense<0.000000e+00> : vector<8xf32>
    %85 = vector.multi_reduction <add>, %80, %cst_41 [1] : vector<8x128xf32> to vector<8xf32>
    %86 = vector.shape_cast %85 : vector<8xf32> to vector<8x1xf32>
    %cst_42 = arith.constant 1.280000e+02 : f32
    %87 = vector.broadcast %cst_42 : f32 to vector<8x1xf32>
    %88 = arith.divf %86, %87 : vector<8x1xf32>
    %89 = vector.broadcast %88 : vector<8x1xf32> to vector<8x128xf32>
    %90 = arith.subf %80, %89 : vector<8x128xf32>
    %91 = arith.mulf %90, %90 : vector<8x128xf32>
    %cst_43 = arith.constant dense<0.000000e+00> : vector<8xf32>
    %92 = vector.multi_reduction <add>, %91, %cst_43 [1] : vector<8x128xf32> to vector<8xf32>
    %93 = vector.shape_cast %92 : vector<8xf32> to vector<8x1xf32>
    %cst_44 = arith.constant 1.280000e+02 : f32
    %94 = vector.broadcast %cst_44 : f32 to vector<8x1xf32>
    %95 = arith.divf %93, %94 : vector<8x1xf32>
    %cst_45 = arith.constant 9.99999996E-13 : f32
    %96 = vector.broadcast %cst_45 : f32 to vector<8x1xf32>
    %97 = arith.addf %95, %96 : vector<8x1xf32>
    %98 = math.rsqrt %97 : vector<8x1xf32>
    %99 = vector.broadcast %98 : vector<8x1xf32> to vector<8x128xf32>
    %100 = arith.mulf %90, %99 : vector<8x128xf32>
    %101 = vector.broadcast %82 : vector<1x128xf32> to vector<8x128xf32>
    %102 = arith.mulf %100, %101 : vector<8x128xf32>
    %103 = vector.broadcast %84 : vector<1x128xf32> to vector<8x128xf32>
    %104 = arith.addf %102, %103 : vector<8x128xf32>
    %105 = arith.truncf %104 : vector<8x128xf32> to vector<8x128xbf16>
    %c0_46 = arith.constant 0 : index
    %c0_47 = arith.constant 0 : index
    %c0_48 = arith.constant 0 : index
    %106 = vector.load %arg11[%c0_46, %c0_47, %c0_48] : memref<2x128x256xbf16, #tpu.memory_space<vmem>>, vector<1x128x256xbf16>
    %107 = vector.shape_cast %106 : vector<1x128x256xbf16> to vector<128x256xbf16>
    %cst_49 = arith.constant dense<0.000000e+00> : vector<8x256xf32>
    %108 = tpu.matmul %105, %107, %cst_49 {dimension_numbers = #tpu.dot_dimension_numbers<[1], [0], [0], [1], [0, 0, 1, 1], [], []>} : vector<8x128xbf16>, vector<128x256xbf16>, vector<8x256xf32> -> vector<8x256xf32>
    %c0_50 = arith.constant 0 : index
    %c0_51 = arith.constant 0 : index
    %c0_52 = arith.constant 0 : index
    %109 = vector.load %arg12[%c0_50, %c0_51, %c0_52] : memref<2x1x256xf32, #tpu.memory_space<vmem>>, vector<1x1x256xf32>
    %110 = vector.shape_cast %109 : vector<1x1x256xf32> to vector<1x256xf32>
    %111 = vector.broadcast %110 : vector<1x256xf32> to vector<8x256xf32>
    %112 = arith.addf %108, %111 : vector<8x256xf32>
    %cst_53 = arith.constant 5.000000e-01 : f32
    %113 = vector.broadcast %cst_53 : f32 to vector<8x256xf32>
    %114 = arith.mulf %113, %112 : vector<8x256xf32>
    %cst_54 = arith.constant 4.471500e-02 : f32
    %115 = vector.broadcast %cst_54 : f32 to vector<8x256xf32>
    %116 = arith.mulf %115, %112 : vector<8x256xf32>
    %117 = arith.mulf %116, %112 : vector<8x256xf32>
    %118 = arith.mulf %117, %112 : vector<8x256xf32>
    %119 = arith.addf %112, %118 : vector<8x256xf32>
    %cst_55 = arith.constant 0.797884583 : f32
    %120 = vector.broadcast %cst_55 : f32 to vector<8x256xf32>
    %121 = arith.mulf %120, %119 : vector<8x256xf32>
    %122 = math.tanh %121 : vector<8x256xf32>
    %cst_56 = arith.constant 1.000000e+00 : f32
    %123 = vector.broadcast %cst_56 : f32 to vector<8x256xf32>
    %124 = arith.addf %123, %122 : vector<8x256xf32>
    %125 = arith.mulf %114, %124 : vector<8x256xf32>
    %126 = arith.truncf %125 : vector<8x256xf32> to vector<8x256xbf16>
    %c0_57 = arith.constant 0 : index
    %c0_58 = arith.constant 0 : index
    %c0_59 = arith.constant 0 : index
    %127 = vector.load %arg13[%c0_57, %c0_58, %c0_59] : memref<2x256x128xbf16, #tpu.memory_space<vmem>>, vector<1x256x128xbf16>
    %128 = vector.shape_cast %127 : vector<1x256x128xbf16> to vector<256x128xbf16>
    %cst_60 = arith.constant dense<0.000000e+00> : vector<8x128xf32>
    %129 = tpu.matmul %126, %128, %cst_60 {dimension_numbers = #tpu.dot_dimension_numbers<[1], [0], [0], [1], [0, 0, 1, 1], [], []>} : vector<8x256xbf16>, vector<256x128xbf16>, vector<8x128xf32> -> vector<8x128xf32>
    %c0_61 = arith.constant 0 : index
    %c0_62 = arith.constant 0 : index
    %c0_63 = arith.constant 0 : index
    %130 = vector.load %arg14[%c0_61, %c0_62, %c0_63] : memref<2x1x128xf32, #tpu.memory_space<vmem>>, vector<1x1x128xf32>
    %131 = vector.shape_cast %130 : vector<1x1x128xf32> to vector<1x128xf32>
    %132 = vector.broadcast %131 : vector<1x128xf32> to vector<8x128xf32>
    %133 = arith.addf %129, %132 : vector<8x128xf32>
    %134 = arith.addf %133, %104 : vector<8x128xf32>
    %c0_64 = arith.constant 0 : index
    %c0_65 = arith.constant 0 : index
    %c0_66 = arith.constant 0 : index
    %135 = vector.load %arg15[%c0_64, %c0_65, %c0_66] : memref<2x1x128xf32, #tpu.memory_space<vmem>>, vector<1x1x128xf32>
    %136 = vector.shape_cast %135 : vector<1x1x128xf32> to vector<1x128xf32>
    %c0_67 = arith.constant 0 : index
    %c0_68 = arith.constant 0 : index
    %c0_69 = arith.constant 0 : index
    %137 = vector.load %arg16[%c0_67, %c0_68, %c0_69] : memref<2x1x128xf32, #tpu.memory_space<vmem>>, vector<1x1x128xf32>
    %138 = vector.shape_cast %137 : vector<1x1x128xf32> to vector<1x128xf32>
    %cst_70 = arith.constant dense<0.000000e+00> : vector<8xf32>
    %139 = vector.multi_reduction <add>, %134, %cst_70 [1] : vector<8x128xf32> to vector<8xf32>
    %140 = vector.shape_cast %139 : vector<8xf32> to vector<8x1xf32>
    %cst_71 = arith.constant 1.280000e+02 : f32
    %141 = vector.broadcast %cst_71 : f32 to vector<8x1xf32>
    %142 = arith.divf %140, %141 : vector<8x1xf32>
    %143 = vector.broadcast %142 : vector<8x1xf32> to vector<8x128xf32>
    %144 = arith.subf %134, %143 : vector<8x128xf32>
    %145 = arith.mulf %144, %144 : vector<8x128xf32>
    %cst_72 = arith.constant dense<0.000000e+00> : vector<8xf32>
    %146 = vector.multi_reduction <add>, %145, %cst_72 [1] : vector<8x128xf32> to vector<8xf32>
    %147 = vector.shape_cast %146 : vector<8xf32> to vector<8x1xf32>
    %cst_73 = arith.constant 1.280000e+02 : f32
    %148 = vector.broadcast %cst_73 : f32 to vector<8x1xf32>
    %149 = arith.divf %147, %148 : vector<8x1xf32>
    %cst_74 = arith.constant 9.99999996E-13 : f32
    %150 = vector.broadcast %cst_74 : f32 to vector<8x1xf32>
    %151 = arith.addf %149, %150 : vector<8x1xf32>
    %152 = math.rsqrt %151 : vector<8x1xf32>
    %153 = vector.broadcast %152 : vector<8x1xf32> to vector<8x128xf32>
    %154 = arith.mulf %144, %153 : vector<8x128xf32>
    %155 = vector.broadcast %136 : vector<1x128xf32> to vector<8x128xf32>
    %156 = arith.mulf %154, %155 : vector<8x128xf32>
    %157 = vector.broadcast %138 : vector<1x128xf32> to vector<8x128xf32>
    %158 = arith.addf %156, %157 : vector<8x128xf32>
    %159 = arith.truncf %158 : vector<8x128xf32> to vector<8x128xbf16>
    %c1 = arith.constant 1 : index
    %c0_75 = arith.constant 0 : index
    %c0_76 = arith.constant 0 : index
    %160 = vector.load %arg5[%c1, %c0_75, %c0_76] : memref<2x128x768xbf16, #tpu.memory_space<vmem>>, vector<1x128x768xbf16>
    %161 = vector.shape_cast %160 : vector<1x128x768xbf16> to vector<128x768xbf16>
    %cst_77 = arith.constant dense<0.000000e+00> : vector<8x768xf32>
    %162 = tpu.matmul %159, %161, %cst_77 {dimension_numbers = #tpu.dot_dimension_numbers<[1], [0], [0], [1], [0, 0, 1, 1], [], []>} : vector<8x128xbf16>, vector<128x768xbf16>, vector<8x768xf32> -> vector<8x768xf32>
    %c1_78 = arith.constant 1 : index
    %c0_79 = arith.constant 0 : index
    %c0_80 = arith.constant 0 : index
    %163 = vector.load %arg6[%c1_78, %c0_79, %c0_80] : memref<2x1x768xf32, #tpu.memory_space<vmem>>, vector<1x1x768xf32>
    %164 = vector.shape_cast %163 : vector<1x1x768xf32> to vector<1x768xf32>
    %165 = vector.broadcast %164 : vector<1x768xf32> to vector<8x768xf32>
    %166 = arith.addf %162, %165 : vector<8x768xf32>
    %167 = arith.truncf %166 : vector<8x768xf32> to vector<8x768xbf16>
    %168 = vector.extract_strided_slice %167 {offsets = [0, 0], sizes = [8, 128], strides = [1, 1]} : vector<8x768xbf16> to vector<8x128xbf16>
    %169 = vector.extract_strided_slice %167 {offsets = [0, 256], sizes = [8, 128], strides = [1, 1]} : vector<8x768xbf16> to vector<8x128xbf16>
    %170 = vector.extract_strided_slice %167 {offsets = [0, 512], sizes = [8, 128], strides = [1, 1]} : vector<8x768xbf16> to vector<8x128xbf16>
    %cst_81 = arith.constant dense<0.000000e+00> : vector<8x8xf32>
    %171 = tpu.matmul %168, %169, %cst_81 {dimension_numbers = #tpu.dot_dimension_numbers<[1], [1], [0], [0], [0, 0, 1, 0], [], []>} : vector<8x128xbf16>, vector<8x128xbf16>, vector<8x8xf32> -> vector<8x8xf32>
    %172 = vector.broadcast %25 : vector<1x8xf32> to vector<8x8xf32>
    %173 = arith.addf %171, %172 : vector<8x8xf32>
    %cst_82 = arith.constant dense<0xFF800000> : vector<8xf32>
    %174 = vector.multi_reduction <maximumf>, %173, %cst_82 [1] : vector<8x8xf32> to vector<8xf32>
    %175 = vector.shape_cast %174 : vector<8xf32> to vector<8x1xf32>
    %176 = vector.broadcast %175 : vector<8x1xf32> to vector<8x8xf32>
    %177 = arith.subf %173, %176 : vector<8x8xf32>
    %178 = math.exp %177 : vector<8x8xf32>
    %cst_83 = arith.constant dense<0.000000e+00> : vector<8xf32>
    %179 = vector.multi_reduction <add>, %178, %cst_83 [1] : vector<8x8xf32> to vector<8xf32>
    %180 = vector.shape_cast %179 : vector<8xf32> to vector<8x1xf32>
    %181 = tpu.reciprocal %180 {approx = true} : vector<8x1xf32> -> vector<8x1xf32>
    %182 = vector.broadcast %181 : vector<8x1xf32> to vector<8x8xf32>
    %183 = arith.mulf %178, %182 : vector<8x8xf32>
    %184 = arith.truncf %183 : vector<8x8xf32> to vector<8x8xbf16>
    %cst_84 = arith.constant dense<0.000000e+00> : vector<8x128xf32>
    %185 = tpu.matmul %184, %170, %cst_84 {dimension_numbers = #tpu.dot_dimension_numbers<[1], [0], [0], [1], [0, 0, 1, 1], [], []>} : vector<8x8xbf16>, vector<8x128xbf16>, vector<8x128xf32> -> vector<8x128xf32>
    %186 = vector.extract_strided_slice %167 {offsets = [0, 128], sizes = [8, 128], strides = [1, 1]} : vector<8x768xbf16> to vector<8x128xbf16>
    %187 = vector.extract_strided_slice %167 {offsets = [0, 384], sizes = [8, 128], strides = [1, 1]} : vector<8x768xbf16> to vector<8x128xbf16>
    %188 = vector.extract_strided_slice %167 {offsets = [0, 640], sizes = [8, 128], strides = [1, 1]} : vector<8x768xbf16> to vector<8x128xbf16>
    %cst_85 = arith.constant dense<0.000000e+00> : vector<8x8xf32>
    %189 = tpu.matmul %186, %187, %cst_85 {dimension_numbers = #tpu.dot_dimension_numbers<[1], [1], [0], [0], [0, 0, 1, 0], [], []>} : vector<8x128xbf16>, vector<8x128xbf16>, vector<8x8xf32> -> vector<8x8xf32>
    %190 = vector.broadcast %25 : vector<1x8xf32> to vector<8x8xf32>
    %191 = arith.addf %189, %190 : vector<8x8xf32>
    %cst_86 = arith.constant dense<0xFF800000> : vector<8xf32>
    %192 = vector.multi_reduction <maximumf>, %191, %cst_86 [1] : vector<8x8xf32> to vector<8xf32>
    %193 = vector.shape_cast %192 : vector<8xf32> to vector<8x1xf32>
    %194 = vector.broadcast %193 : vector<8x1xf32> to vector<8x8xf32>
    %195 = arith.subf %191, %194 : vector<8x8xf32>
    %196 = math.exp %195 : vector<8x8xf32>
    %cst_87 = arith.constant dense<0.000000e+00> : vector<8xf32>
    %197 = vector.multi_reduction <add>, %196, %cst_87 [1] : vector<8x8xf32> to vector<8xf32>
    %198 = vector.shape_cast %197 : vector<8xf32> to vector<8x1xf32>
    %199 = tpu.reciprocal %198 {approx = true} : vector<8x1xf32> -> vector<8x1xf32>
    %200 = vector.broadcast %199 : vector<8x1xf32> to vector<8x8xf32>
    %201 = arith.mulf %196, %200 : vector<8x8xf32>
    %202 = arith.truncf %201 : vector<8x8xf32> to vector<8x8xbf16>
    %cst_88 = arith.constant dense<0.000000e+00> : vector<8x128xf32>
    %203 = tpu.matmul %202, %188, %cst_88 {dimension_numbers = #tpu.dot_dimension_numbers<[1], [0], [0], [1], [0, 0, 1, 1], [], []>} : vector<8x8xbf16>, vector<8x128xbf16>, vector<8x128xf32> -> vector<8x128xf32>
    %204 = tpu.concatenate %185, %203 in 1 : vector<8x128xf32>, vector<8x128xf32> -> vector<8x256xf32>
    %205 = arith.truncf %204 : vector<8x256xf32> to vector<8x256xbf16>
    %c1_89 = arith.constant 1 : index
    %c0_90 = arith.constant 0 : index
    %c0_91 = arith.constant 0 : index
    %206 = vector.load %arg7[%c1_89, %c0_90, %c0_91] : memref<2x256x128xbf16, #tpu.memory_space<vmem>>, vector<1x256x128xbf16>
    %207 = vector.shape_cast %206 : vector<1x256x128xbf16> to vector<256x128xbf16>
    %cst_92 = arith.constant dense<0.000000e+00> : vector<8x128xf32>
    %208 = tpu.matmul %205, %207, %cst_92 {dimension_numbers = #tpu.dot_dimension_numbers<[1], [0], [0], [1], [0, 0, 1, 1], [], []>} : vector<8x256xbf16>, vector<256x128xbf16>, vector<8x128xf32> -> vector<8x128xf32>
    %c1_93 = arith.constant 1 : index
    %c0_94 = arith.constant 0 : index
    %c0_95 = arith.constant 0 : index
    %209 = vector.load %arg8[%c1_93, %c0_94, %c0_95] : memref<2x1x128xf32, #tpu.memory_space<vmem>>, vector<1x1x128xf32>
    %210 = vector.shape_cast %209 : vector<1x1x128xf32> to vector<1x128xf32>
    %211 = vector.broadcast %210 : vector<1x128xf32> to vector<8x128xf32>
    %212 = arith.addf %208, %211 : vector<8x128xf32>
    %213 = arith.addf %212, %158 : vector<8x128xf32>
    %c1_96 = arith.constant 1 : index
    %c0_97 = arith.constant 0 : index
    %c0_98 = arith.constant 0 : index
    %214 = vector.load %arg9[%c1_96, %c0_97, %c0_98] : memref<2x1x128xf32, #tpu.memory_space<vmem>>, vector<1x1x128xf32>
    %215 = vector.shape_cast %214 : vector<1x1x128xf32> to vector<1x128xf32>
    %c1_99 = arith.constant 1 : index
    %c0_100 = arith.constant 0 : index
    %c0_101 = arith.constant 0 : index
    %216 = vector.load %arg10[%c1_99, %c0_100, %c0_101] : memref<2x1x128xf32, #tpu.memory_space<vmem>>, vector<1x1x128xf32>
    %217 = vector.shape_cast %216 : vector<1x1x128xf32> to vector<1x128xf32>
    %cst_102 = arith.constant dense<0.000000e+00> : vector<8xf32>
    %218 = vector.multi_reduction <add>, %213, %cst_102 [1] : vector<8x128xf32> to vector<8xf32>
    %219 = vector.shape_cast %218 : vector<8xf32> to vector<8x1xf32>
    %cst_103 = arith.constant 1.280000e+02 : f32
    %220 = vector.broadcast %cst_103 : f32 to vector<8x1xf32>
    %221 = arith.divf %219, %220 : vector<8x1xf32>
    %222 = vector.broadcast %221 : vector<8x1xf32> to vector<8x128xf32>
    %223 = arith.subf %213, %222 : vector<8x128xf32>
    %224 = arith.mulf %223, %223 : vector<8x128xf32>
    %cst_104 = arith.constant dense<0.000000e+00> : vector<8xf32>
    %225 = vector.multi_reduction <add>, %224, %cst_104 [1] : vector<8x128xf32> to vector<8xf32>
    %226 = vector.shape_cast %225 : vector<8xf32> to vector<8x1xf32>
    %cst_105 = arith.constant 1.280000e+02 : f32
    %227 = vector.broadcast %cst_105 : f32 to vector<8x1xf32>
    %228 = arith.divf %226, %227 : vector<8x1xf32>
    %cst_106 = arith.constant 9.99999996E-13 : f32
    %229 = vector.broadcast %cst_106 : f32 to vector<8x1xf32>
    %230 = arith.addf %228, %229 : vector<8x1xf32>
    %231 = math.rsqrt %230 : vector<8x1xf32>
    %232 = vector.broadcast %231 : vector<8x1xf32> to vector<8x128xf32>
    %233 = arith.mulf %223, %232 : vector<8x128xf32>
    %234 = vector.broadcast %215 : vector<1x128xf32> to vector<8x128xf32>
    %235 = arith.mulf %233, %234 : vector<8x128xf32>
    %236 = vector.broadcast %217 : vector<1x128xf32> to vector<8x128xf32>
    %237 = arith.addf %235, %236 : vector<8x128xf32>
    %238 = arith.truncf %237 : vector<8x128xf32> to vector<8x128xbf16>
    %c1_107 = arith.constant 1 : index
    %c0_108 = arith.constant 0 : index
    %c0_109 = arith.constant 0 : index
    %239 = vector.load %arg11[%c1_107, %c0_108, %c0_109] : memref<2x128x256xbf16, #tpu.memory_space<vmem>>, vector<1x128x256xbf16>
    %240 = vector.shape_cast %239 : vector<1x128x256xbf16> to vector<128x256xbf16>
    %cst_110 = arith.constant dense<0.000000e+00> : vector<8x256xf32>
    %241 = tpu.matmul %238, %240, %cst_110 {dimension_numbers = #tpu.dot_dimension_numbers<[1], [0], [0], [1], [0, 0, 1, 1], [], []>} : vector<8x128xbf16>, vector<128x256xbf16>, vector<8x256xf32> -> vector<8x256xf32>
    %c1_111 = arith.constant 1 : index
    %c0_112 = arith.constant 0 : index
    %c0_113 = arith.constant 0 : index
    %242 = vector.load %arg12[%c1_111, %c0_112, %c0_113] : memref<2x1x256xf32, #tpu.memory_space<vmem>>, vector<1x1x256xf32>
    %243 = vector.shape_cast %242 : vector<1x1x256xf32> to vector<1x256xf32>
    %244 = vector.broadcast %243 : vector<1x256xf32> to vector<8x256xf32>
    %245 = arith.addf %241, %244 : vector<8x256xf32>
    %cst_114 = arith.constant 5.000000e-01 : f32
    %246 = vector.broadcast %cst_114 : f32 to vector<8x256xf32>
    %247 = arith.mulf %246, %245 : vector<8x256xf32>
    %cst_115 = arith.constant 4.471500e-02 : f32
    %248 = vector.broadcast %cst_115 : f32 to vector<8x256xf32>
    %249 = arith.mulf %248, %245 : vector<8x256xf32>
    %250 = arith.mulf %249, %245 : vector<8x256xf32>
    %251 = arith.mulf %250, %245 : vector<8x256xf32>
    %252 = arith.addf %245, %251 : vector<8x256xf32>
    %cst_116 = arith.constant 0.797884583 : f32
    %253 = vector.broadcast %cst_116 : f32 to vector<8x256xf32>
    %254 = arith.mulf %253, %252 : vector<8x256xf32>
    %255 = math.tanh %254 : vector<8x256xf32>
    %cst_117 = arith.constant 1.000000e+00 : f32
    %256 = vector.broadcast %cst_117 : f32 to vector<8x256xf32>
    %257 = arith.addf %256, %255 : vector<8x256xf32>
    %258 = arith.mulf %247, %257 : vector<8x256xf32>
    %259 = arith.truncf %258 : vector<8x256xf32> to vector<8x256xbf16>
    %c1_118 = arith.constant 1 : index
    %c0_119 = arith.constant 0 : index
    %c0_120 = arith.constant 0 : index
    %260 = vector.load %arg13[%c1_118, %c0_119, %c0_120] : memref<2x256x128xbf16, #tpu.memory_space<vmem>>, vector<1x256x128xbf16>
    %261 = vector.shape_cast %260 : vector<1x256x128xbf16> to vector<256x128xbf16>
    %cst_121 = arith.constant dense<0.000000e+00> : vector<8x128xf32>
    %262 = tpu.matmul %259, %261, %cst_121 {dimension_numbers = #tpu.dot_dimension_numbers<[1], [0], [0], [1], [0, 0, 1, 1], [], []>} : vector<8x256xbf16>, vector<256x128xbf16>, vector<8x128xf32> -> vector<8x128xf32>
    %c1_122 = arith.constant 1 : index
    %c0_123 = arith.constant 0 : index
    %c0_124 = arith.constant 0 : index
    %263 = vector.load %arg14[%c1_122, %c0_123, %c0_124] : memref<2x1x128xf32, #tpu.memory_space<vmem>>, vector<1x1x128xf32>
    %264 = vector.shape_cast %263 : vector<1x1x128xf32> to vector<1x128xf32>
    %265 = vector.broadcast %264 : vector<1x128xf32> to vector<8x128xf32>
    %266 = arith.addf %262, %265 : vector<8x128xf32>
    %267 = arith.addf %266, %237 : vector<8x128xf32>
    %c1_125 = arith.constant 1 : index
    %c0_126 = arith.constant 0 : index
    %c0_127 = arith.constant 0 : index
    %268 = vector.load %arg15[%c1_125, %c0_126, %c0_127] : memref<2x1x128xf32, #tpu.memory_space<vmem>>, vector<1x1x128xf32>
    %269 = vector.shape_cast %268 : vector<1x1x128xf32> to vector<1x128xf32>
    %c1_128 = arith.constant 1 : index
    %c0_129 = arith.constant 0 : index
    %c0_130 = arith.constant 0 : index
    %270 = vector.load %arg16[%c1_128, %c0_129, %c0_130] : memref<2x1x128xf32, #tpu.memory_space<vmem>>, vector<1x1x128xf32>
    %271 = vector.shape_cast %270 : vector<1x1x128xf32> to vector<1x128xf32>
    %cst_131 = arith.constant dense<0.000000e+00> : vector<8xf32>
    %272 = vector.multi_reduction <add>, %267, %cst_131 [1] : vector<8x128xf32> to vector<8xf32>
    %273 = vector.shape_cast %272 : vector<8xf32> to vector<8x1xf32>
    %cst_132 = arith.constant 1.280000e+02 : f32
    %274 = vector.broadcast %cst_132 : f32 to vector<8x1xf32>
    %275 = arith.divf %273, %274 : vector<8x1xf32>
    %276 = vector.broadcast %275 : vector<8x1xf32> to vector<8x128xf32>
    %277 = arith.subf %267, %276 : vector<8x128xf32>
    %278 = arith.mulf %277, %277 : vector<8x128xf32>
    %cst_133 = arith.constant dense<0.000000e+00> : vector<8xf32>
    %279 = vector.multi_reduction <add>, %278, %cst_133 [1] : vector<8x128xf32> to vector<8xf32>
    %280 = vector.shape_cast %279 : vector<8xf32> to vector<8x1xf32>
    %cst_134 = arith.constant 1.280000e+02 : f32
    %281 = vector.broadcast %cst_134 : f32 to vector<8x1xf32>
    %282 = arith.divf %280, %281 : vector<8x1xf32>
    %cst_135 = arith.constant 9.99999996E-13 : f32
    %283 = vector.broadcast %cst_135 : f32 to vector<8x1xf32>
    %284 = arith.addf %282, %283 : vector<8x1xf32>
    %285 = math.rsqrt %284 : vector<8x1xf32>
    %286 = vector.broadcast %285 : vector<8x1xf32> to vector<8x128xf32>
    %287 = arith.mulf %277, %286 : vector<8x128xf32>
    %288 = vector.broadcast %269 : vector<1x128xf32> to vector<8x128xf32>
    %289 = arith.mulf %287, %288 : vector<8x128xf32>
    %290 = vector.broadcast %271 : vector<1x128xf32> to vector<8x128xf32>
    %291 = arith.addf %289, %290 : vector<8x128xf32>
    %292 = vector.extract_strided_slice %291 {offsets = [0, 0], sizes = [1, 128], strides = [1, 1]} : vector<8x128xf32> to vector<1x128xf32>
    %293 = arith.truncf %292 : vector<1x128xf32> to vector<1x128xbf16>
    %c0_136 = arith.constant 0 : index
    %c0_137 = arith.constant 0 : index
    %294 = vector.load %arg17[%c0_136, %c0_137] : memref<128x128xbf16, #tpu.memory_space<vmem>>, vector<128x128xbf16>
    %cst_138 = arith.constant dense<0.000000e+00> : vector<1x128xf32>
    %295 = tpu.matmul %293, %294, %cst_138 {dimension_numbers = #tpu.dot_dimension_numbers<[1], [0], [0], [1], [0, 0, 1, 1], [], []>} : vector<1x128xbf16>, vector<128x128xbf16>, vector<1x128xf32> -> vector<1x128xf32>
    %c0_139 = arith.constant 0 : index
    %c0_140 = arith.constant 0 : index
    %296 = vector.load %arg18[%c0_139, %c0_140] : memref<1x128xf32, #tpu.memory_space<vmem>>, vector<1x128xf32>
    %297 = arith.addf %295, %296 : vector<1x128xf32>
    %298 = math.tanh %297 : vector<1x128xf32>
    %299 = arith.truncf %298 : vector<1x128xf32> to vector<1x128xbf16>
    %c0_141 = arith.constant 0 : index
    %c0_142 = arith.constant 0 : index
    %300 = vector.load %arg19[%c0_141, %c0_142] : memref<128x128xbf16, #tpu.memory_space<vmem>>, vector<128x128xbf16>
    %cst_143 = arith.constant dense<0.000000e+00> : vector<1x128xf32>
    %301 = tpu.matmul %299, %300, %cst_143 {dimension_numbers = #tpu.dot_dimension_numbers<[1], [0], [0], [1], [0, 0, 1, 1], [], []>} : vector<1x128xbf16>, vector<128x128xbf16>, vector<1x128xf32> -> vector<1x128xf32>
    %c0_144 = arith.constant 0 : index
    %c0_145 = arith.constant 0 : index
    %302 = vector.load %arg20[%c0_144, %c0_145] : memref<1x128xf32, #tpu.memory_space<vmem>>, vector<1x128xf32>
    %303 = arith.addf %301, %302 : vector<1x128xf32>
    %cst_146 = arith.constant 0.000000e+00 : f32
    %304 = vector.broadcast %cst_146 : f32 to vector<1x128xf32>
    %305 = arith.maximumf %303, %304 : vector<1x128xf32>
    %306 = vector.shape_cast %305 : vector<1x128xf32> to vector<1x128xf32>
    %307 = vector.broadcast %306 : vector<1x128xf32> to vector<8x128xf32>
    %c0_147 = arith.constant 0 : index
    %c0_148 = arith.constant 0 : index
    %c0_149 = arith.constant 0 : index
    %308 = vector.load %arg21[%c0_147, %c0_148, %c0_149] : memref<1x8x128xf32, #tpu.memory_space<vmem>>, vector<1x8x128xf32>
    %309 = vector.shape_cast %308 : vector<1x8x128xf32> to vector<8x128xf32>
    %310 = vector.shape_cast %307 : vector<8x128xf32> to vector<1x8x128xf32>
    tpu.vector_store %arg21[%c0_147, %c0_148, %c0_149], %310 {strides = array<i32>} : memref<1x8x128xf32, #tpu.memory_space<vmem>>, vector<1x8x128xf32>,
    return
  }
  func.func @transform_0(%arg0: i32) -> (i32, i32, i32) {
    %c0_i32 = arith.constant 0 : i32
    %c0_i32_0 = arith.constant 0 : i32
    %c0_i32_1 = arith.constant 0 : i32
    return %arg0, %c0_i32, %c0_i32_0 : i32, i32, i32
  }
  func.func @transform_1(%arg0: i32) -> (i32, i32, i32) {
    %c0_i32 = arith.constant 0 : i32
    %c0_i32_0 = arith.constant 0 : i32
    %c0_i32_1 = arith.constant 0 : i32
    return %arg0, %c0_i32, %c0_i32_0 : i32, i32, i32
  }
  func.func @transform_2(%arg0: i32) -> (i32, i32) {
    %c0_i32 = arith.constant 0 : i32
    %c0_i32_0 = arith.constant 0 : i32
    %c0_i32_1 = arith.constant 0 : i32
    return %c0_i32, %c0_i32_0 : i32, i32
  }
  func.func @transform_3(%arg0: i32) -> (i32, i32) {
    %c0_i32 = arith.constant 0 : i32
    %c0_i32_0 = arith.constant 0 : i32
    %c0_i32_1 = arith.constant 0 : i32
    return %c0_i32, %c0_i32_0 : i32, i32
  }
  func.func @transform_4(%arg0: i32) -> (i32, i32, i32) {
    %c0_i32 = arith.constant 0 : i32
    %c0_i32_0 = arith.constant 0 : i32
    %c0_i32_1 = arith.constant 0 : i32
    %c0_i32_2 = arith.constant 0 : i32
    return %c0_i32, %c0_i32_0, %c0_i32_1 : i32, i32, i32
  }
  func.func @transform_5(%arg0: i32) -> (i32, i32, i32) {
    %c0_i32 = arith.constant 0 : i32
    %c0_i32_0 = arith.constant 0 : i32
    %c0_i32_1 = arith.constant 0 : i32
    %c0_i32_2 = arith.constant 0 : i32
    return %c0_i32, %c0_i32_0, %c0_i32_1 : i32, i32, i32
  }
  func.func @transform_6(%arg0: i32) -> (i32, i32, i32) {
    %c0_i32 = arith.constant 0 : i32
    %c0_i32_0 = arith.constant 0 : i32
    %c0_i32_1 = arith.constant 0 : i32
    %c0_i32_2 = arith.constant 0 : i32
    return %c0_i32, %c0_i32_0, %c0_i32_1 : i32, i32, i32
  }
  func.func @transform_7(%arg0: i32) -> (i32, i32, i32) {
    %c0_i32 = arith.constant 0 : i32
    %c0_i32_0 = arith.constant 0 : i32
    %c0_i32_1 = arith.constant 0 : i32
    %c0_i32_2 = arith.constant 0 : i32
    return %c0_i32, %c0_i32_0, %c0_i32_1 : i32, i32, i32
  }
  func.func @transform_8(%arg0: i32) -> (i32, i32, i32) {
    %c0_i32 = arith.constant 0 : i32
    %c0_i32_0 = arith.constant 0 : i32
    %c0_i32_1 = arith.constant 0 : i32
    %c0_i32_2 = arith.constant 0 : i32
    return %c0_i32, %c0_i32_0, %c0_i32_1 : i32, i32, i32
  }
  func.func @transform_9(%arg0: i32) -> (i32, i32, i32) {
    %c0_i32 = arith.constant 0 : i32
    %c0_i32_0 = arith.constant 0 : i32
    %c0_i32_1 = arith.constant 0 : i32
    %c0_i32_2 = arith.constant 0 : i32
    return %c0_i32, %c0_i32_0, %c0_i32_1 : i32, i32, i32
  }
  func.func @transform_10(%arg0: i32) -> (i32, i32, i32) {
    %c0_i32 = arith.constant 0 : i32
    %c0_i32_0 = arith.constant 0 : i32
    %c0_i32_1 = arith.constant 0 : i32
    %c0_i32_2 = arith.constant 0 : i32
    return %c0_i32, %c0_i32_0, %c0_i32_1 : i32, i32, i32
  }
  func.func @transform_11(%arg0: i32) -> (i32, i32, i32) {
    %c0_i32 = arith.constant 0 : i32
    %c0_i32_0 = arith.constant 0 : i32
    %c0_i32_1 = arith.constant 0 : i32
    %c0_i32_2 = arith.constant 0 : i32
    return %c0_i32, %c0_i32_0, %c0_i32_1 : i32, i32, i32
  }
  func.func @transform_12(%arg0: i32) -> (i32, i32, i32) {
    %c0_i32 = arith.constant 0 : i32
    %c0_i32_0 = arith.constant 0 : i32
    %c0_i32_1 = arith.constant 0 : i32
    %c0_i32_2 = arith.constant 0 : i32
    return %c0_i32, %c0_i32_0, %c0_i32_1 : i32, i32, i32
  }
  func.func @transform_13(%arg0: i32) -> (i32, i32, i32) {
    %c0_i32 = arith.constant 0 : i32
    %c0_i32_0 = arith.constant 0 : i32
    %c0_i32_1 = arith.constant 0 : i32
    %c0_i32_2 = arith.constant 0 : i32
    return %c0_i32, %c0_i32_0, %c0_i32_1 : i32, i32, i32
  }
  func.func @transform_14(%arg0: i32) -> (i32, i32, i32) {
    %c0_i32 = arith.constant 0 : i32
    %c0_i32_0 = arith.constant 0 : i32
    %c0_i32_1 = arith.constant 0 : i32
    %c0_i32_2 = arith.constant 0 : i32
    return %c0_i32, %c0_i32_0, %c0_i32_1 : i32, i32, i32
  }
  func.func @transform_15(%arg0: i32) -> (i32, i32, i32) {
    %c0_i32 = arith.constant 0 : i32
    %c0_i32_0 = arith.constant 0 : i32
    %c0_i32_1 = arith.constant 0 : i32
    %c0_i32_2 = arith.constant 0 : i32
    return %c0_i32, %c0_i32_0, %c0_i32_1 : i32, i32, i32
  }
  func.func @transform_16(%arg0: i32) -> (i32, i32) {
    %c0_i32 = arith.constant 0 : i32
    %c0_i32_0 = arith.constant 0 : i32
    %c0_i32_1 = arith.constant 0 : i32
    return %c0_i32, %c0_i32_0 : i32, i32
  }
  func.func @transform_17(%arg0: i32) -> (i32, i32) {
    %c0_i32 = arith.constant 0 : i32
    %c0_i32_0 = arith.constant 0 : i32
    %c0_i32_1 = arith.constant 0 : i32
    return %c0_i32, %c0_i32_0 : i32, i32
  }
  func.func @transform_18(%arg0: i32) -> (i32, i32) {
    %c0_i32 = arith.constant 0 : i32
    %c0_i32_0 = arith.constant 0 : i32
    %c0_i32_1 = arith.constant 0 : i32
    return %c0_i32, %c0_i32_0 : i32, i32
  }
  func.func @transform_19(%arg0: i32) -> (i32, i32) {
    %c0_i32 = arith.constant 0 : i32
    %c0_i32_0 = arith.constant 0 : i32
    %c0_i32_1 = arith.constant 0 : i32
    return %c0_i32, %c0_i32_0 : i32, i32
  }
  func.func @transform_20(%arg0: i32) -> (i32, i32, i32) {
    %c0_i32 = arith.constant 0 : i32
    %c0_i32_0 = arith.constant 0 : i32
    %c0_i32_1 = arith.constant 0 : i32
    return %arg0, %c0_i32, %c0_i32_0 : i32, i32, i32
  }
}

</mosaic_0001>

<llo_original>
// kernel: bert_classifier_forward.1
$region0: #{bert_classifier_forward.1}
  #allocation0 [shape = 'u32[]', space=smem, size = 0x4, offset = 0x4, fixed_abs, tag = 'smem constant byte address 0x4 - core index']
  #allocation1 [shape = 'u32[144,128]{1,0:T(1,128)}', space=vmem, size = 0x12000, scoped, tag = 'internal scratch']
  %s0 = inlined_call_operand.vmem [shape: f32[2,8,128], index: 0, kind: input, shape index: {}]
  %s1 = inlined_call_operand.vmem [shape: f32[2,1,8], index: 1, kind: input, shape index: {}]
  %s2 = inlined_call_operand.vmem [shape: f32[1,128], index: 2, kind: input, shape index: {}]
  %s3 = inlined_call_operand.vmem [shape: f32[1,128], index: 3, kind: input, shape index: {}]
  %s4 = inlined_call_operand.hbm [shape: bf16[2,128,768], index: 4, kind: input, shape index: {}]
  %s5 = inlined_call_operand.vmem [shape: f32[2,1,768], index: 5, kind: input, shape index: {}]
  %s6 = inlined_call_operand.hbm [shape: bf16[2,256,128], index: 6, kind: input, shape index: {}]
  %s7 = inlined_call_operand.vmem [shape: f32[2,1,128], index: 7, kind: input, shape index: {}]
  %s8 = inlined_call_operand.vmem [shape: f32[2,1,128], index: 8, kind: input, shape index: {}]
  %s9 = inlined_call_operand.vmem [shape: f32[2,1,128], index: 9, kind: input, shape index: {}]
  %s10 = inlined_call_operand.hbm [shape: bf16[2,128,256], index: 10, kind: input, shape index: {}]
  %s11 = inlined_call_operand.vmem [shape: f32[2,1,256], index: 11, kind: input, shape index: {}]
  %s12 = inlined_call_operand.hbm [shape: bf16[2,256,128], index: 12, kind: input, shape index: {}]
  %s13 = inlined_call_operand.vmem [shape: f32[2,1,128], index: 13, kind: input, shape index: {}]
  %s14 = inlined_call_operand.vmem [shape: f32[2,1,128], index: 14, kind: input, shape index: {}]
  %s15 = inlined_call_operand.vmem [shape: f32[2,1,128], index: 15, kind: input, shape index: {}]
  %s16 = inlined_call_operand.vmem [shape: bf16[128,128], index: 16, kind: input, shape index: {}]
  %s17 = inlined_call_operand.vmem [shape: f32[1,128], index: 17, kind: input, shape index: {}]
  %s18 = inlined_call_operand.vmem [shape: bf16[128,128], index: 18, kind: input, shape index: {}]
  %s19 = inlined_call_operand.vmem [shape: f32[1,128], index: 19, kind: input, shape index: {}]
  %s20 = inlined_call_operand.vmem [shape: f32[2,8,128], index: 20, kind: output, shape index: {}]
  %s21 = sld [smem:[#allocation0]]
  $region129: #{bert_classifier_forward.1} parent=0
    _
  %s23 = ssub.s32 1, %s21
  %s24 = scalar_select 0, %s23, %s21
  $region1: #{bert_classifier_forward.1} parent=0
    #allocation2 [shape = 'u8[393216]{0}', space=vmem, size = 0x60000, scoped, tag = 'input window, operand 4, single buffered']
    #allocation3 [shape = 's32[2]{0}', space=sflag, size = 0x8, scoped, tag = 'scoped memory for bert_classifier_forward.1']
    #allocation4 [shape = 'u8[131072]{0}', space=vmem, size = 0x20000, scoped, tag = 'input window, operand 6, single buffered']
    #allocation5 [shape = 's32[1]{0}', space=sflag, size = 0x4, scoped, tag = 'scoped memory for bert_classifier_forward.1']
    #allocation6 [shape = 'u8[131072]{0}', space=vmem, size = 0x20000, scoped, tag = 'input window, operand 10, single buffered']
    #allocation7 [shape = 'u8[131072]{0}', space=vmem, size = 0x20000, scoped, tag = 'input window, operand 12, single buffered']
    #allocation8 [shape = 's32[1]{0}', space=sflag, size = 0x4, scoped, tag = 'scoped memory for bert_classifier_forward.1']
    %25 = vsyncpa [#allocation3], 0
    %26 = vsyncpa [#allocation5], 0
    %27 = vsyncpa [#allocation8], 0
    loop: start=0, step=1, limit=4
    $region2: #{bert_classifier_forward.1} parent=1 // loop_pre_header
      _
    $region3: #{bert_classifier_forward.1} parent=1 // loop_header
      %s29 = sphi 0, %s33
      %p30 = scmp.ge.s32.totalorder %s29, 4
      %s39 = sphi 0, %s41
      %s42 = sphi 0, %s39
      %s43 = sphi 0, %s42
      %s59 = sphi 0, %s43
      %s65 = sphi 0, %s67
      %s68 = sphi 0, %s65
      %s69 = sphi 0, %s68
      %s85 = sphi 0, %s69
      %s89 = sphi 0, %s89
      %s91 = sphi 0, %s89
      %s92 = sphi 0, %s91
      %s106 = sphi 0, %s92
      %s110 = sphi 0, %s110
      %s112 = sphi 0, %s110
      %s113 = sphi 0, %s112
      %s127 = sphi 0, %s113
      %s131 = sphi 0, %s131
      %s133 = sphi 0, %s131
      %s134 = sphi 0, %s133
      %s148 = sphi 0, %s134
      %s152 = sphi 0, %s152
      %s154 = sphi 0, %s152
      %s155 = sphi 0, %s154
      %s169 = sphi 0, %s155
      %s173 = sphi 0, %s173
      %s175 = sphi 0, %s173
      %s176 = sphi 0, %s175
      %s190 = sphi 0, %s176
      %s194 = sphi 0, %s194
      %s196 = sphi 0, %s194
      %s197 = sphi 0, %s196
      %s211 = sphi 0, %s197
      %s215 = sphi 0, %s215
      %s217 = sphi 0, %s215
      %s218 = sphi 0, %s217
      %s232 = sphi 0, %s218
      %s236 = sphi 0, %s236
      %s238 = sphi 0, %s236
      %s239 = sphi 0, %s238
      %s253 = sphi 0, %s239
      %s257 = sphi 0, %s257
      %s259 = sphi 0, %s257
      %s260 = sphi 0, %s259
      %s274 = sphi 0, %s260
      %s278 = sphi 0, %s278
      %s280 = sphi 0, %s278
      %s281 = sphi 0, %s280
      %s295 = sphi 0, %s281
      %s299 = sphi 0, %s299
      %s301 = sphi 0, %s299
      %s302 = sphi 0, %s301
      %s316 = sphi 0, %s302
      %s320 = sphi 0, %s320
      %s322 = sphi 0, %s320
      %s323 = sphi 0, %s322
      %s337 = sphi 0, %s323
      %s341 = sphi 0, %s341
      %s343 = sphi 0, %s341
      %s344 = sphi 0, %s343
      %s358 = sphi 0, %s344
      %s362 = sphi 0, %s362
      %s364 = sphi 0, %s362
      %s365 = sphi 0, %s364
      %s379 = sphi 0, %s365
      %s383 = sphi 0, %s383
      %s385 = sphi 0, %s383
      %s386 = sphi 0, %s385
      %s400 = sphi 0, %s386
      %s404 = sphi 0, %s404
      %s406 = sphi 0, %s404
      %s407 = sphi 0, %s406
      %s421 = sphi 0, %s407
      %s425 = sphi 0, %s425
      %s427 = sphi 0, %s425
      %s428 = sphi 0, %s427
      %s442 = sphi 0, %s428
      %s446 = sphi 0, %s446
      %s448 = sphi 0, %s446
      %s449 = sphi 0, %s448
      %s463 = sphi 0, %s449
      %s469 = sphi 0, %s471
      %s472 = sphi 0, %s469
      %s473 = sphi 0, %s472
      %s489 = sphi 0, %s473
    $region4: #{bert_classifier_forward.1} parent=1 // loop_header_branch
      %32 = sbr.rel (%p30) target = $region8
    $region5: #{bert_classifier_forward.1} parent=1 // loop_body
      %s34 = ssub.s32 %s29, 1
      %s35 = ssub.s32 %s29, 2
      %s36 = sadd.s32 %s29, 1
      %s37 = ssub.s32 %s29, %s36
      %p38 = scmp.eq.s32.totalorder %s37, 0
      %s40 = sadd.s32 %s39, 1
      %s41 = scalar_select %p38, %s39, %s40
      %p44 = pneg %p38
      %p45 = scmp.eq.s32.totalorder %s29, 1
      %p46 = por %p44, %p45
      %p47 = scmp.ne.s32.totalorder %s39, %s42
      %p48 = scmp.eq.s32.totalorder %s29, 0
      %p49 = por %p47, %p48
      %p50 = scmp.ne.s32.totalorder %s39, %s42
      %p51 = scmp.eq.s32.totalorder %s34, 1
      %p52 = por %p50, %p51
      %p53 = scmp.ne.s32.totalorder %s42, %s43
      %p54 = scmp.eq.s32.totalorder %s34, 0
      %p55 = por %p53, %p54
      %p56 = scmp.ne.s32.totalorder %s42, %s43
      %p57 = scmp.eq.s32.totalorder %s35, 1
      %p58 = por %p56, %p57
      %p60 = scmp.ne.s32.totalorder %s43, %s59
      %p61 = scmp.eq.s32.totalorder %s35, 0
      %p62 = por %p60, %p61
      %s63 = ssub.s32 %s29, %s36
      %p64 = scmp.eq.s32.totalorder %s63, 0
      %s66 = sadd.s32 %s65, 1
      %s67 = scalar_select %p64, %s65, %s66
      %p70 = pneg %p64
      %p71 = scmp.eq.s32.totalorder %s29, 1
      %p72 = por %p70, %p71
      %p73 = scmp.ne.s32.totalorder %s65, %s68
      %p74 = scmp.eq.s32.totalorder %s29, 0
      %p75 = por %p73, %p74
      %p76 = scmp.ne.s32.totalorder %s65, %s68
      %p77 = scmp.eq.s32.totalorder %s34, 1
      %p78 = por %p76, %p77
      %p79 = scmp.ne.s32.totalorder %s68, %s69
      %p80 = scmp.eq.s32.totalorder %s34, 0
      %p81 = por %p79, %p80
      %p82 = scmp.ne.s32.totalorder %s68, %s69
      %p83 = scmp.eq.s32.totalorder %s35, 1
      %p84 = por %p82, %p83
      %p86 = scmp.ne.s32.totalorder %s69, %s85
      %p87 = scmp.eq.s32.totalorder %s35, 0
      %p88 = por %p86, %p87
      %s90 = sadd.s32 %s89, 1
      %p93 = scmp.eq.s32.totalorder %s29, 1
      %p94 = scmp.ne.s32.totalorder %s89, %s91
      %p95 = scmp.eq.s32.totalorder %s29, 0
      %p96 = por %p94, %p95
      %p97 = scmp.ne.s32.totalorder %s89, %s91
      %p98 = scmp.eq.s32.totalorder %s34, 1
      %p99 = por %p97, %p98
      %p100 = scmp.ne.s32.totalorder %s91, %s92
      %p101 = scmp.eq.s32.totalorder %s34, 0
      %p102 = por %p100, %p101
      %p103 = scmp.ne.s32.totalorder %s91, %s92
      %p104 = scmp.eq.s32.totalorder %s35, 1
      %p105 = por %p103, %p104
      %p107 = scmp.ne.s32.totalorder %s92, %s106
      %p108 = scmp.eq.s32.totalorder %s35, 0
      %p109 = por %p107, %p108
      %s111 = sadd.s32 %s110, 1
      %p114 = scmp.eq.s32.totalorder %s29, 1
      %p115 = scmp.ne.s32.totalorder %s110, %s112
      %p116 = scmp.eq.s32.totalorder %s29, 0
      %p117 = por %p115, %p116
      %p118 = scmp.ne.s32.totalorder %s110, %s112
      %p119 = scmp.eq.s32.totalorder %s34, 1
      %p120 = por %p118, %p119
      %p121 = scmp.ne.s32.totalorder %s112, %s113
      %p122 = scmp.eq.s32.totalorder %s34, 0
      %p123 = por %p121, %p122
      %p124 = scmp.ne.s32.totalorder %s112, %s113
      %p125 = scmp.eq.s32.totalorder %s35, 1
      %p126 = por %p124, %p125
      %p128 = scmp.ne.s32.totalorder %s113, %s127
      %p129 = scmp.eq.s32.totalorder %s35, 0
      %p130 = por %p128, %p129
      %s132 = sadd.s32 %s131, 1
      %p135 = scmp.eq.s32.totalorder %s29, 1
      %p136 = scmp.ne.s32.totalorder %s131, %s133
      %p137 = scmp.eq.s32.totalorder %s29, 0
      %p138 = por %p136, %p137
      %p139 = scmp.ne.s32.totalorder %s131, %s133
      %p140 = scmp.eq.s32.totalorder %s34, 1
      %p141 = por %p139, %p140
      %p142 = scmp.ne.s32.totalorder %s133, %s134
      %p143 = scmp.eq.s32.totalorder %s34, 0
      %p144 = por %p142, %p143
      %p145 = scmp.ne.s32.totalorder %s133, %s134
      %p146 = scmp.eq.s32.totalorder %s35, 1
      %p147 = por %p145, %p146
      %p149 = scmp.ne.s32.totalorder %s134, %s148
      %p150 = scmp.eq.s32.totalorder %s35, 0
      %p151 = por %p149, %p150
      %s153 = sadd.s32 %s152, 1
      %p156 = scmp.eq.s32.totalorder %s29, 1
      %p157 = scmp.ne.s32.totalorder %s152, %s154
      %p158 = scmp.eq.s32.totalorder %s29, 0
      %p159 = por %p157, %p158
      %p160 = scmp.ne.s32.totalorder %s152, %s154
      %p161 = scmp.eq.s32.totalorder %s34, 1
      %p162 = por %p160, %p161
      %p163 = scmp.ne.s32.totalorder %s154, %s155
      %p164 = scmp.eq.s32.totalorder %s34, 0
      %p165 = por %p163, %p164
      %p166 = scmp.ne.s32.totalorder %s154, %s155
      %p167 = scmp.eq.s32.totalorder %s35, 1
      %p168 = por %p166, %p167
      %p170 = scmp.ne.s32.totalorder %s155, %s169
      %p171 = scmp.eq.s32.totalorder %s35, 0
      %p172 = por %p170, %p171
      %s174 = sadd.s32 %s173, 1
      %p177 = scmp.eq.s32.totalorder %s29, 1
      %p178 = scmp.ne.s32.totalorder %s173, %s175
      %p179 = scmp.eq.s32.totalorder %s29, 0
      %p180 = por %p178, %p179
      %p181 = scmp.ne.s32.totalorder %s173, %s175
      %p182 = scmp.eq.s32.totalorder %s34, 1
      %p183 = por %p181, %p182
      %p184 = scmp.ne.s32.totalorder %s175, %s176
      %p185 = scmp.eq.s32.totalorder %s34, 0
      %p186 = por %p184, %p185
      %p187 = scmp.ne.s32.totalorder %s175, %s176
      %p188 = scmp.eq.s32.totalorder %s35, 1
      %p189 = por %p187, %p188
      %p191 = scmp.ne.s32.totalorder %s176, %s190
      %p192 = scmp.eq.s32.totalorder %s35, 0
      %p193 = por %p191, %p192
      %s195 = sadd.s32 %s194, 1
      %p198 = scmp.eq.s32.totalorder %s29, 1
      %p199 = scmp.ne.s32.totalorder %s194, %s196
      %p200 = scmp.eq.s32.totalorder %s29, 0
      %p201 = por %p199, %p200
      %p202 = scmp.ne.s32.totalorder %s194, %s196
      %p203 = scmp.eq.s32.totalorder %s34, 1
      %p204 = por %p202, %p203
      %p205 = scmp.ne.s32.totalorder %s196, %s197
      %p206 = scmp.eq.s32.totalorder %s34, 0
      %p207 = por %p205, %p206
      %p208 = scmp.ne.s32.totalorder %s196, %s197
      %p209 = scmp.eq.s32.totalorder %s35, 1
      %p210 = por %p208, %p209
      %p212 = scmp.ne.s32.totalorder %s197, %s211
      %p213 = scmp.eq.s32.totalorder %s35, 0
      %p214 = por %p212, %p213
      %s216 = sadd.s32 %s215, 1
      %p219 = scmp.eq.s32.totalorder %s29, 1
      %p220 = scmp.ne.s32.totalorder %s215, %s217
      %p221 = scmp.eq.s32.totalorder %s29, 0
      %p222 = por %p220, %p221
      %p223 = scmp.ne.s32.totalorder %s215, %s217
      %p224 = scmp.eq.s32.totalorder %s34, 1
      %p225 = por %p223, %p224
      %p226 = scmp.ne.s32.totalorder %s217, %s218
      %p227 = scmp.eq.s32.totalorder %s34, 0
      %p228 = por %p226, %p227
      %p229 = scmp.ne.s32.totalorder %s217, %s218
      %p230 = scmp.eq.s32.totalorder %s35, 1
      %p231 = por %p229, %p230
      %p233 = scmp.ne.s32.totalorder %s218, %s232
      %p234 = scmp.eq.s32.totalorder %s35, 0
      %p235 = por %p233, %p234
      %s237 = sadd.s32 %s236, 1
      %p240 = scmp.eq.s32.totalorder %s29, 1
      %p241 = scmp.ne.s32.totalorder %s236, %s238
      %p242 = scmp.eq.s32.totalorder %s29, 0
      %p243 = por %p241, %p242
      %p244 = scmp.ne.s32.totalorder %s236, %s238
      %p245 = scmp.eq.s32.totalorder %s34, 1
      %p246 = por %p244, %p245
      %p247 = scmp.ne.s32.totalorder %s238, %s239
      %p248 = scmp.eq.s32.totalorder %s34, 0
      %p249 = por %p247, %p248
      %p250 = scmp.ne.s32.totalorder %s238, %s239
      %p251 = scmp.eq.s32.totalorder %s35, 1
      %p252 = por %p250, %p251
      %p254 = scmp.ne.s32.totalorder %s239, %s253
      %p255 = scmp.eq.s32.totalorder %s35, 0
      %p256 = por %p254, %p255
      %s258 = sadd.s32 %s257, 1
      %p261 = scmp.eq.s32.totalorder %s29, 1
      %p262 = scmp.ne.s32.totalorder %s257, %s259
      %p263 = scmp.eq.s32.totalorder %s29, 0
      %p264 = por %p262, %p263
      %p265 = scmp.ne.s32.totalorder %s257, %s259
      %p266 = scmp.eq.s32.totalorder %s34, 1
      %p267 = por %p265, %p266
      %p268 = scmp.ne.s32.totalorder %s259, %s260
      %p269 = scmp.eq.s32.totalorder %s34, 0
      %p270 = por %p268, %p269
      %p271 = scmp.ne.s32.totalorder %s259, %s260
      %p272 = scmp.eq.s32.totalorder %s35, 1
      %p273 = por %p271, %p272
      %p275 = scmp.ne.s32.totalorder %s260, %s274
      %p276 = scmp.eq.s32.totalorder %s35, 0
      %p277 = por %p275, %p276
      %s279 = sadd.s32 %s278, 1
      %p282 = scmp.eq.s32.totalorder %s29, 1
      %p283 = scmp.ne.s32.totalorder %s278, %s280
      %p284 = scmp.eq.s32.totalorder %s29, 0
      %p285 = por %p283, %p284
      %p286 = scmp.ne.s32.totalorder %s278, %s280
      %p287 = scmp.eq.s32.totalorder %s34, 1
      %p288 = por %p286, %p287
      %p289 = scmp.ne.s32.totalorder %s280, %s281
      %p290 = scmp.eq.s32.totalorder %s34, 0
      %p291 = por %p289, %p290
      %p292 = scmp.ne.s32.totalorder %s280, %s281
      %p293 = scmp.eq.s32.totalorder %s35, 1
      %p294 = por %p292, %p293
      %p296 = scmp.ne.s32.totalorder %s281, %s295
      %p297 = scmp.eq.s32.totalorder %s35, 0
      %p298 = por %p296, %p297
      %s300 = sadd.s32 %s299, 1
      %p303 = scmp.eq.s32.totalorder %s29, 1
      %p304 = scmp.ne.s32.totalorder %s299, %s301
      %p305 = scmp.eq.s32.totalorder %s29, 0
      %p306 = por %p304, %p305
      %p307 = scmp.ne.s32.totalorder %s299, %s301
      %p308 = scmp.eq.s32.totalorder %s34, 1
      %p309 = por %p307, %p308
      %p310 = scmp.ne.s32.totalorder %s301, %s302
      %p311 = scmp.eq.s32.totalorder %s34, 0
      %p312 = por %p310, %p311
      %p313 = scmp.ne.s32.totalorder %s301, %s302
      %p314 = scmp.eq.s32.totalorder %s35, 1
      %p315 = por %p313, %p314
      %p317 = scmp.ne.s32.totalorder %s302, %s316
      %p318 = scmp.eq.s32.totalorder %s35, 0
      %p319 = por %p317, %p318
      %s321 = sadd.s32 %s320, 1
      %p324 = scmp.eq.s32.totalorder %s29, 1
      %p325 = scmp.ne.s32.totalorder %s320, %s322
      %p326 = scmp.eq.s32.totalorder %s29, 0
      %p327 = por %p325, %p326
      %p328 = scmp.ne.s32.totalorder %s320, %s322
      %p329 = scmp.eq.s32.totalorder %s34, 1
      %p330 = por %p328, %p329
      %p331 = scmp.ne.s32.totalorder %s322, %s323
      %p332 = scmp.eq.s32.totalorder %s34, 0
      %p333 = por %p331, %p332
      %p334 = scmp.ne.s32.totalorder %s322, %s323
      %p335 = scmp.eq.s32.totalorder %s35, 1
      %p336 = por %p334, %p335
      %p338 = scmp.ne.s32.totalorder %s323, %s337
      %p339 = scmp.eq.s32.totalorder %s35, 0
      %p340 = por %p338, %p339
      %s342 = sadd.s32 %s341, 1
      %p345 = scmp.eq.s32.totalorder %s29, 1
      %p346 = scmp.ne.s32.totalorder %s341, %s343
      %p347 = scmp.eq.s32.totalorder %s29, 0
      %p348 = por %p346, %p347
      %p349 = scmp.ne.s32.totalorder %s341, %s343
      %p350 = scmp.eq.s32.totalorder %s34, 1
      %p351 = por %p349, %p350
      %p352 = scmp.ne.s32.totalorder %s343, %s344
      %p353 = scmp.eq.s32.totalorder %s34, 0
      %p354 = por %p352, %p353
      %p355 = scmp.ne.s32.totalorder %s343, %s344
      %p356 = scmp.eq.s32.totalorder %s35, 1
      %p357 = por %p355, %p356
      %p359 = scmp.ne.s32.totalorder %s344, %s358
      %p360 = scmp.eq.s32.totalorder %s35, 0
      %p361 = por %p359, %p360
      %s363 = sadd.s32 %s362, 1
      %p366 = scmp.eq.s32.totalorder %s29, 1
      %p367 = scmp.ne.s32.totalorder %s362, %s364
      %p368 = scmp.eq.s32.totalorder %s29, 0
      %p369 = por %p367, %p368
      %p370 = scmp.ne.s32.totalorder %s362, %s364
      %p371 = scmp.eq.s32.totalorder %s34, 1
      %p372 = por %p370, %p371
      %p373 = scmp.ne.s32.totalorder %s364, %s365
      %p374 = scmp.eq.s32.totalorder %s34, 0
      %p375 = por %p373, %p374
      %p376 = scmp.ne.s32.totalorder %s364, %s365
      %p377 = scmp.eq.s32.totalorder %s35, 1
      %p378 = por %p376, %p377
      %p380 = scmp.ne.s32.totalorder %s365, %s379
      %p381 = scmp.eq.s32.totalorder %s35, 0
      %p382 = por %p380, %p381
      %s384 = sadd.s32 %s383, 1
      %p387 = scmp.eq.s32.totalorder %s29, 1
      %p388 = scmp.ne.s32.totalorder %s383, %s385
      %p389 = scmp.eq.s32.totalorder %s29, 0
      %p390 = por %p388, %p389
      %p391 = scmp.ne.s32.totalorder %s383, %s385
      %p392 = scmp.eq.s32.totalorder %s34, 1
      %p393 = por %p391, %p392
      %p394 = scmp.ne.s32.totalorder %s385, %s386
      %p395 = scmp.eq.s32.totalorder %s34, 0
      %p396 = por %p394, %p395
      %p397 = scmp.ne.s32.totalorder %s385, %s386
      %p398 = scmp.eq.s32.totalorder %s35, 1
      %p399 = por %p397, %p398
      %p401 = scmp.ne.s32.totalorder %s386, %s400
      %p402 = scmp.eq.s32.totalorder %s35, 0
      %p403 = por %p401, %p402
      %s405 = sadd.s32 %s404, 1
      %p408 = scmp.eq.s32.totalorder %s29, 1
      %p409 = scmp.ne.s32.totalorder %s404, %s406
      %p410 = scmp.eq.s32.totalorder %s29, 0
      %p411 = por %p409, %p410
      %p412 = scmp.ne.s32.totalorder %s404, %s406
      %p413 = scmp.eq.s32.totalorder %s34, 1
      %p414 = por %p412, %p413
      %p415 = scmp.ne.s32.totalorder %s406, %s407
      %p416 = scmp.eq.s32.totalorder %s34, 0
      %p417 = por %p415, %p416
      %p418 = scmp.ne.s32.totalorder %s406, %s407
      %p419 = scmp.eq.s32.totalorder %s35, 1
      %p420 = por %p418, %p419
      %p422 = scmp.ne.s32.totalorder %s407, %s421
      %p423 = scmp.eq.s32.totalorder %s35, 0
      %p424 = por %p422, %p423
      %s426 = sadd.s32 %s425, 1
      %p429 = scmp.eq.s32.totalorder %s29, 1
      %p430 = scmp.ne.s32.totalorder %s425, %s427
      %p431 = scmp.eq.s32.totalorder %s29, 0
      %p432 = por %p430, %p431
      %p433 = scmp.ne.s32.totalorder %s425, %s427
      %p434 = scmp.eq.s32.totalorder %s34, 1
      %p435 = por %p433, %p434
      %p436 = scmp.ne.s32.totalorder %s427, %s428
      %p437 = scmp.eq.s32.totalorder %s34, 0
      %p438 = por %p436, %p437
      %p439 = scmp.ne.s32.totalorder %s427, %s428
      %p440 = scmp.eq.s32.totalorder %s35, 1
      %p441 = por %p439, %p440
      %p443 = scmp.ne.s32.totalorder %s428, %s442
      %p444 = scmp.eq.s32.totalorder %s35, 0
      %p445 = por %p443, %p444
      %s447 = sadd.s32 %s446, 1
      %p450 = scmp.eq.s32.totalorder %s29, 1
      %p451 = scmp.ne.s32.totalorder %s446, %s448
      %p452 = scmp.eq.s32.totalorder %s29, 0
      %p453 = por %p451, %p452
      %p454 = scmp.ne.s32.totalorder %s446, %s448
      %p455 = scmp.eq.s32.totalorder %s34, 1
      %p456 = por %p454, %p455
      %p457 = scmp.ne.s32.totalorder %s448, %s449
      %p458 = scmp.eq.s32.totalorder %s34, 0
      %p459 = por %p457, %p458
      %p460 = scmp.ne.s32.totalorder %s448, %s449
      %p461 = scmp.eq.s32.totalorder %s35, 1
      %p462 = por %p460, %p461
      %p464 = scmp.ne.s32.totalorder %s449, %s463
      %p465 = scmp.eq.s32.totalorder %s35, 0
      %p466 = por %p464, %p465
      %s467 = ssub.s32 %s29, %s36
      %p468 = scmp.eq.s32.totalorder %s467, 0
      %s470 = sadd.s32 %s469, 1
      %s471 = scalar_select %p468, %s469, %s470
      %p474 = pneg %p468
      %p475 = scmp.eq.s32.totalorder %s29, 1
      %p476 = por %p474, %p475
      %p477 = scmp.ne.s32.totalorder %s469, %s472
      %p478 = scmp.eq.s32.totalorder %s29, 0
      %p479 = por %p477, %p478
      %p480 = scmp.ne.s32.totalorder %s469, %s472
      %p481 = scmp.eq.s32.totalorder %s34, 1
      %p482 = por %p480, %p481
      %p483 = scmp.ne.s32.totalorder %s472, %s473
      %p484 = scmp.eq.s32.totalorder %s34, 0
      %p485 = por %p483, %p484
      %p486 = scmp.ne.s32.totalorder %s472, %s473
      %p487 = scmp.eq.s32.totalorder %s35, 1
      %p488 = por %p486, %p487
      %p490 = scmp.ne.s32.totalorder %s473, %s489
      %p491 = scmp.eq.s32.totalorder %s35, 0
      %p492 = por %p490, %p491
      %p493 = scmp.le.s32.totalorder 1, %s29
      %p494 = scmp.lt.s32.totalorder %s29, 3
      %p495 = pnand %p493, %p494
      %p496 = pneg %p495
      // Predicated region
      $region9: #{bert_classifier_forward.1} parent=5 // pred_check
        _
      $region10: #{bert_classifier_forward.1} parent=5 // pred_check_branch
        %498 = sbr.rel (%p495) target = $region12
      $region11: #{bert_classifier_forward.1} parent=5 // pred_region
        %s499 = ssub.s32 %s29, 1
        // Predicated region
        $region13: #{bert_classifier_forward.1} parent=11 // pred_check
          %p500 = pneg %p102
        $region14: #{bert_classifier_forward.1} parent=11 // pred_check_branch
          %502 = sbr.rel (%p500) target = $region16
        $region15: #{bert_classifier_forward.1} parent=11 // pred_region
          _
        $region16: #{bert_classifier_forward.1} parent=11 // pred_fallthru
          _
        // Predicated region
        $region17: #{bert_classifier_forward.1} parent=11 // pred_check
          %p503 = pneg %p123
        $region18: #{bert_classifier_forward.1} parent=11 // pred_check_branch
          %505 = sbr.rel (%p503) target = $region20
        $region19: #{bert_classifier_forward.1} parent=11 // pred_region
          _
        $region20: #{bert_classifier_forward.1} parent=11 // pred_fallthru
          _
        // Predicated region
        $region21: #{bert_classifier_forward.1} parent=11 // pred_check
          %p506 = pneg %p144
        $region22: #{bert_classifier_forward.1} parent=11 // pred_check_branch
          %508 = sbr.rel (%p506) target = $region24
        $region23: #{bert_classifier_forward.1} parent=11 // pred_region
          %s510 = ssub.s32 12288, 12288
          %511 = vsyncadd [#allocation3], %s510
          %s512 = sshll.u32 [#allocation2], 4
          %s513 = int_to_ptr.vmem [resolvable:$true] %s512
          %518 = dma.hbm_to_vmem [thread:$0]  %s4, 12288, %s513, [#allocation3], 384, 384, 24
        $region24: #{bert_classifier_forward.1} parent=11 // pred_fallthru
          _
        // Predicated region
        $region25: #{bert_classifier_forward.1} parent=11 // pred_check
          %p519 = pneg %p165
        $region26: #{bert_classifier_forward.1} parent=11 // pred_check_branch
          %521 = sbr.rel (%p519) target = $region28
        $region27: #{bert_classifier_forward.1} parent=11 // pred_region
          _
        $region28: #{bert_classifier_forward.1} parent=11 // pred_fallthru
          _
        // Predicated region
        $region29: #{bert_classifier_forward.1} parent=11 // pred_check
          %p522 = pneg %p186
        $region30: #{bert_classifier_forward.1} parent=11 // pred_check_branch
          %524 = sbr.rel (%p522) target = $region32
        $region31: #{bert_classifier_forward.1} parent=11 // pred_region
          %s526 = ssub.s32 4096, 4096
          %527 = vsyncadd [#allocation5], %s526
          %s528 = sshll.u32 [#allocation4], 4
          %s529 = int_to_ptr.vmem [resolvable:$true] %s528
          %534 = dma.hbm_to_vmem [thread:$0]  %s6, 4096, %s529, [#allocation5], 64, 64, 4
        $region32: #{bert_classifier_forward.1} parent=11 // pred_fallthru
          _
        // Predicated region
        $region33: #{bert_classifier_forward.1} parent=11 // pred_check
          %p535 = pneg %p207
        $region34: #{bert_classifier_forward.1} parent=11 // pred_check_branch
          %537 = sbr.rel (%p535) target = $region36
        $region35: #{bert_classifier_forward.1} parent=11 // pred_region
          _
        $region36: #{bert_classifier_forward.1} parent=11 // pred_fallthru
          _
        // Predicated region
        $region37: #{bert_classifier_forward.1} parent=11 // pred_check
          %p538 = pneg %p228
        $region38: #{bert_classifier_forward.1} parent=11 // pred_check_branch
          %540 = sbr.rel (%p538) target = $region40
        $region39: #{bert_classifier_forward.1} parent=11 // pred_region
          _
        $region40: #{bert_classifier_forward.1} parent=11 // pred_fallthru
          _
        // Predicated region
        $region41: #{bert_classifier_forward.1} parent=11 // pred_check
          %p541 = pneg %p249
        $region42: #{bert_classifier_forward.1} parent=11 // pred_check_branch
          %543 = sbr.rel (%p541) target = $region44
        $region43: #{bert_classifier_forward.1} parent=11 // pred_region
          _
        $region44: #{bert_classifier_forward.1} parent=11 // pred_fallthru
          _
        // Predicated region
        $region45: #{bert_classifier_forward.1} parent=11 // pred_check
          %p544 = pneg %p270
        $region46: #{bert_classifier_forward.1} parent=11 // pred_check_branch
          %546 = sbr.rel (%p544) target = $region48
        $region47: #{bert_classifier_forward.1} parent=11 // pred_region
          %s548 = ssub.s32 4096, 4096
          %549 = vsyncadd [#allocation5], %s548
          %s550 = sshll.u32 [#allocation6], 4
          %s551 = int_to_ptr.vmem [resolvable:$true] %s550
          %556 = dma.hbm_to_vmem [thread:$0]  %s10, 4096, %s551, [#allocation5], 128, 128, 8
        $region48: #{bert_classifier_forward.1} parent=11 // pred_fallthru
          _
        // Predicated region
        $region49: #{bert_classifier_forward.1} parent=11 // pred_check
          %p557 = pneg %p291
        $region50: #{bert_classifier_forward.1} parent=11 // pred_check_branch
          %559 = sbr.rel (%p557) target = $region52
        $region51: #{bert_classifier_forward.1} parent=11 // pred_region
          _
        $region52: #{bert_classifier_forward.1} parent=11 // pred_fallthru
          _
        // Predicated region
        $region53: #{bert_classifier_forward.1} parent=11 // pred_check
          %p560 = pneg %p312
        $region54: #{bert_classifier_forward.1} parent=11 // pred_check_branch
          %562 = sbr.rel (%p560) target = $region56
        $region55: #{bert_classifier_forward.1} parent=11 // pred_region
          %s564 = ssub.s32 4096, 4096
          %565 = vsyncadd [#allocation8], %s564
          %s566 = sshll.u32 [#allocation7], 4
          %s567 = int_to_ptr.vmem [resolvable:$true] %s566
          %572 = dma.hbm_to_vmem [thread:$0]  %s12, 4096, %s567, [#allocation8], 64, 64, 4
        $region56: #{bert_classifier_forward.1} parent=11 // pred_fallthru
          _
        // Predicated region
        $region57: #{bert_classifier_forward.1} parent=11 // pred_check
          %p573 = pneg %p333
        $region58: #{bert_classifier_forward.1} parent=11 // pred_check_branch
          %575 = sbr.rel (%p573) target = $region60
        $region59: #{bert_classifier_forward.1} parent=11 // pred_region
          _
        $region60: #{bert_classifier_forward.1} parent=11 // pred_fallthru
          _
        // Predicated region
        $region61: #{bert_classifier_forward.1} parent=11 // pred_check
          %p576 = pneg %p354
        $region62: #{bert_classifier_forward.1} parent=11 // pred_check_branch
          %578 = sbr.rel (%p576) target = $region64
        $region63: #{bert_classifier_forward.1} parent=11 // pred_region
          _
        $region64: #{bert_classifier_forward.1} parent=11 // pred_fallthru
          _
        // Predicated region
        $region65: #{bert_classifier_forward.1} parent=11 // pred_check
          %p579 = pneg %p375
        $region66: #{bert_classifier_forward.1} parent=11 // pred_check_branch
          %581 = sbr.rel (%p579) target = $region68
        $region67: #{bert_classifier_forward.1} parent=11 // pred_region
          _
        $region68: #{bert_classifier_forward.1} parent=11 // pred_fallthru
          _
        // Predicated region
        $region69: #{bert_classifier_forward.1} parent=11 // pred_check
          %p582 = pneg %p396
        $region70: #{bert_classifier_forward.1} parent=11 // pred_check_branch
          %584 = sbr.rel (%p582) target = $region72
        $region71: #{bert_classifier_forward.1} parent=11 // pred_region
          _
        $region72: #{bert_classifier_forward.1} parent=11 // pred_fallthru
          _
        // Predicated region
        $region73: #{bert_classifier_forward.1} parent=11 // pred_check
          %p585 = pneg %p417
        $region74: #{bert_classifier_forward.1} parent=11 // pred_check_branch
          %587 = sbr.rel (%p585) target = $region76
        $region75: #{bert_classifier_forward.1} parent=11 // pred_region
          _
        $region76: #{bert_classifier_forward.1} parent=11 // pred_fallthru
          _
        // Predicated region
        $region77: #{bert_classifier_forward.1} parent=11 // pred_check
          %p588 = pneg %p438
        $region78: #{bert_classifier_forward.1} parent=11 // pred_check_branch
          %590 = sbr.rel (%p588) target = $region80
        $region79: #{bert_classifier_forward.1} parent=11 // pred_region
          _
        $region80: #{bert_classifier_forward.1} parent=11 // pred_fallthru
          _
        // Predicated region
        $region81: #{bert_classifier_forward.1} parent=11 // pred_check
          %p591 = pneg %p459
        $region82: #{bert_classifier_forward.1} parent=11 // pred_check_branch
          %593 = sbr.rel (%p591) target = $region84
        $region83: #{bert_classifier_forward.1} parent=11 // pred_region
          _
        $region84: #{bert_classifier_forward.1} parent=11 // pred_fallthru
          _
      $region12: #{bert_classifier_forward.1} parent=5 // pred_fallthru
        _
      %p594 = scmp.lt.s32.totalorder %s29, 2
      // Predicated region
      $region85: #{bert_classifier_forward.1} parent=5 // pred_check
        %p595 = pneg %p594
      $region86: #{bert_classifier_forward.1} parent=5 // pred_check_branch
        %597 = sbr.rel (%p595) target = $region88
      $region87: #{bert_classifier_forward.1} parent=5 // pred_region
        // Predicated region
        $region89: #{bert_classifier_forward.1} parent=87 // pred_check
          %p598 = pneg %p49
        $region90: #{bert_classifier_forward.1} parent=87 // pred_check_branch
          %600 = sbr.rel (%p598) target = $region92
        $region91: #{bert_classifier_forward.1} parent=87 // pred_region
          %p601 = scmp.lt.s32.totalorder %s29, 1
          %s602 = scalar_select %p601, %s29, 1
          %s603 = smul.addr %s602, 8
          %s604 = scalar_lea.vmem %s0, %s603
        $region92: #{bert_classifier_forward.1} parent=87 // pred_fallthru
          _
        // Predicated region
        $region93: #{bert_classifier_forward.1} parent=87 // pred_check
          %p605 = pneg %p75
        $region94: #{bert_classifier_forward.1} parent=87 // pred_check_branch
          %607 = sbr.rel (%p605) target = $region96
        $region95: #{bert_classifier_forward.1} parent=87 // pred_region
          %p608 = scmp.lt.s32.totalorder %s29, 1
          %s609 = scalar_select %p608, %s29, 1
          %s610 = scalar_lea.vmem %s1, %s609
        $region96: #{bert_classifier_forward.1} parent=87 // pred_fallthru
          _
      $region88: #{bert_classifier_forward.1} parent=5 // pred_fallthru
        _
      %p611 = scmp.le.s32.totalorder 1, %s29
      %p612 = scmp.lt.s32.totalorder %s29, 3
      %p613 = pnand %p611, %p612
      %p614 = pneg %p613
      // Predicated region
      $region97: #{bert_classifier_forward.1} parent=5 // pred_check
        _
      $region98: #{bert_classifier_forward.1} parent=5 // pred_check_branch
        %616 = sbr.rel (%p613) target = $region100
      $region99: #{bert_classifier_forward.1} parent=5 // pred_region
        %s617 = ssub.s32 %s29, 1
        // Predicated region
        $region101: #{bert_classifier_forward.1} parent=99 // pred_check
          %p618 = pneg %p144
        $region102: #{bert_classifier_forward.1} parent=99 // pred_check_branch
          %620 = sbr.rel (%p618) target = $region104
        $region103: #{bert_classifier_forward.1} parent=99 // pred_region
          %621 = dma.done [#allocation3], 12288
        $region104: #{bert_classifier_forward.1} parent=99 // pred_fallthru
          _
        // Predicated region
        $region105: #{bert_classifier_forward.1} parent=99 // pred_check
          %p622 = pneg %p186
        $region106: #{bert_classifier_forward.1} parent=99 // pred_check_branch
          %624 = sbr.rel (%p622) target = $region108
        $region107: #{bert_classifier_forward.1} parent=99 // pred_region
          %625 = dma.done [#allocation5], 4096
        $region108: #{bert_classifier_forward.1} parent=99 // pred_fallthru
          _
        // Predicated region
        $region109: #{bert_classifier_forward.1} parent=99 // pred_check
          %p626 = pneg %p270
        $region110: #{bert_classifier_forward.1} parent=99 // pred_check_branch
          %628 = sbr.rel (%p626) target = $region112
        $region111: #{bert_classifier_forward.1} parent=99 // pred_region
          %629 = dma.done [#allocation5], 4096
        $region112: #{bert_classifier_forward.1} parent=99 // pred_fallthru
          _
        // Predicated region
        $region113: #{bert_classifier_forward.1} parent=99 // pred_check
          %p630 = pneg %p312
        $region114: #{bert_classifier_forward.1} parent=99 // pred_check_branch
          %632 = sbr.rel (%p630) target = $region116
        $region115: #{bert_classifier_forward.1} parent=99 // pred_region
          %633 = dma.done [#allocation8], 4096
        $region116: #{bert_classifier_forward.1} parent=99 // pred_fallthru
          _
        %p634 = scmp.lt.s32.totalorder %s34, 1
        %s635 = scalar_select %p634, %s34, 1
        %s636 = smul.addr %s635, 8
        %s637 = scalar_lea.vmem %s0, %s636
        %p638 = pneg %p55
        %p639 = pneg %p52
        %p640 = scmp.lt.s32.totalorder %s34, 1
        %s641 = scalar_select %p640, %s34, 1
        %s642 = scalar_lea.vmem %s1, %s641
        %p643 = pneg %p81
        %p644 = pneg %p78
        %p645 = pneg %p102
        %p646 = pneg %p99
        %p647 = pneg %p123
        %p648 = pneg %p120
        %p649 = pneg %p144
        %p650 = pneg %p141
        %p651 = pneg %p165
        %p652 = pneg %p162
        %p653 = pneg %p186
        %p654 = pneg %p183
        %p655 = pneg %p207
        %p656 = pneg %p204
        %p657 = pneg %p228
        %p658 = pneg %p225
        %p659 = pneg %p249
        %p660 = pneg %p246
        %p661 = pneg %p270
        %p662 = pneg %p267
        %p663 = pneg %p291
        %p664 = pneg %p288
        %p665 = pneg %p312
        %p666 = pneg %p309
        %p667 = pneg %p333
        %p668 = pneg %p330
        %p669 = pneg %p354
        %p670 = pneg %p351
        %p671 = pneg %p375
        %p672 = pneg %p372
        %p673 = pneg %p396
        %p674 = pneg %p393
        %p675 = pneg %p417
        %p676 = pneg %p414
        %p677 = pneg %p438
        %p678 = pneg %p435
        %p679 = pneg %p459
        %p680 = pneg %p456
        %p681 = pneg %p485
        %p682 = pneg %p482
        %p683 = scmp.lt.s32.totalorder %s34, 1
        %s684 = scalar_select %p683, %s34, 1
        %s685 = smul.addr %s684, 8
        %s686 = scalar_lea.vmem %s20, %s685
        %p687 = scmp.lt.s32.totalorder %s34, 1
        %s688 = scalar_select %p687, %s34, 1
        %s689 = smul.addr %s688, 8
        %s690 = scalar_lea.vmem %s0, %s689
        %p691 = scmp.lt.s32.totalorder %s34, 1
        %s692 = scalar_select %p691, %s34, 1
        %s693 = scalar_lea.vmem %s1, %s692
        %p694 = scmp.lt.s32.totalorder %s34, 1
        %s695 = scalar_select %p694, %s34, 1
        %s696 = smul.addr %s695, 8
        %s697 = scalar_lea.vmem %s20, %s696
        %v699 = vld [vmem:[%s690] sm:$0xff]
        %v700 = vld [vmem:[%s2] sm:$0x1]
        %v701 = vld [vmem:[%s3] sm:$0x1]
        %702 = vadd.xlane.f32.xlu0 %v699
        %v703 = vpop.xlane.xlu0 %702
        %v704 = vrcp.pop 128.0
        %v705 = vmul.f32 %v703, %v704
        %v706 = vsub.f32 %v699, %v705
        %v707 = vmul.f32 %v706, %v706
        %708 = vadd.xlane.f32.xlu0 %v707
        %v709 = vpop.xlane.xlu0 %708
        %v710 = vmul.f32 %v709, %v704
        %v711 = vadd.f32 %v710, 1e-12
        %v712 = vrsqrt.pop %v711
        %v713 = vmul.f32 %v706, %v712
        %v715 = vlaneseq
        %v716 = vshrl.u32 %v715, 7
        %v717 = vsub.s32 0, %v716
        %v718 = vrot.slane %v700, %v717
        %v720 = vmul.f32 %v713, %v718
        %v722 = vlaneseq
        %v723 = vshrl.u32 %v722, 7
        %v724 = vsub.s32 0, %v723
        %v725 = vrot.slane %v701, %v724
        %v727 = vadd.f32 %v720, %v725
        %v728 = vld [vmem:[%s693] sm:$0x1]
        %v729 = vpack.c.bf16 %v727, %v727
        %v730 = vld [vmem:[#allocation2] sm:$0xff]
        %v731 = vld [vmem:[#allocation2 + $0x8] sm:$0xff]
        %v732 = vld [vmem:[#allocation2 + $0x10] sm:$0xff]
        %v733 = vld [vmem:[#allocation2 + $0x18] sm:$0xff]
        %v734 = vld [vmem:[#allocation2 + $0x20] sm:$0xff]
        %v735 = vld [vmem:[#allocation2 + $0x28] sm:$0xff]
        %v736 = vld [vmem:[#allocation2 + $0x30] sm:$0xff]
        %v737 = vld [vmem:[#allocation2 + $0x38] sm:$0xff]
        %v738 = vld [vmem:[#allocation2 + $0x40] sm:$0xff]
        %v739 = vld [vmem:[#allocation2 + $0x48] sm:$0xff]
        %v740 = vld [vmem:[#allocation2 + $0x50] sm:$0xff]
        %v741 = vld [vmem:[#allocation2 + $0x58] sm:$0xff]
        %v742 = vld [vmem:[#allocation2 + $0x60] sm:$0xff]
        %v743 = vld [vmem:[#allocation2 + $0x68] sm:$0xff]
        %v744 = vld [vmem:[#allocation2 + $0x70] sm:$0xff]
        %v745 = vld [vmem:[#allocation2 + $0x78] sm:$0xff]
        %v746 = vld [vmem:[#allocation2 + $0x80] sm:$0xff]
        %v747 = vld [vmem:[#allocation2 + $0x88] sm:$0xff]
        %v748 = vld [vmem:[#allocation2 + $0x90] sm:$0xff]
        %v749 = vld [vmem:[#allocation2 + $0x98] sm:$0xff]
        %v750 = vld [vmem:[#allocation2 + $0xa0] sm:$0xff]
        %v751 = vld [vmem:[#allocation2 + $0xa8] sm:$0xff]
        %v752 = vld [vmem:[#allocation2 + $0xb0] sm:$0xff]
        %v753 = vld [vmem:[#allocation2 + $0xb8] sm:$0xff]
        %v754 = vld [vmem:[#allocation2 + $0xc0] sm:$0xff]
        %v755 = vld [vmem:[#allocation2 + $0xc8] sm:$0xff]
        %v756 = vld [vmem:[#allocation2 + $0xd0] sm:$0xff]
        %v757 = vld [vmem:[#allocation2 + $0xd8] sm:$0xff]
        %v758 = vld [vmem:[#allocation2 + $0xe0] sm:$0xff]
        %v759 = vld [vmem:[#allocation2 + $0xe8] sm:$0xff]
        %v760 = vld [vmem:[#allocation2 + $0xf0] sm:$0xff]
        %v761 = vld [vmem:[#allocation2 + $0xf8] sm:$0xff]
        %v762 = vld [vmem:[#allocation2 + $0x100] sm:$0xff]
        %v763 = vld [vmem:[#allocation2 + $0x108] sm:$0xff]
        %v764 = vld [vmem:[#allocation2 + $0x110] sm:$0xff]
        %v765 = vld [vmem:[#allocation2 + $0x118] sm:$0xff]
        %v766 = vld [vmem:[#allocation2 + $0x120] sm:$0xff]
        %v767 = vld [vmem:[#allocation2 + $0x128] sm:$0xff]
        %v768 = vld [vmem:[#allocation2 + $0x130] sm:$0xff]
        %v769 = vld [vmem:[#allocation2 + $0x138] sm:$0xff]
        %v770 = vld [vmem:[#allocation2 + $0x140] sm:$0xff]
        %v771 = vld [vmem:[#allocation2 + $0x148] sm:$0xff]
        %v772 = vld [vmem:[#allocation2 + $0x150] sm:$0xff]
        %v773 = vld [vmem:[#allocation2 + $0x158] sm:$0xff]
        %v774 = vld [vmem:[#allocation2 + $0x160] sm:$0xff]
        %v775 = vld [vmem:[#allocation2 + $0x168] sm:$0xff]
        %v776 = vld [vmem:[#allocation2 + $0x170] sm:$0xff]
        %v777 = vld [vmem:[#allocation2 + $0x178] sm:$0xff]
        %v778 = vld [vmem:[%s5] sm:$0x3f]
        %v780 = vlaneseq
        %v781 = vshrl.u32 %v780, 7
        %v782 = vsub.s32 0, %v781
        %v783 = vrot.slane %v778, %v782
        %v784 = vlaneseq
        %v785 = vshrl.u32 %v784, 7
        %v786 = vsub.s32 1, %v785
        %v787 = vrot.slane %v778, %v786
        %v788 = vlaneseq
        %v789 = vshrl.u32 %v788, 7
        %v790 = vsub.s32 2, %v789
        %v791 = vrot.slane %v778, %v790
        %v792 = vlaneseq
        %v793 = vshrl.u32 %v792, 7
        %v794 = vsub.s32 3, %v793
        %v795 = vrot.slane %v778, %v794
        %v796 = vlaneseq
        %v797 = vshrl.u32 %v796, 7
        %v798 = vsub.s32 4, %v797
        %v799 = vrot.slane %v778, %v798
        %v800 = vlaneseq
        %v801 = vshrl.u32 %v800, 7
        %v802 = vsub.s32 5, %v801
        %v803 = vrot.slane %v778, %v802
        %v858 = vunpack.c.l.b16 %v730
        %v859 = vunpack.c.h.b16 %v730
        %v860 = vunpack.c.l.b16 %v731
        %v861 = vunpack.c.h.b16 %v731
        %v862 = vunpack.c.l.b16 %v732
        %v863 = vunpack.c.h.b16 %v732
        %v864 = vunpack.c.l.b16 %v733
        %v865 = vunpack.c.h.b16 %v733
        %v866 = vunpack.c.l.b16 %v734
        %v867 = vunpack.c.h.b16 %v734
        %v868 = vunpack.c.l.b16 %v735
        %v869 = vunpack.c.h.b16 %v735
        %v870 = vunpack.c.l.b16 %v736
        %v871 = vunpack.c.h.b16 %v736
        %v872 = vunpack.c.l.b16 %v737
        %v873 = vunpack.c.h.b16 %v737
        %v874 = vunpack.c.l.b16 %v738
        %v875 = vunpack.c.h.b16 %v738
        %v876 = vunpack.c.l.b16 %v739
        %v877 = vunpack.c.h.b16 %v739
        %v878 = vunpack.c.l.b16 %v740
        %v879 = vunpack.c.h.b16 %v740
        %v880 = vunpack.c.l.b16 %v741
        %v881 = vunpack.c.h.b16 %v741
        %v882 = vunpack.c.l.b16 %v742
        %v883 = vunpack.c.h.b16 %v742
        %v884 = vunpack.c.l.b16 %v743
        %v885 = vunpack.c.h.b16 %v743
        %v886 = vunpack.c.l.b16 %v744
        %v887 = vunpack.c.h.b16 %v744
        %v888 = vunpack.c.l.b16 %v745
        %v889 = vunpack.c.h.b16 %v745
        %v890 = vunpack.c.l.b16 %v746
        %v891 = vunpack.c.h.b16 %v746
        %v892 = vunpack.c.l.b16 %v747
        %v893 = vunpack.c.h.b16 %v747
        %v894 = vunpack.c.l.b16 %v748
        %v895 = vunpack.c.h.b16 %v748
        %v896 = vunpack.c.l.b16 %v749
        %v897 = vunpack.c.h.b16 %v749
        %v898 = vunpack.c.l.b16 %v750
        %v899 = vunpack.c.h.b16 %v750
        %v900 = vunpack.c.l.b16 %v751
        %v901 = vunpack.c.h.b16 %v751
        %v902 = vunpack.c.l.b16 %v752
        %v903 = vunpack.c.h.b16 %v752
        %v904 = vunpack.c.l.b16 %v753
        %v905 = vunpack.c.h.b16 %v753
        %v906 = vunpack.c.l.b16 %v754
        %v907 = vunpack.c.h.b16 %v754
        %v908 = vunpack.c.l.b16 %v755
        %v909 = vunpack.c.h.b16 %v755
        %v910 = vunpack.c.l.b16 %v756
        %v911 = vunpack.c.h.b16 %v756
        %v912 = vunpack.c.l.b16 %v757
        %v913 = vunpack.c.h.b16 %v757
        %v914 = vunpack.c.l.b16 %v758
        %v915 = vunpack.c.h.b16 %v758
        %v916 = vunpack.c.l.b16 %v759
        %v917 = vunpack.c.h.b16 %v759
        %v918 = vunpack.c.l.b16 %v760
        %v919 = vunpack.c.h.b16 %v760
        %v920 = vunpack.c.l.b16 %v761
        %v921 = vunpack.c.h.b16 %v761
        %v922 = vunpack.c.l.b16 %v762
        %v923 = vunpack.c.h.b16 %v762
        %v924 = vunpack.c.l.b16 %v763
        %v925 = vunpack.c.h.b16 %v763
        %v926 = vunpack.c.l.b16 %v764
        %v927 = vunpack.c.h.b16 %v764
        %v928 = vunpack.c.l.b16 %v765
        %v929 = vunpack.c.h.b16 %v765
        %v930 = vunpack.c.l.b16 %v766
        %v931 = vunpack.c.h.b16 %v766
        %v932 = vunpack.c.l.b16 %v767
        %v933 = vunpack.c.h.b16 %v767
        %v934 = vunpack.c.l.b16 %v768
        %v935 = vunpack.c.h.b16 %v768
        %v936 = vunpack.c.l.b16 %v769
        %v937 = vunpack.c.h.b16 %v769
        %v938 = vunpack.c.l.b16 %v770
        %v939 = vunpack.c.h.b16 %v770
        %v940 = vunpack.c.l.b16 %v771
        %v941 = vunpack.c.h.b16 %v771
        %v942 = vunpack.c.l.b16 %v772
        %v943 = vunpack.c.h.b16 %v772
        %v944 = vunpack.c.l.b16 %v773
        %v945 = vunpack.c.h.b16 %v773
        %v946 = vunpack.c.l.b16 %v774
        %v947 = vunpack.c.h.b16 %v774
        %v948 = vunpack.c.l.b16 %v775
        %v949 = vunpack.c.h.b16 %v775
        %v950 = vunpack.c.l.b16 %v776
        %v951 = vunpack.c.h.b16 %v776
        %v952 = vunpack.c.l.b16 %v777
        %v953 = vunpack.c.h.b16 %v777
        %v954 = vpack.c.b16 %v864, %v858
        %v955 = vpack.c.b16 %v865, %v859
        %v956 = vpack.c.b16 %v866, %v860
        %v957 = vpack.c.b16 %v867, %v861
        %v958 = vpack.c.b16 %v868, %v862
        %v959 = vpack.c.b16 %v869, %v863
        %v960 = vpack.c.b16 %v876, %v870
        %v961 = vpack.c.b16 %v877, %v871
        %v962 = vpack.c.b16 %v878, %v872
        %v963 = vpack.c.b16 %v879, %v873
        %v964 = vpack.c.b16 %v880, %v874
        %v965 = vpack.c.b16 %v881, %v875
        %v966 = vpack.c.b16 %v888, %v882
        %v967 = vpack.c.b16 %v889, %v883
        %v968 = vpack.c.b16 %v890, %v884
        %v969 = vpack.c.b16 %v891, %v885
        %v970 = vpack.c.b16 %v892, %v886
        %v971 = vpack.c.b16 %v893, %v887
        %v972 = vpack.c.b16 %v900, %v894
        %v973 = vpack.c.b16 %v901, %v895
        %v974 = vpack.c.b16 %v902, %v896
        %v975 = vpack.c.b16 %v903, %v897
        %v976 = vpack.c.b16 %v904, %v898
        %v977 = vpack.c.b16 %v905, %v899
        %v978 = vpack.c.b16 %v912, %v906
        %v979 = vpack.c.b16 %v913, %v907
        %v980 = vpack.c.b16 %v914, %v908
        %v981 = vpack.c.b16 %v915, %v909
        %v982 = vpack.c.b16 %v916, %v910
        %v983 = vpack.c.b16 %v917, %v911
        %v984 = vpack.c.b16 %v924, %v918
        %v985 = vpack.c.b16 %v925, %v919
        %v986 = vpack.c.b16 %v926, %v920
        %v987 = vpack.c.b16 %v927, %v921
        %v988 = vpack.c.b16 %v928, %v922
        %v989 = vpack.c.b16 %v929, %v923
        %v990 = vpack.c.b16 %v936, %v930
        %v991 = vpack.c.b16 %v937, %v931
        %v992 = vpack.c.b16 %v938, %v932
        %v993 = vpack.c.b16 %v939, %v933
        %v994 = vpack.c.b16 %v940, %v934
        %v995 = vpack.c.b16 %v941, %v935
        %v996 = vpack.c.b16 %v948, %v942
        %v997 = vpack.c.b16 %v949, %v943
        %v998 = vpack.c.b16 %v950, %v944
        %v999 = vpack.c.b16 %v951, %v945
        %v1000 = vpack.c.b16 %v952, %v946
        %v1001 = vpack.c.b16 %v953, %v947
        %1050 = vmatprep.subr.bf16.mxu0 %v997
        %1051 = vmatpush1.bf16.msra.mxu0 %v996
        %1052 = vmatprep.subr.bf16.mxu0 %v991
        %1053 = vmatpush1.bf16.msra.mxu0 %v990
        %1054 = vmatprep.subr.bf16.mxu0 %v985
        %1055 = vmatpush1.bf16.msra.mxu0 %v984
        %1056 = vmatprep.subr.bf16.mxu0 %v979
        %1057 = vmatpush1.bf16.msra.mxu0 %v978
        %1058 = vmatprep.subr.bf16.mxu0 %v973
        %1059 = vmatpush1.bf16.msra.mxu0 %v972
        %1060 = vmatprep.subr.bf16.mxu0 %v967
        %1061 = vmatpush1.bf16.msra.mxu0 %v966
        %1062 = vmatprep.subr.bf16.mxu0 %v961
        %1063 = vmatpush1.bf16.msra.mxu0 %v960
        %1064 = vmatprep.subr.bf16.mxu0 %v955
        %1065 = vmatpush1.bf16.msra.mxu0 %v954
        %1066 = vmatprep.subr.bf16.mxu0 0
        %1067 = vmatpush2.bf16.msra.mxu0 0
        %1068 = vmatprep.subr.bf16.mxu0 0
        %1069 = vmatpush2.bf16.msra.mxu0 0
        %1070 = vmatprep.subr.bf16.mxu0 0
        %1071 = vmatpush2.bf16.msra.mxu0 0
        %1072 = vmatprep.subr.bf16.mxu0 0
        %1073 = vmatpush2.bf16.msra.mxu0 0
        %1074 = vmatprep.subr.bf16.mxu0 0
        %1075 = vmatpush2.bf16.msra.mxu0 0
        %1076 = vmatprep.subr.bf16.mxu0 0
        %1077 = vmatpush2.bf16.msra.mxu0 0
        %1078 = vmatprep.subr.bf16.mxu0 0
        %1079 = vmatpush2.bf16.msra.mxu0 0
        %1080 = vmatprep.subr.bf16.mxu0 0
        %1081 = vmatpush2.bf16.msra.mxu0 0
        %1082 = vmatprep.mubr.bf16.mxu0 0
        %1083 = vmatmul.mubr.bf16.gmra.mxu0 %v729
        %v1084 = vpop.f32.mrf.mxu0
        %v1085 = vadd.f32 %v783, %v1084
        %v1086 = vpop.f32.mrf.mxu0
        %v1087 = vadd.f32 %v787, %v1086
        %v1088 = vpop.f32.mrf.mxu0
        %v1089 = vpop.f32.mrf.mxu0
        %1090 = vdwg.mxu0
        %1091 = vmatprep.subr.bf16.mxu0 %v999
        %1092 = vmatpush1.bf16.msra.mxu0 %v998
        %1093 = vmatprep.subr.bf16.mxu0 %v993
        %1094 = vmatpush1.bf16.msra.mxu0 %v992
        %1095 = vmatprep.subr.bf16.mxu0 %v987
        %1096 = vmatpush1.bf16.msra.mxu0 %v986
        %1097 = vmatprep.subr.bf16.mxu0 %v981
        %1098 = vmatpush1.bf16.msra.mxu0 %v980
        %1099 = vmatprep.subr.bf16.mxu0 %v975
        %1100 = vmatpush1.bf16.msra.mxu0 %v974
        %1101 = vmatprep.subr.bf16.mxu0 %v969
        %1102 = vmatpush1.bf16.msra.mxu0 %v968
        %1103 = vmatprep.subr.bf16.mxu0 %v963
        %1104 = vmatpush1.bf16.msra.mxu0 %v962
        %1105 = vmatprep.subr.bf16.mxu0 %v957
        %1106 = vmatpush1.bf16.msra.mxu0 %v956
        %1107 = vmatprep.subr.bf16.mxu0 0
        %1108 = vmatpush2.bf16.msra.mxu0 0
        %1109 = vmatprep.subr.bf16.mxu0 0
        %1110 = vmatpush2.bf16.msra.mxu0 0
        %1111 = vmatprep.subr.bf16.mxu0 0
        %1112 = vmatpush2.bf16.msra.mxu0 0
        %1113 = vmatprep.subr.bf16.mxu0 0
        %1114 = vmatpush2.bf16.msra.mxu0 0
        %1115 = vmatprep.subr.bf16.mxu0 0
        %1116 = vmatpush2.bf16.msra.mxu0 0
        %1117 = vmatprep.subr.bf16.mxu0 0
        %1118 = vmatpush2.bf16.msra.mxu0 0
        %1119 = vmatprep.subr.bf16.mxu0 0
        %1120 = vmatpush2.bf16.msra.mxu0 0
        %1121 = vmatprep.subr.bf16.mxu0 0
        %1122 = vmatpush2.bf16.msra.mxu0 0
        %1123 = vmatprep.mubr.bf16.mxu0 0
        %1124 = vmatmul.mubr.bf16.gmra.mxu0 %v729
        %v1125 = vpop.f32.mrf.mxu0
        %v1126 = vadd.f32 %v791, %v1125
        %v1127 = vpop.f32.mrf.mxu0
        %v1128 = vadd.f32 %v795, %v1127
        %v1129 = vpop.f32.mrf.mxu0
        %v1130 = vpop.f32.mrf.mxu0
        %1131 = vdwg.mxu0
        %1132 = vmatprep.subr.bf16.mxu0 %v1001
        %1133 = vmatpush1.bf16.msra.mxu0 %v1000
        %1134 = vmatprep.subr.bf16.mxu0 %v995
        %1135 = vmatpush1.bf16.msra.mxu0 %v994
        %1136 = vmatprep.subr.bf16.mxu0 %v989
        %1137 = vmatpush1.bf16.msra.mxu0 %v988
        %1138 = vmatprep.subr.bf16.mxu0 %v983
        %1139 = vmatpush1.bf16.msra.mxu0 %v982
        %1140 = vmatprep.subr.bf16.mxu0 %v977
        %1141 = vmatpush1.bf16.msra.mxu0 %v976
        %1142 = vmatprep.subr.bf16.mxu0 %v971
        %1143 = vmatpush1.bf16.msra.mxu0 %v970
        %1144 = vmatprep.subr.bf16.mxu0 %v965
        %1145 = vmatpush1.bf16.msra.mxu0 %v964
        %1146 = vmatprep.subr.bf16.mxu0 %v959
        %1147 = vmatpush1.bf16.msra.mxu0 %v958
        %1148 = vmatprep.subr.bf16.mxu0 0
        %1149 = vmatpush2.bf16.msra.mxu0 0
        %1150 = vmatprep.subr.bf16.mxu0 0
        %1151 = vmatpush2.bf16.msra.mxu0 0
        %1152 = vmatprep.subr.bf16.mxu0 0
        %1153 = vmatpush2.bf16.msra.mxu0 0
        %1154 = vmatprep.subr.bf16.mxu0 0
        %1155 = vmatpush2.bf16.msra.mxu0 0
        %1156 = vmatprep.subr.bf16.mxu0 0
        %1157 = vmatpush2.bf16.msra.mxu0 0
        %1158 = vmatprep.subr.bf16.mxu0 0
        %1159 = vmatpush2.bf16.msra.mxu0 0
        %1160 = vmatprep.subr.bf16.mxu0 0
        %1161 = vmatpush2.bf16.msra.mxu0 0
        %1162 = vmatprep.subr.bf16.mxu0 0
        %1163 = vmatpush2.bf16.msra.mxu0 0
        %1164 = vmatprep.mubr.bf16.mxu0 0
        %1165 = vmatmul.mubr.bf16.gmra.mxu0 %v729
        %v1166 = vpop.f32.mrf.mxu0
        %v1167 = vadd.f32 %v799, %v1166
        %v1168 = vpop.f32.mrf.mxu0
        %v1169 = vadd.f32 %v803, %v1168
        %v1170 = vpop.f32.mrf.mxu0
        %v1171 = vpop.f32.mrf.mxu0
        %1172 = vdwg.mxu0
        %v1173 = vpack.c.bf16 %v1085, %v1085
        %v1174 = vpack.c.bf16 %v1087, %v1087
        %v1175 = vpack.c.bf16 %v1126, %v1126
        %v1176 = vpack.c.bf16 %v1128, %v1128
        %v1177 = vpack.c.bf16 %v1167, %v1167
        %v1178 = vpack.c.bf16 %v1169, %v1169
        %v1180 = vlaneseq
        %v1181 = vshrl.u32 %v1180, 7
        %v1182 = vsub.s32 0, %v1181
        %v1183 = vrot.slane %v728, %v1182
        %1185 = vmatprep.subr.bf16.mxu0 0
        %1186 = vmatpush1.bf16.xpose.msra.mxu0 0
        %1187 = vmatprep.subr.bf16.mxu0 0
        %1188 = vmatpush1.bf16.xpose.msra.mxu0 0
        %1189 = vmatprep.subr.bf16.mxu0 0
        %1190 = vmatpush1.bf16.xpose.msra.mxu0 0
        %1191 = vmatprep.subr.bf16.mxu0 0
        %1192 = vmatpush1.bf16.xpose.msra.mxu0 0
        %1193 = vmatprep.subr.bf16.mxu0 0
        %1194 = vmatpush1.bf16.xpose.msra.mxu0 0
        %1195 = vmatprep.subr.bf16.mxu0 0
        %1196 = vmatpush1.bf16.xpose.msra.mxu0 0
        %1197 = vmatprep.subr.bf16.mxu0 0
        %1198 = vmatpush1.bf16.xpose.msra.mxu0 0
        %1199 = vmatprep.subr.bf16.mxu0 0
        %1200 = vmatpush1.bf16.xpose.msra.mxu0 %v1175
        %1201 = vmatprep.subr.bf16.mxu0 0
        %1202 = vmatpush2.bf16.xpose.msra.mxu0 0
        %1203 = vmatprep.subr.bf16.mxu0 0
        %1204 = vmatpush2.bf16.xpose.msra.mxu0 0
        %1205 = vmatprep.subr.bf16.mxu0 0
        %1206 = vmatpush2.bf16.xpose.msra.mxu0 0
        %1207 = vmatprep.subr.bf16.mxu0 0
        %1208 = vmatpush2.bf16.xpose.msra.mxu0 0
        %1209 = vmatprep.subr.bf16.mxu0 0
        %1210 = vmatpush2.bf16.xpose.msra.mxu0 0
        %1211 = vmatprep.subr.bf16.mxu0 0
        %1212 = vmatpush2.bf16.xpose.msra.mxu0 0
        %1213 = vmatprep.subr.bf16.mxu0 0
        %1214 = vmatpush2.bf16.xpose.msra.mxu0 0
        %1215 = vmatprep.subr.bf16.mxu0 0
        %1216 = vmatpush2.bf16.xpose.msra.mxu0 0
        %1217 = vmatprep.mubr.bf16.mxu0 0
        %1218 = vmatmul.mubr.bf16.gmra.mxu0 %v1173
        %v1219 = vpop.f32.mrf.mxu0
        %v1220 = vadd.f32 %v1183, %v1219
        %v1221 = vpop.f32.mrf.mxu0
        %v1222 = vpop.f32.mrf.mxu0
        %v1223 = vpop.f32.mrf.mxu0
        %1224 = vdwg.mxu0
        %vm1225 = vcmask 64512
        %v1226 = vsel %vm1225, %v1220, -inf
        %1227 = vmax.xlane.f32.xlu0 %v1226
        %v1228 = vpop.xlane.xlu0 %1227
        %v1229 = vsub.f32 %v1220, %v1228
        %v1230 = vmul.f32 %v1229, 1.442695
        %v1231 = vpow.pop %v1230
        %v1232 = vsel %vm1225, %v1231, 0.0
        %1233 = vadd.xlane.f32.xlu0 %v1232
        %v1234 = vpop.xlane.xlu0 %1233
        %v1235 = vrcp.pop %v1234
        %v1236 = vmul.f32 %v1231, %v1235
        %v1237 = vpack.c.bf16 %v1236, %v1236
        %v1239 = vsel %vm1225, %v1237, 0
        %vm1241 = vcmask 1043456
        %v1243 = vsel %vm1241, %v1177, 0
        %1245 = vmatprep.subr.bf16.mxu0 0
        %1246 = vmatpush1.bf16.msra.mxu0 0
        %1247 = vmatprep.subr.bf16.mxu0 0
        %1248 = vmatpush1.bf16.msra.mxu0 0
        %1249 = vmatprep.subr.bf16.mxu0 0
        %1250 = vmatpush1.bf16.msra.mxu0 0
        %1251 = vmatprep.subr.bf16.mxu0 0
        %1252 = vmatpush1.bf16.msra.mxu0 0
        %1253 = vmatprep.subr.bf16.mxu0 0
        %1254 = vmatpush1.bf16.msra.mxu0 0
        %1255 = vmatprep.subr.bf16.mxu0 0
        %1256 = vmatpush1.bf16.msra.mxu0 0
        %1257 = vmatprep.subr.bf16.mxu0 0
        %1258 = vmatpush1.bf16.msra.mxu0 0
        %1259 = vmatprep.subr.bf16.mxu0 0
        %1260 = vmatpush1.bf16.msra.mxu0 %v1243
        %1261 = vmatprep.subr.bf16.mxu0 0
        %1262 = vmatpush2.bf16.msra.mxu0 0
        %1263 = vmatprep.subr.bf16.mxu0 0
        %1264 = vmatpush2.bf16.msra.mxu0 0
        %1265 = vmatprep.subr.bf16.mxu0 0
        %1266 = vmatpush2.bf16.msra.mxu0 0
        %1267 = vmatprep.subr.bf16.mxu0 0
        %1268 = vmatpush2.bf16.msra.mxu0 0
        %1269 = vmatprep.subr.bf16.mxu0 0
        %1270 = vmatpush2.bf16.msra.mxu0 0
        %1271 = vmatprep.subr.bf16.mxu0 0
        %1272 = vmatpush2.bf16.msra.mxu0 0
        %1273 = vmatprep.subr.bf16.mxu0 0
        %1274 = vmatpush2.bf16.msra.mxu0 0
        %1275 = vmatprep.subr.bf16.mxu0 0
        %1276 = vmatpush2.bf16.msra.mxu0 0
        %1277 = vmatprep.mubr.bf16.mxu0 0
        %1278 = vmatmul.mubr.bf16.gmra.mxu0 %v1239
        %v1279 = vpop.f32.mrf.mxu0
        %v1280 = vadd.f32 0.0, %v1279
        %v1281 = vpop.f32.mrf.mxu0
        %v1282 = vpop.f32.mrf.mxu0
        %v1283 = vpop.f32.mrf.mxu0
        %1284 = vdwg.mxu0
        %1285 = vmatprep.subr.bf16.mxu0 0
        %1286 = vmatpush1.bf16.xpose.msra.mxu0 0
        %1287 = vmatprep.subr.bf16.mxu0 0
        %1288 = vmatpush1.bf16.xpose.msra.mxu0 0
        %1289 = vmatprep.subr.bf16.mxu0 0
        %1290 = vmatpush1.bf16.xpose.msra.mxu0 0
        %1291 = vmatprep.subr.bf16.mxu0 0
        %1292 = vmatpush1.bf16.xpose.msra.mxu0 0
        %1293 = vmatprep.subr.bf16.mxu0 0
        %1294 = vmatpush1.bf16.xpose.msra.mxu0 0
        %1295 = vmatprep.subr.bf16.mxu0 0
        %1296 = vmatpush1.bf16.xpose.msra.mxu0 0
        %1297 = vmatprep.subr.bf16.mxu0 0
        %1298 = vmatpush1.bf16.xpose.msra.mxu0 0
        %1299 = vmatprep.subr.bf16.mxu0 0
        %1300 = vmatpush1.bf16.xpose.msra.mxu0 %v1176
        %1301 = vmatprep.subr.bf16.mxu0 0
        %1302 = vmatpush2.bf16.xpose.msra.mxu0 0
        %1303 = vmatprep.subr.bf16.mxu0 0
        %1304 = vmatpush2.bf16.xpose.msra.mxu0 0
        %1305 = vmatprep.subr.bf16.mxu0 0
        %1306 = vmatpush2.bf16.xpose.msra.mxu0 0
        %1307 = vmatprep.subr.bf16.mxu0 0
        %1308 = vmatpush2.bf16.xpose.msra.mxu0 0
        %1309 = vmatprep.subr.bf16.mxu0 0
        %1310 = vmatpush2.bf16.xpose.msra.mxu0 0
        %1311 = vmatprep.subr.bf16.mxu0 0
        %1312 = vmatpush2.bf16.xpose.msra.mxu0 0
        %1313 = vmatprep.subr.bf16.mxu0 0
        %1314 = vmatpush2.bf16.xpose.msra.mxu0 0
        %1315 = vmatprep.subr.bf16.mxu0 0
        %1316 = vmatpush2.bf16.xpose.msra.mxu0 0
        %1317 = vmatprep.mubr.bf16.mxu0 0
        %1318 = vmatmul.mubr.bf16.gmra.mxu0 %v1174
        %v1319 = vpop.f32.mrf.mxu0
        %v1320 = vadd.f32 %v1183, %v1319
        %v1321 = vpop.f32.mrf.mxu0
        %v1322 = vpop.f32.mrf.mxu0
        %v1323 = vpop.f32.mrf.mxu0
        %1324 = vdwg.mxu0
        %v1325 = vsel %vm1225, %v1320, -inf
        %1326 = vmax.xlane.f32.xlu0 %v1325
        %v1327 = vpop.xlane.xlu0 %1326
        %v1328 = vsub.f32 %v1320, %v1327
        %v1329 = vmul.f32 %v1328, 1.442695
        %v1330 = vpow.pop %v1329
        %v1331 = vsel %vm1225, %v1330, 0.0
        %1332 = vadd.xlane.f32.xlu0 %v1331
        %v1333 = vpop.xlane.xlu0 %1332
        %v1334 = vrcp.pop %v1333
        %v1335 = vmul.f32 %v1330, %v1334
        %v1336 = vpack.c.bf16 %v1335, %v1335
        %v1338 = vsel %vm1225, %v1336, 0
        %v1341 = vsel %vm1241, %v1178, 0
        %1343 = vmatprep.subr.bf16.mxu0 0
        %1344 = vmatpush1.bf16.msra.mxu0 0
        %1345 = vmatprep.subr.bf16.mxu0 0
        %1346 = vmatpush1.bf16.msra.mxu0 0
        %1347 = vmatprep.subr.bf16.mxu0 0
        %1348 = vmatpush1.bf16.msra.mxu0 0
        %1349 = vmatprep.subr.bf16.mxu0 0
        %1350 = vmatpush1.bf16.msra.mxu0 0
        %1351 = vmatprep.subr.bf16.mxu0 0
        %1352 = vmatpush1.bf16.msra.mxu0 0
        %1353 = vmatprep.subr.bf16.mxu0 0
        %1354 = vmatpush1.bf16.msra.mxu0 0
        %1355 = vmatprep.subr.bf16.mxu0 0
        %1356 = vmatpush1.bf16.msra.mxu0 0
        %1357 = vmatprep.subr.bf16.mxu0 0
        %1358 = vmatpush1.bf16.msra.mxu0 %v1341
        %1359 = vmatprep.subr.bf16.mxu0 0
        %1360 = vmatpush2.bf16.msra.mxu0 0
        %1361 = vmatprep.subr.bf16.mxu0 0
        %1362 = vmatpush2.bf16.msra.mxu0 0
        %1363 = vmatprep.subr.bf16.mxu0 0
        %1364 = vmatpush2.bf16.msra.mxu0 0
        %1365 = vmatprep.subr.bf16.mxu0 0
        %1366 = vmatpush2.bf16.msra.mxu0 0
        %1367 = vmatprep.subr.bf16.mxu0 0
        %1368 = vmatpush2.bf16.msra.mxu0 0
        %1369 = vmatprep.subr.bf16.mxu0 0
        %1370 = vmatpush2.bf16.msra.mxu0 0
        %1371 = vmatprep.subr.bf16.mxu0 0
        %1372 = vmatpush2.bf16.msra.mxu0 0
        %1373 = vmatprep.subr.bf16.mxu0 0
        %1374 = vmatpush2.bf16.msra.mxu0 0
        %1375 = vmatprep.mubr.bf16.mxu0 0
        %1376 = vmatmul.mubr.bf16.gmra.mxu0 %v1338
        %v1377 = vpop.f32.mrf.mxu0
        %v1378 = vadd.f32 0.0, %v1377
        %v1379 = vpop.f32.mrf.mxu0
        %v1380 = vpop.f32.mrf.mxu0
        %v1381 = vpop.f32.mrf.mxu0
        %1382 = vdwg.mxu0
        %v1383 = vpack.c.bf16 %v1280, %v1280
        %v1384 = vpack.c.bf16 %v1378, %v1378
        %v1385 = vld [vmem:[#allocation4] sm:$0xf]
        %v1386 = vld [vmem:[#allocation4 + $0x4] sm:$0xf]
        %v1387 = vld [vmem:[#allocation4 + $0x8] sm:$0xf]
        %v1388 = vld [vmem:[#allocation4 + $0xc] sm:$0xf]
        %v1389 = vld [vmem:[#allocation4 + $0x10] sm:$0xf]
        %v1390 = vld [vmem:[#allocation4 + $0x14] sm:$0xf]
        %v1391 = vld [vmem:[#allocation4 + $0x18] sm:$0xf]
        %v1392 = vld [vmem:[#allocation4 + $0x1c] sm:$0xf]
        %v1393 = vld [vmem:[#allocation4 + $0x20] sm:$0xf]
        %v1394 = vld [vmem:[#allocation4 + $0x24] sm:$0xf]
        %v1395 = vld [vmem:[#allocation4 + $0x28] sm:$0xf]
        %v1396 = vld [vmem:[#allocation4 + $0x2c] sm:$0xf]
        %v1397 = vld [vmem:[#allocation4 + $0x30] sm:$0xf]
        %v1398 = vld [vmem:[#allocation4 + $0x34] sm:$0xf]
        %v1399 = vld [vmem:[#allocation4 + $0x38] sm:$0xf]
        %v1400 = vld [vmem:[#allocation4 + $0x3c] sm:$0xf]
        %v1401 = vld [vmem:[#allocation4 + $0x40] sm:$0xf]
        %v1402 = vld [vmem:[#allocation4 + $0x44] sm:$0xf]
        %v1403 = vld [vmem:[#allocation4 + $0x48] sm:$0xf]
        %v1404 = vld [vmem:[#allocation4 + $0x4c] sm:$0xf]
        %v1405 = vld [vmem:[#allocation4 + $0x50] sm:$0xf]
        %v1406 = vld [vmem:[#allocation4 + $0x54] sm:$0xf]
        %v1407 = vld [vmem:[#allocation4 + $0x58] sm:$0xf]
        %v1408 = vld [vmem:[#allocation4 + $0x5c] sm:$0xf]
        %v1409 = vld [vmem:[#allocation4 + $0x60] sm:$0xf]
        %v1410 = vld [vmem:[#allocation4 + $0x64] sm:$0xf]
        %v1411 = vld [vmem:[#allocation4 + $0x68] sm:$0xf]
        %v1412 = vld [vmem:[#allocation4 + $0x6c] sm:$0xf]
        %v1413 = vld [vmem:[#allocation4 + $0x70] sm:$0xf]
        %v1414 = vld [vmem:[#allocation4 + $0x74] sm:$0xf]
        %v1415 = vld [vmem:[#allocation4 + $0x78] sm:$0xf]
        %v1416 = vld [vmem:[#allocation4 + $0x7c] sm:$0xf]
        %v1417 = vld [vmem:[%s7] sm:$0x1]
        %v1419 = vlaneseq
        %v1420 = vshrl.u32 %v1419, 7
        %v1421 = vsub.s32 0, %v1420
        %v1422 = vrot.slane %v1417, %v1421
        %v1456 = vunpack.c.l.b16 %v1385
        %v1457 = vunpack.c.l.b16 %v1386
        %v1458 = vunpack.c.l.b16 %v1387
        %v1459 = vunpack.c.l.b16 %v1388
        %v1460 = vunpack.c.l.b16 %v1389
        %v1461 = vunpack.c.l.b16 %v1390
        %v1462 = vunpack.c.l.b16 %v1391
        %v1463 = vunpack.c.l.b16 %v1392
        %v1464 = vunpack.c.l.b16 %v1393
        %v1465 = vunpack.c.l.b16 %v1394
        %v1466 = vunpack.c.l.b16 %v1395
        %v1467 = vunpack.c.l.b16 %v1396
        %v1468 = vunpack.c.l.b16 %v1397
        %v1469 = vunpack.c.l.b16 %v1398
        %v1470 = vunpack.c.l.b16 %v1399
        %v1471 = vunpack.c.l.b16 %v1400
        %v1472 = vunpack.c.l.b16 %v1401
        %v1473 = vunpack.c.l.b16 %v1402
        %v1474 = vunpack.c.l.b16 %v1403
        %v1475 = vunpack.c.l.b16 %v1404
        %v1476 = vunpack.c.l.b16 %v1405
        %v1477 = vunpack.c.l.b16 %v1406
        %v1478 = vunpack.c.l.b16 %v1407
        %v1479 = vunpack.c.l.b16 %v1408
        %v1480 = vunpack.c.l.b16 %v1409
        %v1481 = vunpack.c.l.b16 %v1410
        %v1482 = vunpack.c.l.b16 %v1411
        %v1483 = vunpack.c.l.b16 %v1412
        %v1484 = vunpack.c.l.b16 %v1413
        %v1485 = vunpack.c.l.b16 %v1414
        %v1486 = vunpack.c.l.b16 %v1415
        %v1487 = vunpack.c.l.b16 %v1416
        %v1488 = vpack.c.b16 %v1457, %v1456
        %v1489 = vpack.c.b16 %v1459, %v1458
        %v1490 = vpack.c.b16 %v1461, %v1460
        %v1491 = vpack.c.b16 %v1463, %v1462
        %v1492 = vpack.c.b16 %v1465, %v1464
        %v1493 = vpack.c.b16 %v1467, %v1466
        %v1494 = vpack.c.b16 %v1469, %v1468
        %v1495 = vpack.c.b16 %v1471, %v1470
        %v1496 = vpack.c.b16 %v1473, %v1472
        %v1497 = vpack.c.b16 %v1475, %v1474
        %v1498 = vpack.c.b16 %v1477, %v1476
        %v1499 = vpack.c.b16 %v1479, %v1478
        %v1500 = vpack.c.b16 %v1481, %v1480
        %v1501 = vpack.c.b16 %v1483, %v1482
        %v1502 = vpack.c.b16 %v1485, %v1484
        %v1503 = vpack.c.b16 %v1487, %v1486
        %1520 = vmatprep.subr.bf16.mxu0 0
        %1521 = vmatpush1.bf16.msra.mxu0 %v1495
        %1522 = vmatprep.subr.bf16.mxu0 0
        %1523 = vmatpush1.bf16.msra.mxu0 %v1494
        %1524 = vmatprep.subr.bf16.mxu0 0
        %1525 = vmatpush1.bf16.msra.mxu0 %v1493
        %1526 = vmatprep.subr.bf16.mxu0 0
        %1527 = vmatpush1.bf16.msra.mxu0 %v1492
        %1528 = vmatprep.subr.bf16.mxu0 0
        %1529 = vmatpush1.bf16.msra.mxu0 %v1491
        %1530 = vmatprep.subr.bf16.mxu0 0
        %1531 = vmatpush1.bf16.msra.mxu0 %v1490
        %1532 = vmatprep.subr.bf16.mxu0 0
        %1533 = vmatpush1.bf16.msra.mxu0 %v1489
        %1534 = vmatprep.subr.bf16.mxu0 0
        %1535 = vmatpush1.bf16.msra.mxu0 %v1488
        %1536 = vmatprep.subr.bf16.mxu0 0
        %1537 = vmatpush2.bf16.msra.mxu0 %v1503
        %1538 = vmatprep.subr.bf16.mxu0 0
        %1539 = vmatpush2.bf16.msra.mxu0 %v1502
        %1540 = vmatprep.subr.bf16.mxu0 0
        %1541 = vmatpush2.bf16.msra.mxu0 %v1501
        %1542 = vmatprep.subr.bf16.mxu0 0
        %1543 = vmatpush2.bf16.msra.mxu0 %v1500
        %1544 = vmatprep.subr.bf16.mxu0 0
        %1545 = vmatpush2.bf16.msra.mxu0 %v1499
        %1546 = vmatprep.subr.bf16.mxu0 0
        %1547 = vmatpush2.bf16.msra.mxu0 %v1498
        %1548 = vmatprep.subr.bf16.mxu0 0
        %1549 = vmatpush2.bf16.msra.mxu0 %v1497
        %1550 = vmatprep.subr.bf16.mxu0 0
        %1551 = vmatpush2.bf16.msra.mxu0 %v1496
        %1552 = vmatprep.mubr.bf16.mxu0 %v1384
        %1553 = vmatmul.mubr.bf16.gmra.mxu0 %v1383
        %v1554 = vpop.f32.mrf.mxu0
        %v1555 = vadd.f32 %v1422, %v1554
        %v1556 = vpop.f32.mrf.mxu0
        %v1557 = vpop.f32.mrf.mxu0
        %v1558 = vpop.f32.mrf.mxu0
        %1559 = vdwg.mxu0
        %v1560 = vadd.f32 %v1555, %v727
        %v1561 = vld [vmem:[%s8] sm:$0x1]
        %v1562 = vld [vmem:[%s9] sm:$0x1]
        %1563 = vadd.xlane.f32.xlu0 %v1560
        %v1564 = vpop.xlane.xlu0 %1563
        %v1565 = vmul.f32 %v1564, %v704
        %v1566 = vsub.f32 %v1560, %v1565
        %v1567 = vmul.f32 %v1566, %v1566
        %1568 = vadd.xlane.f32.xlu0 %v1567
        %v1569 = vpop.xlane.xlu0 %1568
        %v1570 = vmul.f32 %v1569, %v704
        %v1571 = vadd.f32 %v1570, 1e-12
        %v1572 = vrsqrt.pop %v1571
        %v1573 = vmul.f32 %v1566, %v1572
        %v1575 = vlaneseq
        %v1576 = vshrl.u32 %v1575, 7
        %v1577 = vsub.s32 0, %v1576
        %v1578 = vrot.slane %v1561, %v1577
        %v1580 = vmul.f32 %v1573, %v1578
        %v1582 = vlaneseq
        %v1583 = vshrl.u32 %v1582, 7
        %v1584 = vsub.s32 0, %v1583
        %v1585 = vrot.slane %v1562, %v1584
        %v1587 = vadd.f32 %v1580, %v1585
        %v1588 = vpack.c.bf16 %v1587, %v1587
        %v1589 = vld [vmem:[#allocation6] sm:$0xff]
        %v1590 = vld [vmem:[#allocation6 + $0x8] sm:$0xff]
        %v1591 = vld [vmem:[#allocation6 + $0x10] sm:$0xff]
        %v1592 = vld [vmem:[#allocation6 + $0x18] sm:$0xff]
        %v1593 = vld [vmem:[#allocation6 + $0x20] sm:$0xff]
        %v1594 = vld [vmem:[#allocation6 + $0x28] sm:$0xff]
        %v1595 = vld [vmem:[#allocation6 + $0x30] sm:$0xff]
        %v1596 = vld [vmem:[#allocation6 + $0x38] sm:$0xff]
        %v1597 = vld [vmem:[#allocation6 + $0x40] sm:$0xff]
        %v1598 = vld [vmem:[#allocation6 + $0x48] sm:$0xff]
        %v1599 = vld [vmem:[#allocation6 + $0x50] sm:$0xff]
        %v1600 = vld [vmem:[#allocation6 + $0x58] sm:$0xff]
        %v1601 = vld [vmem:[#allocation6 + $0x60] sm:$0xff]
        %v1602 = vld [vmem:[#allocation6 + $0x68] sm:$0xff]
        %v1603 = vld [vmem:[#allocation6 + $0x70] sm:$0xff]
        %v1604 = vld [vmem:[#allocation6 + $0x78] sm:$0xff]
        %v1605 = vld [vmem:[%s11] sm:$0x3]
        %v1607 = vlaneseq
        %v1608 = vshrl.u32 %v1607, 7
        %v1609 = vsub.s32 0, %v1608
        %v1610 = vrot.slane %v1605, %v1609
        %v1611 = vlaneseq
        %v1612 = vshrl.u32 %v1611, 7
        %v1613 = vsub.s32 1, %v1612
        %v1614 = vrot.slane %v1605, %v1613
        %v1633 = vunpack.c.l.b16 %v1589
        %v1634 = vunpack.c.h.b16 %v1589
        %v1635 = vunpack.c.l.b16 %v1590
        %v1636 = vunpack.c.h.b16 %v1590
        %v1637 = vunpack.c.l.b16 %v1591
        %v1638 = vunpack.c.h.b16 %v1591
        %v1639 = vunpack.c.l.b16 %v1592
        %v1640 = vunpack.c.h.b16 %v1592
        %v1641 = vunpack.c.l.b16 %v1593
        %v1642 = vunpack.c.h.b16 %v1593
        %v1643 = vunpack.c.l.b16 %v1594
        %v1644 = vunpack.c.h.b16 %v1594
        %v1645 = vunpack.c.l.b16 %v1595
        %v1646 = vunpack.c.h.b16 %v1595
        %v1647 = vunpack.c.l.b16 %v1596
        %v1648 = vunpack.c.h.b16 %v1596
        %v1649 = vunpack.c.l.b16 %v1597
        %v1650 = vunpack.c.h.b16 %v1597
        %v1651 = vunpack.c.l.b16 %v1598
        %v1652 = vunpack.c.h.b16 %v1598
        %v1653 = vunpack.c.l.b16 %v1599
        %v1654 = vunpack.c.h.b16 %v1599
        %v1655 = vunpack.c.l.b16 %v1600
        %v1656 = vunpack.c.h.b16 %v1600
        %v1657 = vunpack.c.l.b16 %v1601
        %v1658 = vunpack.c.h.b16 %v1601
        %v1659 = vunpack.c.l.b16 %v1602
        %v1660 = vunpack.c.h.b16 %v1602
        %v1661 = vunpack.c.l.b16 %v1603
        %v1662 = vunpack.c.h.b16 %v1603
        %v1663 = vunpack.c.l.b16 %v1604
        %v1664 = vunpack.c.h.b16 %v1604
        %v1665 = vpack.c.b16 %v1635, %v1633
        %v1666 = vpack.c.b16 %v1636, %v1634
        %v1667 = vpack.c.b16 %v1639, %v1637
        %v1668 = vpack.c.b16 %v1640, %v1638
        %v1669 = vpack.c.b16 %v1643, %v1641
        %v1670 = vpack.c.b16 %v1644, %v1642
        %v1671 = vpack.c.b16 %v1647, %v1645
        %v1672 = vpack.c.b16 %v1648, %v1646
        %v1673 = vpack.c.b16 %v1651, %v1649
        %v1674 = vpack.c.b16 %v1652, %v1650
        %v1675 = vpack.c.b16 %v1655, %v1653
        %v1676 = vpack.c.b16 %v1656, %v1654
        %v1677 = vpack.c.b16 %v1659, %v1657
        %v1678 = vpack.c.b16 %v1660, %v1658
        %v1679 = vpack.c.b16 %v1663, %v1661
        %v1680 = vpack.c.b16 %v1664, %v1662
        %1697 = vmatprep.subr.bf16.mxu0 %v1680
        %1698 = vmatpush1.bf16.msra.mxu0 %v1679
        %1699 = vmatprep.subr.bf16.mxu0 %v1678
        %1700 = vmatpush1.bf16.msra.mxu0 %v1677
        %1701 = vmatprep.subr.bf16.mxu0 %v1676
        %1702 = vmatpush1.bf16.msra.mxu0 %v1675
        %1703 = vmatprep.subr.bf16.mxu0 %v1674
        %1704 = vmatpush1.bf16.msra.mxu0 %v1673
        %1705 = vmatprep.subr.bf16.mxu0 %v1672
        %1706 = vmatpush1.bf16.msra.mxu0 %v1671
        %1707 = vmatprep.subr.bf16.mxu0 %v1670
        %1708 = vmatpush1.bf16.msra.mxu0 %v1669
        %1709 = vmatprep.subr.bf16.mxu0 %v1668
        %1710 = vmatpush1.bf16.msra.mxu0 %v1667
        %1711 = vmatprep.subr.bf16.mxu0 %v1666
        %1712 = vmatpush1.bf16.msra.mxu0 %v1665
        %1713 = vmatprep.subr.bf16.mxu0 0
        %1714 = vmatpush2.bf16.msra.mxu0 0
        %1715 = vmatprep.subr.bf16.mxu0 0
        %1716 = vmatpush2.bf16.msra.mxu0 0
        %1717 = vmatprep.subr.bf16.mxu0 0
        %1718 = vmatpush2.bf16.msra.mxu0 0
        %1719 = vmatprep.subr.bf16.mxu0 0
        %1720 = vmatpush2.bf16.msra.mxu0 0
        %1721 = vmatprep.subr.bf16.mxu0 0
        %1722 = vmatpush2.bf16.msra.mxu0 0
        %1723 = vmatprep.subr.bf16.mxu0 0
        %1724 = vmatpush2.bf16.msra.mxu0 0
        %1725 = vmatprep.subr.bf16.mxu0 0
        %1726 = vmatpush2.bf16.msra.mxu0 0
        %1727 = vmatprep.subr.bf16.mxu0 0
        %1728 = vmatpush2.bf16.msra.mxu0 0
        %1729 = vmatprep.mubr.bf16.mxu0 0
        %1730 = vmatmul.mubr.bf16.gmra.mxu0 %v1588
        %v1731 = vpop.f32.mrf.mxu0
        %v1732 = vadd.f32 %v1610, %v1731
        %v1733 = vpop.f32.mrf.mxu0
        %v1734 = vadd.f32 %v1614, %v1733
        %v1735 = vpop.f32.mrf.mxu0
        %v1736 = vpop.f32.mrf.mxu0
        %1737 = vdwg.mxu0
        %v1738 = vmul.f32 %v1732, 0.5
        %v1739 = vmul.f32 %v1734, 0.5
        %v1740 = vmul.f32 %v1732, 0.044715
        %v1741 = vmul.f32 %v1734, 0.044715
        %v1742 = vmul.f32 %v1740, %v1732
        %v1743 = vmul.f32 %v1741, %v1734
        %v1744 = vmul.f32 %v1742, %v1732
        %v1745 = vmul.f32 %v1743, %v1734
        %v1746 = vadd.f32 %v1732, %v1744
        %v1747 = vadd.f32 %v1734, %v1745
        %v1748 = vmul.f32 %v1746, 0.7978846
        %v1749 = vmul.f32 %v1747, 0.7978846
        %v1750 = vtanh.pop %v1748
        %v1751 = vtanh.pop %v1749
        %v1752 = vadd.f32 %v1750, 1.0
        %v1753 = vadd.f32 %v1751, 1.0
        %v1754 = vmul.f32 %v1738, %v1752
        %v1755 = vmul.f32 %v1739, %v1753
        %v1756 = vpack.c.bf16 %v1754, %v1754
        %v1757 = vpack.c.bf16 %v1755, %v1755
        %v1758 = vld [vmem:[#allocation7] sm:$0xf]
        %v1759 = vld [vmem:[#allocation7 + $0x4] sm:$0xf]
        %v1760 = vld [vmem:[#allocation7 + $0x8] sm:$0xf]
        %v1761 = vld [vmem:[#allocation7 + $0xc] sm:$0xf]
        %v1762 = vld [vmem:[#allocation7 + $0x10] sm:$0xf]
        %v1763 = vld [vmem:[#allocation7 + $0x14] sm:$0xf]
        %v1764 = vld [vmem:[#allocation7 + $0x18] sm:$0xf]
        %v1765 = vld [vmem:[#allocation7 + $0x1c] sm:$0xf]
        %v1766 = vld [vmem:[#allocation7 + $0x20] sm:$0xf]
        %v1767 = vld [vmem:[#allocation7 + $0x24] sm:$0xf]
        %v1768 = vld [vmem:[#allocation7 + $0x28] sm:$0xf]
        %v1769 = vld [vmem:[#allocation7 + $0x2c] sm:$0xf]
        %v1770 = vld [vmem:[#allocation7 + $0x30] sm:$0xf]
        %v1771 = vld [vmem:[#allocation7 + $0x34] sm:$0xf]
        %v1772 = vld [vmem:[#allocation7 + $0x38] sm:$0xf]
        %v1773 = vld [vmem:[#allocation7 + $0x3c] sm:$0xf]
        %v1774 = vld [vmem:[#allocation7 + $0x40] sm:$0xf]
        %v1775 = vld [vmem:[#allocation7 + $0x44] sm:$0xf]
        %v1776 = vld [vmem:[#allocation7 + $0x48] sm:$0xf]
        %v1777 = vld [vmem:[#allocation7 + $0x4c] sm:$0xf]
        %v1778 = vld [vmem:[#allocation7 + $0x50] sm:$0xf]
        %v1779 = vld [vmem:[#allocation7 + $0x54] sm:$0xf]
        %v1780 = vld [vmem:[#allocation7 + $0x58] sm:$0xf]
        %v1781 = vld [vmem:[#allocation7 + $0x5c] sm:$0xf]
        %v1782 = vld [vmem:[#allocation7 + $0x60] sm:$0xf]
        %v1783 = vld [vmem:[#allocation7 + $0x64] sm:$0xf]
        %v1784 = vld [vmem:[#allocation7 + $0x68] sm:$0xf]
        %v1785 = vld [vmem:[#allocation7 + $0x6c] sm:$0xf]
        %v1786 = vld [vmem:[#allocation7 + $0x70] sm:$0xf]
        %v1787 = vld [vmem:[#allocation7 + $0x74] sm:$0xf]
        %v1788 = vld [vmem:[#allocation7 + $0x78] sm:$0xf]
        %v1789 = vld [vmem:[#allocation7 + $0x7c] sm:$0xf]
        %v1790 = vld [vmem:[%s13] sm:$0x1]
        %v1792 = vlaneseq
        %v1793 = vshrl.u32 %v1792, 7
        %v1794 = vsub.s32 0, %v1793
        %v1795 = vrot.slane %v1790, %v1794
        %v1829 = vunpack.c.l.b16 %v1758
        %v1830 = vunpack.c.l.b16 %v1759
        %v1831 = vunpack.c.l.b16 %v1760
        %v1832 = vunpack.c.l.b16 %v1761
        %v1833 = vunpack.c.l.b16 %v1762
        %v1834 = vunpack.c.l.b16 %v1763
        %v1835 = vunpack.c.l.b16 %v1764
        %v1836 = vunpack.c.l.b16 %v1765
        %v1837 = vunpack.c.l.b16 %v1766
        %v1838 = vunpack.c.l.b16 %v1767
        %v1839 = vunpack.c.l.b16 %v1768
        %v1840 = vunpack.c.l.b16 %v1769
        %v1841 = vunpack.c.l.b16 %v1770
        %v1842 = vunpack.c.l.b16 %v1771
        %v1843 = vunpack.c.l.b16 %v1772
        %v1844 = vunpack.c.l.b16 %v1773
        %v1845 = vunpack.c.l.b16 %v1774
        %v1846 = vunpack.c.l.b16 %v1775
        %v1847 = vunpack.c.l.b16 %v1776
        %v1848 = vunpack.c.l.b16 %v1777
        %v1849 = vunpack.c.l.b16 %v1778
        %v1850 = vunpack.c.l.b16 %v1779
        %v1851 = vunpack.c.l.b16 %v1780
        %v1852 = vunpack.c.l.b16 %v1781
        %v1853 = vunpack.c.l.b16 %v1782
        %v1854 = vunpack.c.l.b16 %v1783
        %v1855 = vunpack.c.l.b16 %v1784
        %v1856 = vunpack.c.l.b16 %v1785
        %v1857 = vunpack.c.l.b16 %v1786
        %v1858 = vunpack.c.l.b16 %v1787
        %v1859 = vunpack.c.l.b16 %v1788
        %v1860 = vunpack.c.l.b16 %v1789
        %v1861 = vpack.c.b16 %v1830, %v1829
        %v1862 = vpack.c.b16 %v1832, %v1831
        %v1863 = vpack.c.b16 %v1834, %v1833
        %v1864 = vpack.c.b16 %v1836, %v1835
        %v1865 = vpack.c.b16 %v1838, %v1837
        %v1866 = vpack.c.b16 %v1840, %v1839
        %v1867 = vpack.c.b16 %v1842, %v1841
        %v1868 = vpack.c.b16 %v1844, %v1843
        %v1869 = vpack.c.b16 %v1846, %v1845
        %v1870 = vpack.c.b16 %v1848, %v1847
        %v1871 = vpack.c.b16 %v1850, %v1849
        %v1872 = vpack.c.b16 %v1852, %v1851
        %v1873 = vpack.c.b16 %v1854, %v1853
        %v1874 = vpack.c.b16 %v1856, %v1855
        %v1875 = vpack.c.b16 %v1858, %v1857
        %v1876 = vpack.c.b16 %v1860, %v1859
        %1893 = vmatprep.subr.bf16.mxu0 0
        %1894 = vmatpush1.bf16.msra.mxu0 %v1868
        %1895 = vmatprep.subr.bf16.mxu0 0
        %1896 = vmatpush1.bf16.msra.mxu0 %v1867
        %1897 = vmatprep.subr.bf16.mxu0 0
        %1898 = vmatpush1.bf16.msra.mxu0 %v1866
        %1899 = vmatprep.subr.bf16.mxu0 0
        %1900 = vmatpush1.bf16.msra.mxu0 %v1865
        %1901 = vmatprep.subr.bf16.mxu0 0
        %1902 = vmatpush1.bf16.msra.mxu0 %v1864
        %1903 = vmatprep.subr.bf16.mxu0 0
        %1904 = vmatpush1.bf16.msra.mxu0 %v1863
        %1905 = vmatprep.subr.bf16.mxu0 0
        %1906 = vmatpush1.bf16.msra.mxu0 %v1862
        %1907 = vmatprep.subr.bf16.mxu0 0
        %1908 = vmatpush1.bf16.msra.mxu0 %v1861
        %1909 = vmatprep.subr.bf16.mxu0 0
        %1910 = vmatpush2.bf16.msra.mxu0 %v1876
        %1911 = vmatprep.subr.bf16.mxu0 0
        %1912 = vmatpush2.bf16.msra.mxu0 %v1875
        %1913 = vmatprep.subr.bf16.mxu0 0
        %1914 = vmatpush2.bf16.msra.mxu0 %v1874
        %1915 = vmatprep.subr.bf16.mxu0 0
        %1916 = vmatpush2.bf16.msra.mxu0 %v1873
        %1917 = vmatprep.subr.bf16.mxu0 0
        %1918 = vmatpush2.bf16.msra.mxu0 %v1872
        %1919 = vmatprep.subr.bf16.mxu0 0
        %1920 = vmatpush2.bf16.msra.mxu0 %v1871
        %1921 = vmatprep.subr.bf16.mxu0 0
        %1922 = vmatpush2.bf16.msra.mxu0 %v1870
        %1923 = vmatprep.subr.bf16.mxu0 0
        %1924 = vmatpush2.bf16.msra.mxu0 %v1869
        %1925 = vmatprep.mubr.bf16.mxu0 %v1757
        %1926 = vmatmul.mubr.bf16.gmra.mxu0 %v1756
        %v1927 = vpop.f32.mrf.mxu0
        %v1928 = vadd.f32 %v1795, %v1927
        %v1929 = vpop.f32.mrf.mxu0
        %v1930 = vpop.f32.mrf.mxu0
        %v1931 = vpop.f32.mrf.mxu0
        %1932 = vdwg.mxu0
        %v1933 = vadd.f32 %v1928, %v1587
        %v1934 = vld [vmem:[%s14] sm:$0x1]
        %v1935 = vld [vmem:[%s15] sm:$0x1]
        %1936 = vadd.xlane.f32.xlu0 %v1933
        %v1937 = vpop.xlane.xlu0 %1936
        %v1938 = vmul.f32 %v1937, %v704
        %v1939 = vsub.f32 %v1933, %v1938
        %v1940 = vmul.f32 %v1939, %v1939
        %1941 = vadd.xlane.f32.xlu0 %v1940
        %v1942 = vpop.xlane.xlu0 %1941
        %v1943 = vmul.f32 %v1942, %v704
        %v1944 = vadd.f32 %v1943, 1e-12
        %v1945 = vrsqrt.pop %v1944
        %v1946 = vmul.f32 %v1939, %v1945
        %v1948 = vlaneseq
        %v1949 = vshrl.u32 %v1948, 7
        %v1950 = vsub.s32 0, %v1949
        %v1951 = vrot.slane %v1934, %v1950
        %v1953 = vmul.f32 %v1946, %v1951
        %v1955 = vlaneseq
        %v1956 = vshrl.u32 %v1955, 7
        %v1957 = vsub.s32 0, %v1956
        %v1958 = vrot.slane %v1935, %v1957
        %v1960 = vadd.f32 %v1953, %v1958
        %v1961 = vpack.c.bf16 %v1960, %v1960
        %s1962 = scalar_lea.vmem [#allocation2], 384
        %v1963 = vld [vmem:[%s1962] sm:$0xff]
        %v1964 = vld [vmem:[%s1962 + $0x8] sm:$0xff]
        %v1965 = vld [vmem:[%s1962 + $0x10] sm:$0xff]
        %v1966 = vld [vmem:[%s1962 + $0x18] sm:$0xff]
        %v1967 = vld [vmem:[%s1962 + $0x20] sm:$0xff]
        %v1968 = vld [vmem:[%s1962 + $0x28] sm:$0xff]
        %v1969 = vld [vmem:[%s1962 + $0x30] sm:$0xff]
        %v1970 = vld [vmem:[%s1962 + $0x38] sm:$0xff]
        %v1971 = vld [vmem:[%s1962 + $0x40] sm:$0xff]
        %v1972 = vld [vmem:[%s1962 + $0x48] sm:$0xff]
        %v1973 = vld [vmem:[%s1962 + $0x50] sm:$0xff]
        %v1974 = vld [vmem:[%s1962 + $0x58] sm:$0xff]
        %v1975 = vld [vmem:[%s1962 + $0x60] sm:$0xff]
        %v1976 = vld [vmem:[%s1962 + $0x68] sm:$0xff]
        %v1977 = vld [vmem:[%s1962 + $0x70] sm:$0xff]
        %v1978 = vld [vmem:[%s1962 + $0x78] sm:$0xff]
        %v1979 = vld [vmem:[%s1962 + $0x80] sm:$0xff]
        %v1980 = vld [vmem:[%s1962 + $0x88] sm:$0xff]
        %v1981 = vld [vmem:[%s1962 + $0x90] sm:$0xff]
        %v1982 = vld [vmem:[%s1962 + $0x98] sm:$0xff]
        %v1983 = vld [vmem:[%s1962 + $0xa0] sm:$0xff]
        %v1984 = vld [vmem:[%s1962 + $0xa8] sm:$0xff]
        %v1985 = vld [vmem:[%s1962 + $0xb0] sm:$0xff]
        %v1986 = vld [vmem:[%s1962 + $0xb8] sm:$0xff]
        %v1987 = vld [vmem:[%s1962 + $0xc0] sm:$0xff]
        %v1988 = vld [vmem:[%s1962 + $0xc8] sm:$0xff]
        %v1989 = vld [vmem:[%s1962 + $0xd0] sm:$0xff]
        %v1990 = vld [vmem:[%s1962 + $0xd8] sm:$0xff]
        %v1991 = vld [vmem:[%s1962 + $0xe0] sm:$0xff]
        %v1992 = vld [vmem:[%s1962 + $0xe8] sm:$0xff]
        %v1993 = vld [vmem:[%s1962 + $0xf0] sm:$0xff]
        %v1994 = vld [vmem:[%s1962 + $0xf8] sm:$0xff]
        %v1995 = vld [vmem:[%s1962 + $0x100] sm:$0xff]
        %v1996 = vld [vmem:[%s1962 + $0x108] sm:$0xff]
        %v1997 = vld [vmem:[%s1962 + $0x110] sm:$0xff]
        %v1998 = vld [vmem:[%s1962 + $0x118] sm:$0xff]
        %v1999 = vld [vmem:[%s1962 + $0x120] sm:$0xff]
        %v2000 = vld [vmem:[%s1962 + $0x128] sm:$0xff]
        %v2001 = vld [vmem:[%s1962 + $0x130] sm:$0xff]
        %v2002 = vld [vmem:[%s1962 + $0x138] sm:$0xff]
        %v2003 = vld [vmem:[%s1962 + $0x140] sm:$0xff]
        %v2004 = vld [vmem:[%s1962 + $0x148] sm:$0xff]
        %v2005 = vld [vmem:[%s1962 + $0x150] sm:$0xff]
        %v2006 = vld [vmem:[%s1962 + $0x158] sm:$0xff]
        %v2007 = vld [vmem:[%s1962 + $0x160] sm:$0xff]
        %v2008 = vld [vmem:[%s1962 + $0x168] sm:$0xff]
        %v2009 = vld [vmem:[%s1962 + $0x170] sm:$0xff]
        %v2010 = vld [vmem:[%s1962 + $0x178] sm:$0xff]
        %s2011 = scalar_lea.vmem %s5, 6
        %v2012 = vld [vmem:[%s2011] sm:$0x3f]
        %v2014 = vlaneseq
        %v2015 = vshrl.u32 %v2014, 7
        %v2016 = vsub.s32 0, %v2015
        %v2017 = vrot.slane %v2012, %v2016
        %v2018 = vlaneseq
        %v2019 = vshrl.u32 %v2018, 7
        %v2020 = vsub.s32 1, %v2019
        %v2021 = vrot.slane %v2012, %v2020
        %v2022 = vlaneseq
        %v2023 = vshrl.u32 %v2022, 7
        %v2024 = vsub.s32 2, %v2023
        %v2025 = vrot.slane %v2012, %v2024
        %v2026 = vlaneseq
        %v2027 = vshrl.u32 %v2026, 7
        %v2028 = vsub.s32 3, %v2027
        %v2029 = vrot.slane %v2012, %v2028
        %v2030 = vlaneseq
        %v2031 = vshrl.u32 %v2030, 7
        %v2032 = vsub.s32 4, %v2031
        %v2033 = vrot.slane %v2012, %v2032
        %v2034 = vlaneseq
        %v2035 = vshrl.u32 %v2034, 7
        %v2036 = vsub.s32 5, %v2035
        %v2037 = vrot.slane %v2012, %v2036
        %v2092 = vunpack.c.l.b16 %v1963
        %v2093 = vunpack.c.h.b16 %v1963
        %v2094 = vunpack.c.l.b16 %v1964
        %v2095 = vunpack.c.h.b16 %v1964
        %v2096 = vunpack.c.l.b16 %v1965
        %v2097 = vunpack.c.h.b16 %v1965
        %v2098 = vunpack.c.l.b16 %v1966
        %v2099 = vunpack.c.h.b16 %v1966
        %v2100 = vunpack.c.l.b16 %v1967
        %v2101 = vunpack.c.h.b16 %v1967
        %v2102 = vunpack.c.l.b16 %v1968
        %v2103 = vunpack.c.h.b16 %v1968
        %v2104 = vunpack.c.l.b16 %v1969
        %v2105 = vunpack.c.h.b16 %v1969
        %v2106 = vunpack.c.l.b16 %v1970
        %v2107 = vunpack.c.h.b16 %v1970
        %v2108 = vunpack.c.l.b16 %v1971
        %v2109 = vunpack.c.h.b16 %v1971
        %v2110 = vunpack.c.l.b16 %v1972
        %v2111 = vunpack.c.h.b16 %v1972
        %v2112 = vunpack.c.l.b16 %v1973
        %v2113 = vunpack.c.h.b16 %v1973
        %v2114 = vunpack.c.l.b16 %v1974
        %v2115 = vunpack.c.h.b16 %v1974
        %v2116 = vunpack.c.l.b16 %v1975
        %v2117 = vunpack.c.h.b16 %v1975
        %v2118 = vunpack.c.l.b16 %v1976
        %v2119 = vunpack.c.h.b16 %v1976
        %v2120 = vunpack.c.l.b16 %v1977
        %v2121 = vunpack.c.h.b16 %v1977
        %v2122 = vunpack.c.l.b16 %v1978
        %v2123 = vunpack.c.h.b16 %v1978
        %v2124 = vunpack.c.l.b16 %v1979
        %v2125 = vunpack.c.h.b16 %v1979
        %v2126 = vunpack.c.l.b16 %v1980
        %v2127 = vunpack.c.h.b16 %v1980
        %v2128 = vunpack.c.l.b16 %v1981
        %v2129 = vunpack.c.h.b16 %v1981
        %v2130 = vunpack.c.l.b16 %v1982
        %v2131 = vunpack.c.h.b16 %v1982
        %v2132 = vunpack.c.l.b16 %v1983
        %v2133 = vunpack.c.h.b16 %v1983
        %v2134 = vunpack.c.l.b16 %v1984
        %v2135 = vunpack.c.h.b16 %v1984
        %v2136 = vunpack.c.l.b16 %v1985
        %v2137 = vunpack.c.h.b16 %v1985
        %v2138 = vunpack.c.l.b16 %v1986
        %v2139 = vunpack.c.h.b16 %v1986
        %v2140 = vunpack.c.l.b16 %v1987
        %v2141 = vunpack.c.h.b16 %v1987
        %v2142 = vunpack.c.l.b16 %v1988
        %v2143 = vunpack.c.h.b16 %v1988
        %v2144 = vunpack.c.l.b16 %v1989
        %v2145 = vunpack.c.h.b16 %v1989
        %v2146 = vunpack.c.l.b16 %v1990
        %v2147 = vunpack.c.h.b16 %v1990
        %v2148 = vunpack.c.l.b16 %v1991
        %v2149 = vunpack.c.h.b16 %v1991
        %v2150 = vunpack.c.l.b16 %v1992
        %v2151 = vunpack.c.h.b16 %v1992
        %v2152 = vunpack.c.l.b16 %v1993
        %v2153 = vunpack.c.h.b16 %v1993
        %v2154 = vunpack.c.l.b16 %v1994
        %v2155 = vunpack.c.h.b16 %v1994
        %v2156 = vunpack.c.l.b16 %v1995
        %v2157 = vunpack.c.h.b16 %v1995
        %v2158 = vunpack.c.l.b16 %v1996
        %v2159 = vunpack.c.h.b16 %v1996
        %v2160 = vunpack.c.l.b16 %v1997
        %v2161 = vunpack.c.h.b16 %v1997
        %v2162 = vunpack.c.l.b16 %v1998
        %v2163 = vunpack.c.h.b16 %v1998
        %v2164 = vunpack.c.l.b16 %v1999
        %v2165 = vunpack.c.h.b16 %v1999
        %v2166 = vunpack.c.l.b16 %v2000
        %v2167 = vunpack.c.h.b16 %v2000
        %v2168 = vunpack.c.l.b16 %v2001
        %v2169 = vunpack.c.h.b16 %v2001
        %v2170 = vunpack.c.l.b16 %v2002
        %v2171 = vunpack.c.h.b16 %v2002
        %v2172 = vunpack.c.l.b16 %v2003
        %v2173 = vunpack.c.h.b16 %v2003
        %v2174 = vunpack.c.l.b16 %v2004
        %v2175 = vunpack.c.h.b16 %v2004
        %v2176 = vunpack.c.l.b16 %v2005
        %v2177 = vunpack.c.h.b16 %v2005
        %v2178 = vunpack.c.l.b16 %v2006
        %v2179 = vunpack.c.h.b16 %v2006
        %v2180 = vunpack.c.l.b16 %v2007
        %v2181 = vunpack.c.h.b16 %v2007
        %v2182 = vunpack.c.l.b16 %v2008
        %v2183 = vunpack.c.h.b16 %v2008
        %v2184 = vunpack.c.l.b16 %v2009
        %v2185 = vunpack.c.h.b16 %v2009
        %v2186 = vunpack.c.l.b16 %v2010
        %v2187 = vunpack.c.h.b16 %v2010
        %v2188 = vpack.c.b16 %v2098, %v2092
        %v2189 = vpack.c.b16 %v2099, %v2093
        %v2190 = vpack.c.b16 %v2100, %v2094
        %v2191 = vpack.c.b16 %v2101, %v2095
        %v2192 = vpack.c.b16 %v2102, %v2096
        %v2193 = vpack.c.b16 %v2103, %v2097
        %v2194 = vpack.c.b16 %v2110, %v2104
        %v2195 = vpack.c.b16 %v2111, %v2105
        %v2196 = vpack.c.b16 %v2112, %v2106
        %v2197 = vpack.c.b16 %v2113, %v2107
        %v2198 = vpack.c.b16 %v2114, %v2108
        %v2199 = vpack.c.b16 %v2115, %v2109
        %v2200 = vpack.c.b16 %v2122, %v2116
        %v2201 = vpack.c.b16 %v2123, %v2117
        %v2202 = vpack.c.b16 %v2124, %v2118
        %v2203 = vpack.c.b16 %v2125, %v2119
        %v2204 = vpack.c.b16 %v2126, %v2120
        %v2205 = vpack.c.b16 %v2127, %v2121
        %v2206 = vpack.c.b16 %v2134, %v2128
        %v2207 = vpack.c.b16 %v2135, %v2129
        %v2208 = vpack.c.b16 %v2136, %v2130
        %v2209 = vpack.c.b16 %v2137, %v2131
        %v2210 = vpack.c.b16 %v2138, %v2132
        %v2211 = vpack.c.b16 %v2139, %v2133
        %v2212 = vpack.c.b16 %v2146, %v2140
        %v2213 = vpack.c.b16 %v2147, %v2141
        %v2214 = vpack.c.b16 %v2148, %v2142
        %v2215 = vpack.c.b16 %v2149, %v2143
        %v2216 = vpack.c.b16 %v2150, %v2144
        %v2217 = vpack.c.b16 %v2151, %v2145
        %v2218 = vpack.c.b16 %v2158, %v2152
        %v2219 = vpack.c.b16 %v2159, %v2153
        %v2220 = vpack.c.b16 %v2160, %v2154
        %v2221 = vpack.c.b16 %v2161, %v2155
        %v2222 = vpack.c.b16 %v2162, %v2156
        %v2223 = vpack.c.b16 %v2163, %v2157
        %v2224 = vpack.c.b16 %v2170, %v2164
        %v2225 = vpack.c.b16 %v2171, %v2165
        %v2226 = vpack.c.b16 %v2172, %v2166
        %v2227 = vpack.c.b16 %v2173, %v2167
        %v2228 = vpack.c.b16 %v2174, %v2168
        %v2229 = vpack.c.b16 %v2175, %v2169
        %v2230 = vpack.c.b16 %v2182, %v2176
        %v2231 = vpack.c.b16 %v2183, %v2177
        %v2232 = vpack.c.b16 %v2184, %v2178
        %v2233 = vpack.c.b16 %v2185, %v2179
        %v2234 = vpack.c.b16 %v2186, %v2180
        %v2235 = vpack.c.b16 %v2187, %v2181
        %2284 = vmatprep.subr.bf16.mxu0 %v2231
        %2285 = vmatpush1.bf16.msra.mxu0 %v2230
        %2286 = vmatprep.subr.bf16.mxu0 %v2225
        %2287 = vmatpush1.bf16.msra.mxu0 %v2224
        %2288 = vmatprep.subr.bf16.mxu0 %v2219
        %2289 = vmatpush1.bf16.msra.mxu0 %v2218
        %2290 = vmatprep.subr.bf16.mxu0 %v2213
        %2291 = vmatpush1.bf16.msra.mxu0 %v2212
        %2292 = vmatprep.subr.bf16.mxu0 %v2207
        %2293 = vmatpush1.bf16.msra.mxu0 %v2206
        %2294 = vmatprep.subr.bf16.mxu0 %v2201
        %2295 = vmatpush1.bf16.msra.mxu0 %v2200
        %2296 = vmatprep.subr.bf16.mxu0 %v2195
        %2297 = vmatpush1.bf16.msra.mxu0 %v2194
        %2298 = vmatprep.subr.bf16.mxu0 %v2189
        %2299 = vmatpush1.bf16.msra.mxu0 %v2188
        %2300 = vmatprep.subr.bf16.mxu0 0
        %2301 = vmatpush2.bf16.msra.mxu0 0
        %2302 = vmatprep.subr.bf16.mxu0 0
        %2303 = vmatpush2.bf16.msra.mxu0 0
        %2304 = vmatprep.subr.bf16.mxu0 0
        %2305 = vmatpush2.bf16.msra.mxu0 0
        %2306 = vmatprep.subr.bf16.mxu0 0
        %2307 = vmatpush2.bf16.msra.mxu0 0
        %2308 = vmatprep.subr.bf16.mxu0 0
        %2309 = vmatpush2.bf16.msra.mxu0 0
        %2310 = vmatprep.subr.bf16.mxu0 0
        %2311 = vmatpush2.bf16.msra.mxu0 0
        %2312 = vmatprep.subr.bf16.mxu0 0
        %2313 = vmatpush2.bf16.msra.mxu0 0
        %2314 = vmatprep.subr.bf16.mxu0 0
        %2315 = vmatpush2.bf16.msra.mxu0 0
        %2316 = vmatprep.mubr.bf16.mxu0 0
        %2317 = vmatmul.mubr.bf16.gmra.mxu0 %v1961
        %v2318 = vpop.f32.mrf.mxu0
        %v2319 = vadd.f32 %v2017, %v2318
        %v2320 = vpop.f32.mrf.mxu0
        %v2321 = vadd.f32 %v2021, %v2320
        %v2322 = vpop.f32.mrf.mxu0
        %v2323 = vpop.f32.mrf.mxu0
        %2324 = vdwg.mxu0
        %2325 = vmatprep.subr.bf16.mxu0 %v2233
        %2326 = vmatpush1.bf16.msra.mxu0 %v2232
        %2327 = vmatprep.subr.bf16.mxu0 %v2227
        %2328 = vmatpush1.bf16.msra.mxu0 %v2226
        %2329 = vmatprep.subr.bf16.mxu0 %v2221
        %2330 = vmatpush1.bf16.msra.mxu0 %v2220
        %2331 = vmatprep.subr.bf16.mxu0 %v2215
        %2332 = vmatpush1.bf16.msra.mxu0 %v2214
        %2333 = vmatprep.subr.bf16.mxu0 %v2209
        %2334 = vmatpush1.bf16.msra.mxu0 %v2208
        %2335 = vmatprep.subr.bf16.mxu0 %v2203
        %2336 = vmatpush1.bf16.msra.mxu0 %v2202
        %2337 = vmatprep.subr.bf16.mxu0 %v2197
        %2338 = vmatpush1.bf16.msra.mxu0 %v2196
        %2339 = vmatprep.subr.bf16.mxu0 %v2191
        %2340 = vmatpush1.bf16.msra.mxu0 %v2190
        %2341 = vmatprep.subr.bf16.mxu0 0
        %2342 = vmatpush2.bf16.msra.mxu0 0
        %2343 = vmatprep.subr.bf16.mxu0 0
        %2344 = vmatpush2.bf16.msra.mxu0 0
        %2345 = vmatprep.subr.bf16.mxu0 0
        %2346 = vmatpush2.bf16.msra.mxu0 0
        %2347 = vmatprep.subr.bf16.mxu0 0
        %2348 = vmatpush2.bf16.msra.mxu0 0
        %2349 = vmatprep.subr.bf16.mxu0 0
        %2350 = vmatpush2.bf16.msra.mxu0 0
        %2351 = vmatprep.subr.bf16.mxu0 0
        %2352 = vmatpush2.bf16.msra.mxu0 0
        %2353 = vmatprep.subr.bf16.mxu0 0
        %2354 = vmatpush2.bf16.msra.mxu0 0
        %2355 = vmatprep.subr.bf16.mxu0 0
        %2356 = vmatpush2.bf16.msra.mxu0 0
        %2357 = vmatprep.mubr.bf16.mxu0 0
        %2358 = vmatmul.mubr.bf16.gmra.mxu0 %v1961
        %v2359 = vpop.f32.mrf.mxu0
        %v2360 = vadd.f32 %v2025, %v2359
        %v2361 = vpop.f32.mrf.mxu0
        %v2362 = vadd.f32 %v2029, %v2361
        %v2363 = vpop.f32.mrf.mxu0
        %v2364 = vpop.f32.mrf.mxu0
        %2365 = vdwg.mxu0
        %2366 = vmatprep.subr.bf16.mxu0 %v2235
        %2367 = vmatpush1.bf16.msra.mxu0 %v2234
        %2368 = vmatprep.subr.bf16.mxu0 %v2229
        %2369 = vmatpush1.bf16.msra.mxu0 %v2228
        %2370 = vmatprep.subr.bf16.mxu0 %v2223
        %2371 = vmatpush1.bf16.msra.mxu0 %v2222
        %2372 = vmatprep.subr.bf16.mxu0 %v2217
        %2373 = vmatpush1.bf16.msra.mxu0 %v2216
        %2374 = vmatprep.subr.bf16.mxu0 %v2211
        %2375 = vmatpush1.bf16.msra.mxu0 %v2210
        %2376 = vmatprep.subr.bf16.mxu0 %v2205
        %2377 = vmatpush1.bf16.msra.mxu0 %v2204
        %2378 = vmatprep.subr.bf16.mxu0 %v2199
        %2379 = vmatpush1.bf16.msra.mxu0 %v2198
        %2380 = vmatprep.subr.bf16.mxu0 %v2193
        %2381 = vmatpush1.bf16.msra.mxu0 %v2192
        %2382 = vmatprep.subr.bf16.mxu0 0
        %2383 = vmatpush2.bf16.msra.mxu0 0
        %2384 = vmatprep.subr.bf16.mxu0 0
        %2385 = vmatpush2.bf16.msra.mxu0 0
        %2386 = vmatprep.subr.bf16.mxu0 0
        %2387 = vmatpush2.bf16.msra.mxu0 0
        %2388 = vmatprep.subr.bf16.mxu0 0
        %2389 = vmatpush2.bf16.msra.mxu0 0
        %2390 = vmatprep.subr.bf16.mxu0 0
        %2391 = vmatpush2.bf16.msra.mxu0 0
        %2392 = vmatprep.subr.bf16.mxu0 0
        %2393 = vmatpush2.bf16.msra.mxu0 0
        %2394 = vmatprep.subr.bf16.mxu0 0
        %2395 = vmatpush2.bf16.msra.mxu0 0
        %2396 = vmatprep.subr.bf16.mxu0 0
        %2397 = vmatpush2.bf16.msra.mxu0 0
        %2398 = vmatprep.mubr.bf16.mxu0 0
        %2399 = vmatmul.mubr.bf16.gmra.mxu0 %v1961
        %v2400 = vpop.f32.mrf.mxu0
        %v2401 = vadd.f32 %v2033, %v2400
        %v2402 = vpop.f32.mrf.mxu0
        %v2403 = vadd.f32 %v2037, %v2402
        %v2404 = vpop.f32.mrf.mxu0
        %v2405 = vpop.f32.mrf.mxu0
        %2406 = vdwg.mxu0
        %v2407 = vpack.c.bf16 %v2319, %v2319
        %v2408 = vpack.c.bf16 %v2321, %v2321
        %v2409 = vpack.c.bf16 %v2360, %v2360
        %v2410 = vpack.c.bf16 %v2362, %v2362
        %v2411 = vpack.c.bf16 %v2401, %v2401
        %v2412 = vpack.c.bf16 %v2403, %v2403
        %2413 = vmatprep.subr.bf16.mxu0 0
        %2414 = vmatpush1.bf16.xpose.msra.mxu0 0
        %2415 = vmatprep.subr.bf16.mxu0 0
        %2416 = vmatpush1.bf16.xpose.msra.mxu0 0
        %2417 = vmatprep.subr.bf16.mxu0 0
        %2418 = vmatpush1.bf16.xpose.msra.mxu0 0
        %2419 = vmatprep.subr.bf16.mxu0 0
        %2420 = vmatpush1.bf16.xpose.msra.mxu0 0
        %2421 = vmatprep.subr.bf16.mxu0 0
        %2422 = vmatpush1.bf16.xpose.msra.mxu0 0
        %2423 = vmatprep.subr.bf16.mxu0 0
        %2424 = vmatpush1.bf16.xpose.msra.mxu0 0
        %2425 = vmatprep.subr.bf16.mxu0 0
        %2426 = vmatpush1.bf16.xpose.msra.mxu0 0
        %2427 = vmatprep.subr.bf16.mxu0 0
        %2428 = vmatpush1.bf16.xpose.msra.mxu0 %v2409
        %2429 = vmatprep.subr.bf16.mxu0 0
        %2430 = vmatpush2.bf16.xpose.msra.mxu0 0
        %2431 = vmatprep.subr.bf16.mxu0 0
        %2432 = vmatpush2.bf16.xpose.msra.mxu0 0
        %2433 = vmatprep.subr.bf16.mxu0 0
        %2434 = vmatpush2.bf16.xpose.msra.mxu0 0
        %2435 = vmatprep.subr.bf16.mxu0 0
        %2436 = vmatpush2.bf16.xpose.msra.mxu0 0
        %2437 = vmatprep.subr.bf16.mxu0 0
        %2438 = vmatpush2.bf16.xpose.msra.mxu0 0
        %2439 = vmatprep.subr.bf16.mxu0 0
        %2440 = vmatpush2.bf16.xpose.msra.mxu0 0
        %2441 = vmatprep.subr.bf16.mxu0 0
        %2442 = vmatpush2.bf16.xpose.msra.mxu0 0
        %2443 = vmatprep.subr.bf16.mxu0 0
        %2444 = vmatpush2.bf16.xpose.msra.mxu0 0
        %2445 = vmatprep.mubr.bf16.mxu0 0
        %2446 = vmatmul.mubr.bf16.gmra.mxu0 %v2407
        %v2447 = vpop.f32.mrf.mxu0
        %v2448 = vadd.f32 %v1183, %v2447
        %v2449 = vpop.f32.mrf.mxu0
        %v2450 = vpop.f32.mrf.mxu0
        %v2451 = vpop.f32.mrf.mxu0
        %2452 = vdwg.mxu0
        %v2453 = vsel %vm1225, %v2448, -inf
        %2454 = vmax.xlane.f32.xlu0 %v2453
        %v2455 = vpop.xlane.xlu0 %2454
        %v2456 = vsub.f32 %v2448, %v2455
        %v2457 = vmul.f32 %v2456, 1.442695
        %v2458 = vpow.pop %v2457
        %v2459 = vsel %vm1225, %v2458, 0.0
        %2460 = vadd.xlane.f32.xlu0 %v2459
        %v2461 = vpop.xlane.xlu0 %2460
        %v2462 = vrcp.pop %v2461
        %v2463 = vmul.f32 %v2458, %v2462
        %v2464 = vpack.c.bf16 %v2463, %v2463
        %v2466 = vsel %vm1225, %v2464, 0
        %v2469 = vsel %vm1241, %v2411, 0
        %2471 = vmatprep.subr.bf16.mxu0 0
        %2472 = vmatpush1.bf16.msra.mxu0 0
        %2473 = vmatprep.subr.bf16.mxu0 0
        %2474 = vmatpush1.bf16.msra.mxu0 0
        %2475 = vmatprep.subr.bf16.mxu0 0
        %2476 = vmatpush1.bf16.msra.mxu0 0
        %2477 = vmatprep.subr.bf16.mxu0 0
        %2478 = vmatpush1.bf16.msra.mxu0 0
        %2479 = vmatprep.subr.bf16.mxu0 0
        %2480 = vmatpush1.bf16.msra.mxu0 0
        %2481 = vmatprep.subr.bf16.mxu0 0
        %2482 = vmatpush1.bf16.msra.mxu0 0
        %2483 = vmatprep.subr.bf16.mxu0 0
        %2484 = vmatpush1.bf16.msra.mxu0 0
        %2485 = vmatprep.subr.bf16.mxu0 0
        %2486 = vmatpush1.bf16.msra.mxu0 %v2469
        %2487 = vmatprep.subr.bf16.mxu0 0
        %2488 = vmatpush2.bf16.msra.mxu0 0
        %2489 = vmatprep.subr.bf16.mxu0 0
        %2490 = vmatpush2.bf16.msra.mxu0 0
        %2491 = vmatprep.subr.bf16.mxu0 0
        %2492 = vmatpush2.bf16.msra.mxu0 0
        %2493 = vmatprep.subr.bf16.mxu0 0
        %2494 = vmatpush2.bf16.msra.mxu0 0
        %2495 = vmatprep.subr.bf16.mxu0 0
        %2496 = vmatpush2.bf16.msra.mxu0 0
        %2497 = vmatprep.subr.bf16.mxu0 0
        %2498 = vmatpush2.bf16.msra.mxu0 0
        %2499 = vmatprep.subr.bf16.mxu0 0
        %2500 = vmatpush2.bf16.msra.mxu0 0
        %2501 = vmatprep.subr.bf16.mxu0 0
        %2502 = vmatpush2.bf16.msra.mxu0 0
        %2503 = vmatprep.mubr.bf16.mxu0 0
        %2504 = vmatmul.mubr.bf16.gmra.mxu0 %v2466
        %v2505 = vpop.f32.mrf.mxu0
        %v2506 = vadd.f32 0.0, %v2505
        %v2507 = vpop.f32.mrf.mxu0
        %v2508 = vpop.f32.mrf.mxu0
        %v2509 = vpop.f32.mrf.mxu0
        %2510 = vdwg.mxu0
        %2511 = vmatprep.subr.bf16.mxu0 0
        %2512 = vmatpush1.bf16.xpose.msra.mxu0 0
        %2513 = vmatprep.subr.bf16.mxu0 0
        %2514 = vmatpush1.bf16.xpose.msra.mxu0 0
        %2515 = vmatprep.subr.bf16.mxu0 0
        %2516 = vmatpush1.bf16.xpose.msra.mxu0 0
        %2517 = vmatprep.subr.bf16.mxu0 0
        %2518 = vmatpush1.bf16.xpose.msra.mxu0 0
        %2519 = vmatprep.subr.bf16.mxu0 0
        %2520 = vmatpush1.bf16.xpose.msra.mxu0 0
        %2521 = vmatprep.subr.bf16.mxu0 0
        %2522 = vmatpush1.bf16.xpose.msra.mxu0 0
        %2523 = vmatprep.subr.bf16.mxu0 0
        %2524 = vmatpush1.bf16.xpose.msra.mxu0 0
        %2525 = vmatprep.subr.bf16.mxu0 0
        %2526 = vmatpush1.bf16.xpose.msra.mxu0 %v2410
        %2527 = vmatprep.subr.bf16.mxu0 0
        %2528 = vmatpush2.bf16.xpose.msra.mxu0 0
        %2529 = vmatprep.subr.bf16.mxu0 0
        %2530 = vmatpush2.bf16.xpose.msra.mxu0 0
        %2531 = vmatprep.subr.bf16.mxu0 0
        %2532 = vmatpush2.bf16.xpose.msra.mxu0 0
        %2533 = vmatprep.subr.bf16.mxu0 0
        %2534 = vmatpush2.bf16.xpose.msra.mxu0 0
        %2535 = vmatprep.subr.bf16.mxu0 0
        %2536 = vmatpush2.bf16.xpose.msra.mxu0 0
        %2537 = vmatprep.subr.bf16.mxu0 0
        %2538 = vmatpush2.bf16.xpose.msra.mxu0 0
        %2539 = vmatprep.subr.bf16.mxu0 0
        %2540 = vmatpush2.bf16.xpose.msra.mxu0 0
        %2541 = vmatprep.subr.bf16.mxu0 0
        %2542 = vmatpush2.bf16.xpose.msra.mxu0 0
        %2543 = vmatprep.mubr.bf16.mxu0 0
        %2544 = vmatmul.mubr.bf16.gmra.mxu0 %v2408
        %v2545 = vpop.f32.mrf.mxu0
        %v2546 = vadd.f32 %v1183, %v2545
        %v2547 = vpop.f32.mrf.mxu0
        %v2548 = vpop.f32.mrf.mxu0
        %v2549 = vpop.f32.mrf.mxu0
        %2550 = vdwg.mxu0
        %v2551 = vsel %vm1225, %v2546, -inf
        %2552 = vmax.xlane.f32.xlu0 %v2551
        %v2553 = vpop.xlane.xlu0 %2552
        %v2554 = vsub.f32 %v2546, %v2553
        %v2555 = vmul.f32 %v2554, 1.442695
        %v2556 = vpow.pop %v2555
        %v2557 = vsel %vm1225, %v2556, 0.0
        %2558 = vadd.xlane.f32.xlu0 %v2557
        %v2559 = vpop.xlane.xlu0 %2558
        %v2560 = vrcp.pop %v2559
        %v2561 = vmul.f32 %v2556, %v2560
        %v2562 = vpack.c.bf16 %v2561, %v2561
        %v2564 = vsel %vm1225, %v2562, 0
        %v2567 = vsel %vm1241, %v2412, 0
        %2569 = vmatprep.subr.bf16.mxu0 0
        %2570 = vmatpush1.bf16.msra.mxu0 0
        %2571 = vmatprep.subr.bf16.mxu0 0
        %2572 = vmatpush1.bf16.msra.mxu0 0
        %2573 = vmatprep.subr.bf16.mxu0 0
        %2574 = vmatpush1.bf16.msra.mxu0 0
        %2575 = vmatprep.subr.bf16.mxu0 0
        %2576 = vmatpush1.bf16.msra.mxu0 0
        %2577 = vmatprep.subr.bf16.mxu0 0
        %2578 = vmatpush1.bf16.msra.mxu0 0
        %2579 = vmatprep.subr.bf16.mxu0 0
        %2580 = vmatpush1.bf16.msra.mxu0 0
        %2581 = vmatprep.subr.bf16.mxu0 0
        %2582 = vmatpush1.bf16.msra.mxu0 0
        %2583 = vmatprep.subr.bf16.mxu0 0
        %2584 = vmatpush1.bf16.msra.mxu0 %v2567
        %2585 = vmatprep.subr.bf16.mxu0 0
        %2586 = vmatpush2.bf16.msra.mxu0 0
        %2587 = vmatprep.subr.bf16.mxu0 0
        %2588 = vmatpush2.bf16.msra.mxu0 0
        %2589 = vmatprep.subr.bf16.mxu0 0
        %2590 = vmatpush2.bf16.msra.mxu0 0
        %2591 = vmatprep.subr.bf16.mxu0 0
        %2592 = vmatpush2.bf16.msra.mxu0 0
        %2593 = vmatprep.subr.bf16.mxu0 0
        %2594 = vmatpush2.bf16.msra.mxu0 0
        %2595 = vmatprep.subr.bf16.mxu0 0
        %2596 = vmatpush2.bf16.msra.mxu0 0
        %2597 = vmatprep.subr.bf16.mxu0 0
        %2598 = vmatpush2.bf16.msra.mxu0 0
        %2599 = vmatprep.subr.bf16.mxu0 0
        %2600 = vmatpush2.bf16.msra.mxu0 0
        %2601 = vmatprep.mubr.bf16.mxu0 0
        %2602 = vmatmul.mubr.bf16.gmra.mxu0 %v2564
        %v2603 = vpop.f32.mrf.mxu0
        %v2604 = vadd.f32 0.0, %v2603
        %v2605 = vpop.f32.mrf.mxu0
        %v2606 = vpop.f32.mrf.mxu0
        %v2607 = vpop.f32.mrf.mxu0
        %2608 = vdwg.mxu0
        %v2609 = vpack.c.bf16 %v2506, %v2506
        %v2610 = vpack.c.bf16 %v2604, %v2604
        %s2611 = scalar_lea.vmem [#allocation4], 128
        %v2612 = vld [vmem:[%s2611] sm:$0xf]
        %v2613 = vld [vmem:[%s2611 + $0x4] sm:$0xf]
        %v2614 = vld [vmem:[%s2611 + $0x8] sm:$0xf]
        %v2615 = vld [vmem:[%s2611 + $0xc] sm:$0xf]
        %v2616 = vld [vmem:[%s2611 + $0x10] sm:$0xf]
        %v2617 = vld [vmem:[%s2611 + $0x14] sm:$0xf]
        %v2618 = vld [vmem:[%s2611 + $0x18] sm:$0xf]
        %v2619 = vld [vmem:[%s2611 + $0x1c] sm:$0xf]
        %v2620 = vld [vmem:[%s2611 + $0x20] sm:$0xf]
        %v2621 = vld [vmem:[%s2611 + $0x24] sm:$0xf]
        %v2622 = vld [vmem:[%s2611 + $0x28] sm:$0xf]
        %v2623 = vld [vmem:[%s2611 + $0x2c] sm:$0xf]
        %v2624 = vld [vmem:[%s2611 + $0x30] sm:$0xf]
        %v2625 = vld [vmem:[%s2611 + $0x34] sm:$0xf]
        %v2626 = vld [vmem:[%s2611 + $0x38] sm:$0xf]
        %v2627 = vld [vmem:[%s2611 + $0x3c] sm:$0xf]
        %v2628 = vld [vmem:[%s2611 + $0x40] sm:$0xf]
        %v2629 = vld [vmem:[%s2611 + $0x44] sm:$0xf]
        %v2630 = vld [vmem:[%s2611 + $0x48] sm:$0xf]
        %v2631 = vld [vmem:[%s2611 + $0x4c] sm:$0xf]
        %v2632 = vld [vmem:[%s2611 + $0x50] sm:$0xf]
        %v2633 = vld [vmem:[%s2611 + $0x54] sm:$0xf]
        %v2634 = vld [vmem:[%s2611 + $0x58] sm:$0xf]
        %v2635 = vld [vmem:[%s2611 + $0x5c] sm:$0xf]
        %v2636 = vld [vmem:[%s2611 + $0x60] sm:$0xf]
        %v2637 = vld [vmem:[%s2611 + $0x64] sm:$0xf]
        %v2638 = vld [vmem:[%s2611 + $0x68] sm:$0xf]
        %v2639 = vld [vmem:[%s2611 + $0x6c] sm:$0xf]
        %v2640 = vld [vmem:[%s2611 + $0x70] sm:$0xf]
        %v2641 = vld [vmem:[%s2611 + $0x74] sm:$0xf]
        %v2642 = vld [vmem:[%s2611 + $0x78] sm:$0xf]
        %v2643 = vld [vmem:[%s2611 + $0x7c] sm:$0xf]
        %s2644 = scalar_lea.vmem %s7, 1
        %v2645 = vld [vmem:[%s2644] sm:$0x1]
        %v2647 = vlaneseq
        %v2648 = vshrl.u32 %v2647, 7
        %v2649 = vsub.s32 0, %v2648
        %v2650 = vrot.slane %v2645, %v2649
        %v2684 = vunpack.c.l.b16 %v2612
        %v2685 = vunpack.c.l.b16 %v2613
        %v2686 = vunpack.c.l.b16 %v2614
        %v2687 = vunpack.c.l.b16 %v2615
        %v2688 = vunpack.c.l.b16 %v2616
        %v2689 = vunpack.c.l.b16 %v2617
        %v2690 = vunpack.c.l.b16 %v2618
        %v2691 = vunpack.c.l.b16 %v2619
        %v2692 = vunpack.c.l.b16 %v2620
        %v2693 = vunpack.c.l.b16 %v2621
        %v2694 = vunpack.c.l.b16 %v2622
        %v2695 = vunpack.c.l.b16 %v2623
        %v2696 = vunpack.c.l.b16 %v2624
        %v2697 = vunpack.c.l.b16 %v2625
        %v2698 = vunpack.c.l.b16 %v2626
        %v2699 = vunpack.c.l.b16 %v2627
        %v2700 = vunpack.c.l.b16 %v2628
        %v2701 = vunpack.c.l.b16 %v2629
        %v2702 = vunpack.c.l.b16 %v2630
        %v2703 = vunpack.c.l.b16 %v2631
        %v2704 = vunpack.c.l.b16 %v2632
        %v2705 = vunpack.c.l.b16 %v2633
        %v2706 = vunpack.c.l.b16 %v2634
        %v2707 = vunpack.c.l.b16 %v2635
        %v2708 = vunpack.c.l.b16 %v2636
        %v2709 = vunpack.c.l.b16 %v2637
        %v2710 = vunpack.c.l.b16 %v2638
        %v2711 = vunpack.c.l.b16 %v2639
        %v2712 = vunpack.c.l.b16 %v2640
        %v2713 = vunpack.c.l.b16 %v2641
        %v2714 = vunpack.c.l.b16 %v2642
        %v2715 = vunpack.c.l.b16 %v2643
        %v2716 = vpack.c.b16 %v2685, %v2684
        %v2717 = vpack.c.b16 %v2687, %v2686
        %v2718 = vpack.c.b16 %v2689, %v2688
        %v2719 = vpack.c.b16 %v2691, %v2690
        %v2720 = vpack.c.b16 %v2693, %v2692
        %v2721 = vpack.c.b16 %v2695, %v2694
        %v2722 = vpack.c.b16 %v2697, %v2696
        %v2723 = vpack.c.b16 %v2699, %v2698
        %v2724 = vpack.c.b16 %v2701, %v2700
        %v2725 = vpack.c.b16 %v2703, %v2702
        %v2726 = vpack.c.b16 %v2705, %v2704
        %v2727 = vpack.c.b16 %v2707, %v2706
        %v2728 = vpack.c.b16 %v2709, %v2708
        %v2729 = vpack.c.b16 %v2711, %v2710
        %v2730 = vpack.c.b16 %v2713, %v2712
        %v2731 = vpack.c.b16 %v2715, %v2714
        %2748 = vmatprep.subr.bf16.mxu0 0
        %2749 = vmatpush1.bf16.msra.mxu0 %v2723
        %2750 = vmatprep.subr.bf16.mxu0 0
        %2751 = vmatpush1.bf16.msra.mxu0 %v2722
        %2752 = vmatprep.subr.bf16.mxu0 0
        %2753 = vmatpush1.bf16.msra.mxu0 %v2721
        %2754 = vmatprep.subr.bf16.mxu0 0
        %2755 = vmatpush1.bf16.msra.mxu0 %v2720
        %2756 = vmatprep.subr.bf16.mxu0 0
        %2757 = vmatpush1.bf16.msra.mxu0 %v2719
        %2758 = vmatprep.subr.bf16.mxu0 0
        %2759 = vmatpush1.bf16.msra.mxu0 %v2718
        %2760 = vmatprep.subr.bf16.mxu0 0
        %2761 = vmatpush1.bf16.msra.mxu0 %v2717
        %2762 = vmatprep.subr.bf16.mxu0 0
        %2763 = vmatpush1.bf16.msra.mxu0 %v2716
        %2764 = vmatprep.subr.bf16.mxu0 0
        %2765 = vmatpush2.bf16.msra.mxu0 %v2731
        %2766 = vmatprep.subr.bf16.mxu0 0
        %2767 = vmatpush2.bf16.msra.mxu0 %v2730
        %2768 = vmatprep.subr.bf16.mxu0 0
        %2769 = vmatpush2.bf16.msra.mxu0 %v2729
        %2770 = vmatprep.subr.bf16.mxu0 0
        %2771 = vmatpush2.bf16.msra.mxu0 %v2728
        %2772 = vmatprep.subr.bf16.mxu0 0
        %2773 = vmatpush2.bf16.msra.mxu0 %v2727
        %2774 = vmatprep.subr.bf16.mxu0 0
        %2775 = vmatpush2.bf16.msra.mxu0 %v2726
        %2776 = vmatprep.subr.bf16.mxu0 0
        %2777 = vmatpush2.bf16.msra.mxu0 %v2725
        %2778 = vmatprep.subr.bf16.mxu0 0
        %2779 = vmatpush2.bf16.msra.mxu0 %v2724
        %2780 = vmatprep.mubr.bf16.mxu0 %v2610
        %2781 = vmatmul.mubr.bf16.gmra.mxu0 %v2609
        %v2782 = vpop.f32.mrf.mxu0
        %v2783 = vadd.f32 %v2650, %v2782
        %v2784 = vpop.f32.mrf.mxu0
        %v2785 = vpop.f32.mrf.mxu0
        %v2786 = vpop.f32.mrf.mxu0
        %2787 = vdwg.mxu0
        %v2788 = vadd.f32 %v2783, %v1960
        %s2789 = scalar_lea.vmem %s8, 1
        %v2790 = vld [vmem:[%s2789] sm:$0x1]
        %s2791 = scalar_lea.vmem %s9, 1
        %v2792 = vld [vmem:[%s2791] sm:$0x1]
        %2793 = vadd.xlane.f32.xlu0 %v2788
        %v2794 = vpop.xlane.xlu0 %2793
        %v2795 = vmul.f32 %v2794, %v704
        %v2796 = vsub.f32 %v2788, %v2795
        %v2797 = vmul.f32 %v2796, %v2796
        %2798 = vadd.xlane.f32.xlu0 %v2797
        %v2799 = vpop.xlane.xlu0 %2798
        %v2800 = vmul.f32 %v2799, %v704
        %v2801 = vadd.f32 %v2800, 1e-12
        %v2802 = vrsqrt.pop %v2801
        %v2803 = vmul.f32 %v2796, %v2802
        %v2805 = vlaneseq
        %v2806 = vshrl.u32 %v2805, 7
        %v2807 = vsub.s32 0, %v2806
        %v2808 = vrot.slane %v2790, %v2807
        %v2810 = vmul.f32 %v2803, %v2808
        %v2812 = vlaneseq
        %v2813 = vshrl.u32 %v2812, 7
        %v2814 = vsub.s32 0, %v2813
        %v2815 = vrot.slane %v2792, %v2814
        %v2817 = vadd.f32 %v2810, %v2815
        %v2818 = vpack.c.bf16 %v2817, %v2817
        %s2819 = scalar_lea.vmem [#allocation6], 128
        %v2820 = vld [vmem:[%s2819] sm:$0xff]
        %v2821 = vld [vmem:[%s2819 + $0x8] sm:$0xff]
        %v2822 = vld [vmem:[%s2819 + $0x10] sm:$0xff]
        %v2823 = vld [vmem:[%s2819 + $0x18] sm:$0xff]
        %v2824 = vld [vmem:[%s2819 + $0x20] sm:$0xff]
        %v2825 = vld [vmem:[%s2819 + $0x28] sm:$0xff]
        %v2826 = vld [vmem:[%s2819 + $0x30] sm:$0xff]
        %v2827 = vld [vmem:[%s2819 + $0x38] sm:$0xff]
        %v2828 = vld [vmem:[%s2819 + $0x40] sm:$0xff]
        %v2829 = vld [vmem:[%s2819 + $0x48] sm:$0xff]
        %v2830 = vld [vmem:[%s2819 + $0x50] sm:$0xff]
        %v2831 = vld [vmem:[%s2819 + $0x58] sm:$0xff]
        %v2832 = vld [vmem:[%s2819 + $0x60] sm:$0xff]
        %v2833 = vld [vmem:[%s2819 + $0x68] sm:$0xff]
        %v2834 = vld [vmem:[%s2819 + $0x70] sm:$0xff]
        %v2835 = vld [vmem:[%s2819 + $0x78] sm:$0xff]
        %s2836 = scalar_lea.vmem %s11, 2
        %v2837 = vld [vmem:[%s2836] sm:$0x3]
        %v2839 = vlaneseq
        %v2840 = vshrl.u32 %v2839, 7
        %v2841 = vsub.s32 0, %v2840
        %v2842 = vrot.slane %v2837, %v2841
        %v2843 = vlaneseq
        %v2844 = vshrl.u32 %v2843, 7
        %v2845 = vsub.s32 1, %v2844
        %v2846 = vrot.slane %v2837, %v2845
        %v2865 = vunpack.c.l.b16 %v2820
        %v2866 = vunpack.c.h.b16 %v2820
        %v2867 = vunpack.c.l.b16 %v2821
        %v2868 = vunpack.c.h.b16 %v2821
        %v2869 = vunpack.c.l.b16 %v2822
        %v2870 = vunpack.c.h.b16 %v2822
        %v2871 = vunpack.c.l.b16 %v2823
        %v2872 = vunpack.c.h.b16 %v2823
        %v2873 = vunpack.c.l.b16 %v2824
        %v2874 = vunpack.c.h.b16 %v2824
        %v2875 = vunpack.c.l.b16 %v2825
        %v2876 = vunpack.c.h.b16 %v2825
        %v2877 = vunpack.c.l.b16 %v2826
        %v2878 = vunpack.c.h.b16 %v2826
        %v2879 = vunpack.c.l.b16 %v2827
        %v2880 = vunpack.c.h.b16 %v2827
        %v2881 = vunpack.c.l.b16 %v2828
        %v2882 = vunpack.c.h.b16 %v2828
        %v2883 = vunpack.c.l.b16 %v2829
        %v2884 = vunpack.c.h.b16 %v2829
        %v2885 = vunpack.c.l.b16 %v2830
        %v2886 = vunpack.c.h.b16 %v2830
        %v2887 = vunpack.c.l.b16 %v2831
        %v2888 = vunpack.c.h.b16 %v2831
        %v2889 = vunpack.c.l.b16 %v2832
        %v2890 = vunpack.c.h.b16 %v2832
        %v2891 = vunpack.c.l.b16 %v2833
        %v2892 = vunpack.c.h.b16 %v2833
        %v2893 = vunpack.c.l.b16 %v2834
        %v2894 = vunpack.c.h.b16 %v2834
        %v2895 = vunpack.c.l.b16 %v2835
        %v2896 = vunpack.c.h.b16 %v2835
        %v2897 = vpack.c.b16 %v2867, %v2865
        %v2898 = vpack.c.b16 %v2868, %v2866
        %v2899 = vpack.c.b16 %v2871, %v2869
        %v2900 = vpack.c.b16 %v2872, %v2870
        %v2901 = vpack.c.b16 %v2875, %v2873
        %v2902 = vpack.c.b16 %v2876, %v2874
        %v2903 = vpack.c.b16 %v2879, %v2877
        %v2904 = vpack.c.b16 %v2880, %v2878
        %v2905 = vpack.c.b16 %v2883, %v2881
        %v2906 = vpack.c.b16 %v2884, %v2882
        %v2907 = vpack.c.b16 %v2887, %v2885
        %v2908 = vpack.c.b16 %v2888, %v2886
        %v2909 = vpack.c.b16 %v2891, %v2889
        %v2910 = vpack.c.b16 %v2892, %v2890
        %v2911 = vpack.c.b16 %v2895, %v2893
        %v2912 = vpack.c.b16 %v2896, %v2894
        %2929 = vmatprep.subr.bf16.mxu0 %v2912
        %2930 = vmatpush1.bf16.msra.mxu0 %v2911
        %2931 = vmatprep.subr.bf16.mxu0 %v2910
        %2932 = vmatpush1.bf16.msra.mxu0 %v2909
        %2933 = vmatprep.subr.bf16.mxu0 %v2908
        %2934 = vmatpush1.bf16.msra.mxu0 %v2907
        %2935 = vmatprep.subr.bf16.mxu0 %v2906
        %2936 = vmatpush1.bf16.msra.mxu0 %v2905
        %2937 = vmatprep.subr.bf16.mxu0 %v2904
        %2938 = vmatpush1.bf16.msra.mxu0 %v2903
        %2939 = vmatprep.subr.bf16.mxu0 %v2902
        %2940 = vmatpush1.bf16.msra.mxu0 %v2901
        %2941 = vmatprep.subr.bf16.mxu0 %v2900
        %2942 = vmatpush1.bf16.msra.mxu0 %v2899
        %2943 = vmatprep.subr.bf16.mxu0 %v2898
        %2944 = vmatpush1.bf16.msra.mxu0 %v2897
        %2945 = vmatprep.subr.bf16.mxu0 0
        %2946 = vmatpush2.bf16.msra.mxu0 0
        %2947 = vmatprep.subr.bf16.mxu0 0
        %2948 = vmatpush2.bf16.msra.mxu0 0
        %2949 = vmatprep.subr.bf16.mxu0 0
        %2950 = vmatpush2.bf16.msra.mxu0 0
        %2951 = vmatprep.subr.bf16.mxu0 0
        %2952 = vmatpush2.bf16.msra.mxu0 0
        %2953 = vmatprep.subr.bf16.mxu0 0
        %2954 = vmatpush2.bf16.msra.mxu0 0
        %2955 = vmatprep.subr.bf16.mxu0 0
        %2956 = vmatpush2.bf16.msra.mxu0 0
        %2957 = vmatprep.subr.bf16.mxu0 0
        %2958 = vmatpush2.bf16.msra.mxu0 0
        %2959 = vmatprep.subr.bf16.mxu0 0
        %2960 = vmatpush2.bf16.msra.mxu0 0
        %2961 = vmatprep.mubr.bf16.mxu0 0
        %2962 = vmatmul.mubr.bf16.gmra.mxu0 %v2818
        %v2963 = vpop.f32.mrf.mxu0
        %v2964 = vadd.f32 %v2842, %v2963
        %v2965 = vpop.f32.mrf.mxu0
        %v2966 = vadd.f32 %v2846, %v2965
        %v2967 = vpop.f32.mrf.mxu0
        %v2968 = vpop.f32.mrf.mxu0
        %2969 = vdwg.mxu0
        %v2970 = vmul.f32 %v2964, 0.5
        %v2971 = vmul.f32 %v2966, 0.5
        %v2972 = vmul.f32 %v2964, 0.044715
        %v2973 = vmul.f32 %v2966, 0.044715
        %v2974 = vmul.f32 %v2972, %v2964
        %v2975 = vmul.f32 %v2973, %v2966
        %v2976 = vmul.f32 %v2974, %v2964
        %v2977 = vmul.f32 %v2975, %v2966
        %v2978 = vadd.f32 %v2964, %v2976
        %v2979 = vadd.f32 %v2966, %v2977
        %v2980 = vmul.f32 %v2978, 0.7978846
        %v2981 = vmul.f32 %v2979, 0.7978846
        %v2982 = vtanh.pop %v2980
        %v2983 = vtanh.pop %v2981
        %v2984 = vadd.f32 %v2982, 1.0
        %v2985 = vadd.f32 %v2983, 1.0
        %v2986 = vmul.f32 %v2970, %v2984
        %v2987 = vmul.f32 %v2971, %v2985
        %v2988 = vpack.c.bf16 %v2986, %v2986
        %v2989 = vpack.c.bf16 %v2987, %v2987
        %s2990 = scalar_lea.vmem [#allocation7], 128
        %v2991 = vld [vmem:[%s2990] sm:$0xf]
        %v2992 = vld [vmem:[%s2990 + $0x4] sm:$0xf]
        %v2993 = vld [vmem:[%s2990 + $0x8] sm:$0xf]
        %v2994 = vld [vmem:[%s2990 + $0xc] sm:$0xf]
        %v2995 = vld [vmem:[%s2990 + $0x10] sm:$0xf]
        %v2996 = vld [vmem:[%s2990 + $0x14] sm:$0xf]
        %v2997 = vld [vmem:[%s2990 + $0x18] sm:$0xf]
        %v2998 = vld [vmem:[%s2990 + $0x1c] sm:$0xf]
        %v2999 = vld [vmem:[%s2990 + $0x20] sm:$0xf]
        %v3000 = vld [vmem:[%s2990 + $0x24] sm:$0xf]
        %v3001 = vld [vmem:[%s2990 + $0x28] sm:$0xf]
        %v3002 = vld [vmem:[%s2990 + $0x2c] sm:$0xf]
        %v3003 = vld [vmem:[%s2990 + $0x30] sm:$0xf]
        %v3004 = vld [vmem:[%s2990 + $0x34] sm:$0xf]
        %v3005 = vld [vmem:[%s2990 + $0x38] sm:$0xf]
        %v3006 = vld [vmem:[%s2990 + $0x3c] sm:$0xf]
        %v3007 = vld [vmem:[%s2990 + $0x40] sm:$0xf]
        %v3008 = vld [vmem:[%s2990 + $0x44] sm:$0xf]
        %v3009 = vld [vmem:[%s2990 + $0x48] sm:$0xf]
        %v3010 = vld [vmem:[%s2990 + $0x4c] sm:$0xf]
        %v3011 = vld [vmem:[%s2990 + $0x50] sm:$0xf]
        %v3012 = vld [vmem:[%s2990 + $0x54] sm:$0xf]
        %v3013 = vld [vmem:[%s2990 + $0x58] sm:$0xf]
        %v3014 = vld [vmem:[%s2990 + $0x5c] sm:$0xf]
        %v3015 = vld [vmem:[%s2990 + $0x60] sm:$0xf]
        %v3016 = vld [vmem:[%s2990 + $0x64] sm:$0xf]
        %v3017 = vld [vmem:[%s2990 + $0x68] sm:$0xf]
        %v3018 = vld [vmem:[%s2990 + $0x6c] sm:$0xf]
        %v3019 = vld [vmem:[%s2990 + $0x70] sm:$0xf]
        %v3020 = vld [vmem:[%s2990 + $0x74] sm:$0xf]
        %v3021 = vld [vmem:[%s2990 + $0x78] sm:$0xf]
        %v3022 = vld [vmem:[%s2990 + $0x7c] sm:$0xf]
        %s3023 = scalar_lea.vmem %s13, 1
        %v3024 = vld [vmem:[%s3023] sm:$0x1]
        %v3026 = vlaneseq
        %v3027 = vshrl.u32 %v3026, 7
        %v3028 = vsub.s32 0, %v3027
        %v3029 = vrot.slane %v3024, %v3028
        %v3063 = vunpack.c.l.b16 %v2991
        %v3064 = vunpack.c.l.b16 %v2992
        %v3065 = vunpack.c.l.b16 %v2993
        %v3066 = vunpack.c.l.b16 %v2994
        %v3067 = vunpack.c.l.b16 %v2995
        %v3068 = vunpack.c.l.b16 %v2996
        %v3069 = vunpack.c.l.b16 %v2997
        %v3070 = vunpack.c.l.b16 %v2998
        %v3071 = vunpack.c.l.b16 %v2999
        %v3072 = vunpack.c.l.b16 %v3000
        %v3073 = vunpack.c.l.b16 %v3001
        %v3074 = vunpack.c.l.b16 %v3002
        %v3075 = vunpack.c.l.b16 %v3003
        %v3076 = vunpack.c.l.b16 %v3004
        %v3077 = vunpack.c.l.b16 %v3005
        %v3078 = vunpack.c.l.b16 %v3006
        %v3079 = vunpack.c.l.b16 %v3007
        %v3080 = vunpack.c.l.b16 %v3008
        %v3081 = vunpack.c.l.b16 %v3009
        %v3082 = vunpack.c.l.b16 %v3010
        %v3083 = vunpack.c.l.b16 %v3011
        %v3084 = vunpack.c.l.b16 %v3012
        %v3085 = vunpack.c.l.b16 %v3013
        %v3086 = vunpack.c.l.b16 %v3014
        %v3087 = vunpack.c.l.b16 %v3015
        %v3088 = vunpack.c.l.b16 %v3016
        %v3089 = vunpack.c.l.b16 %v3017
        %v3090 = vunpack.c.l.b16 %v3018
        %v3091 = vunpack.c.l.b16 %v3019
        %v3092 = vunpack.c.l.b16 %v3020
        %v3093 = vunpack.c.l.b16 %v3021
        %v3094 = vunpack.c.l.b16 %v3022
        %v3095 = vpack.c.b16 %v3064, %v3063
        %v3096 = vpack.c.b16 %v3066, %v3065
        %v3097 = vpack.c.b16 %v3068, %v3067
        %v3098 = vpack.c.b16 %v3070, %v3069
        %v3099 = vpack.c.b16 %v3072, %v3071
        %v3100 = vpack.c.b16 %v3074, %v3073
        %v3101 = vpack.c.b16 %v3076, %v3075
        %v3102 = vpack.c.b16 %v3078, %v3077
        %v3103 = vpack.c.b16 %v3080, %v3079
        %v3104 = vpack.c.b16 %v3082, %v3081
        %v3105 = vpack.c.b16 %v3084, %v3083
        %v3106 = vpack.c.b16 %v3086, %v3085
        %v3107 = vpack.c.b16 %v3088, %v3087
        %v3108 = vpack.c.b16 %v3090, %v3089
        %v3109 = vpack.c.b16 %v3092, %v3091
        %v3110 = vpack.c.b16 %v3094, %v3093
        %3127 = vmatprep.subr.bf16.mxu0 0
        %3128 = vmatpush1.bf16.msra.mxu0 %v3102
        %3129 = vmatprep.subr.bf16.mxu0 0
        %3130 = vmatpush1.bf16.msra.mxu0 %v3101
        %3131 = vmatprep.subr.bf16.mxu0 0
        %3132 = vmatpush1.bf16.msra.mxu0 %v3100
        %3133 = vmatprep.subr.bf16.mxu0 0
        %3134 = vmatpush1.bf16.msra.mxu0 %v3099
        %3135 = vmatprep.subr.bf16.mxu0 0
        %3136 = vmatpush1.bf16.msra.mxu0 %v3098
        %3137 = vmatprep.subr.bf16.mxu0 0
        %3138 = vmatpush1.bf16.msra.mxu0 %v3097
        %3139 = vmatprep.subr.bf16.mxu0 0
        %3140 = vmatpush1.bf16.msra.mxu0 %v3096
        %3141 = vmatprep.subr.bf16.mxu0 0
        %3142 = vmatpush1.bf16.msra.mxu0 %v3095
        %3143 = vmatprep.subr.bf16.mxu0 0
        %3144 = vmatpush2.bf16.msra.mxu0 %v3110
        %3145 = vmatprep.subr.bf16.mxu0 0
        %3146 = vmatpush2.bf16.msra.mxu0 %v3109
        %3147 = vmatprep.subr.bf16.mxu0 0
        %3148 = vmatpush2.bf16.msra.mxu0 %v3108
        %3149 = vmatprep.subr.bf16.mxu0 0
        %3150 = vmatpush2.bf16.msra.mxu0 %v3107
        %3151 = vmatprep.subr.bf16.mxu0 0
        %3152 = vmatpush2.bf16.msra.mxu0 %v3106
        %3153 = vmatprep.subr.bf16.mxu0 0
        %3154 = vmatpush2.bf16.msra.mxu0 %v3105
        %3155 = vmatprep.subr.bf16.mxu0 0
        %3156 = vmatpush2.bf16.msra.mxu0 %v3104
        %3157 = vmatprep.subr.bf16.mxu0 0
        %3158 = vmatpush2.bf16.msra.mxu0 %v3103
        %3159 = vmatprep.mubr.bf16.mxu0 %v2989
        %3160 = vmatmul.mubr.bf16.gmra.mxu0 %v2988
        %v3161 = vpop.f32.mrf.mxu0
        %v3162 = vadd.f32 %v3029, %v3161
        %v3163 = vpop.f32.mrf.mxu0
        %v3164 = vpop.f32.mrf.mxu0
        %v3165 = vpop.f32.mrf.mxu0
        %3166 = vdwg.mxu0
        %v3167 = vadd.f32 %v3162, %v2817
        %s3168 = scalar_lea.vmem %s14, 1
        %v3169 = vld [vmem:[%s3168] sm:$0x1]
        %s3170 = scalar_lea.vmem %s15, 1
        %v3171 = vld [vmem:[%s3170] sm:$0x1]
        %3172 = vadd.xlane.f32.xlu0 %v3167
        %v3173 = vpop.xlane.xlu0 %3172
        %v3174 = vmul.f32 %v3173, %v704
        %v3175 = vsub.f32 %v3167, %v3174
        %v3176 = vmul.f32 %v3175, %v3175
        %3177 = vadd.xlane.f32.xlu0 %v3176
        %v3178 = vpop.xlane.xlu0 %3177
        %v3179 = vmul.f32 %v3178, %v704
        %v3180 = vadd.f32 %v3179, 1e-12
        %v3181 = vrsqrt.pop %v3180
        %v3182 = vmul.f32 %v3175, %v3181
        %v3184 = vlaneseq
        %v3185 = vshrl.u32 %v3184, 7
        %v3186 = vsub.s32 0, %v3185
        %v3187 = vrot.slane %v3169, %v3186
        %v3189 = vmul.f32 %v3182, %v3187
        %v3191 = vlaneseq
        %v3192 = vshrl.u32 %v3191, 7
        %v3193 = vsub.s32 0, %v3192
        %v3194 = vrot.slane %v3171, %v3193
        %v3196 = vadd.f32 %v3189, %v3194
        %v3197 = vpack.c.bf16 %v3196, %v3196
        %v3198 = vld [vmem:[%s16] sm:$0xf]
        %v3199 = vld [vmem:[%s16 + $0x4] sm:$0xf]
        %v3200 = vld [vmem:[%s16 + $0x8] sm:$0xf]
        %v3201 = vld [vmem:[%s16 + $0xc] sm:$0xf]
        %v3202 = vld [vmem:[%s16 + $0x10] sm:$0xf]
        %v3203 = vld [vmem:[%s16 + $0x14] sm:$0xf]
        %v3204 = vld [vmem:[%s16 + $0x18] sm:$0xf]
        %v3205 = vld [vmem:[%s16 + $0x1c] sm:$0xf]
        %v3206 = vld [vmem:[%s16 + $0x20] sm:$0xf]
        %v3207 = vld [vmem:[%s16 + $0x24] sm:$0xf]
        %v3208 = vld [vmem:[%s16 + $0x28] sm:$0xf]
        %v3209 = vld [vmem:[%s16 + $0x2c] sm:$0xf]
        %v3210 = vld [vmem:[%s16 + $0x30] sm:$0xf]
        %v3211 = vld [vmem:[%s16 + $0x34] sm:$0xf]
        %v3212 = vld [vmem:[%s16 + $0x38] sm:$0xf]
        %v3213 = vld [vmem:[%s16 + $0x3c] sm:$0xf]
        %v3214 = vld [vmem:[%s17] sm:$0x1]
        %v3231 = vunpack.c.l.b16 %v3198
        %v3232 = vunpack.c.l.b16 %v3199
        %v3233 = vunpack.c.l.b16 %v3200
        %v3234 = vunpack.c.l.b16 %v3201
        %v3235 = vunpack.c.l.b16 %v3202
        %v3236 = vunpack.c.l.b16 %v3203
        %v3237 = vunpack.c.l.b16 %v3204
        %v3238 = vunpack.c.l.b16 %v3205
        %v3239 = vunpack.c.l.b16 %v3206
        %v3240 = vunpack.c.l.b16 %v3207
        %v3241 = vunpack.c.l.b16 %v3208
        %v3242 = vunpack.c.l.b16 %v3209
        %v3243 = vunpack.c.l.b16 %v3210
        %v3244 = vunpack.c.l.b16 %v3211
        %v3245 = vunpack.c.l.b16 %v3212
        %v3246 = vunpack.c.l.b16 %v3213
        %v3247 = vpack.c.b16 %v3232, %v3231
        %v3248 = vpack.c.b16 %v3234, %v3233
        %v3249 = vpack.c.b16 %v3236, %v3235
        %v3250 = vpack.c.b16 %v3238, %v3237
        %v3251 = vpack.c.b16 %v3240, %v3239
        %v3252 = vpack.c.b16 %v3242, %v3241
        %v3253 = vpack.c.b16 %v3244, %v3243
        %v3254 = vpack.c.b16 %v3246, %v3245
        %3263 = vmatprep.subr.bf16.mxu0 0
        %3264 = vmatpush1.bf16.msra.mxu0 %v3254
        %3265 = vmatprep.subr.bf16.mxu0 0
        %3266 = vmatpush1.bf16.msra.mxu0 %v3253
        %3267 = vmatprep.subr.bf16.mxu0 0
        %3268 = vmatpush1.bf16.msra.mxu0 %v3252
        %3269 = vmatprep.subr.bf16.mxu0 0
        %3270 = vmatpush1.bf16.msra.mxu0 %v3251
        %3271 = vmatprep.subr.bf16.mxu0 0
        %3272 = vmatpush1.bf16.msra.mxu0 %v3250
        %3273 = vmatprep.subr.bf16.mxu0 0
        %3274 = vmatpush1.bf16.msra.mxu0 %v3249
        %3275 = vmatprep.subr.bf16.mxu0 0
        %3276 = vmatpush1.bf16.msra.mxu0 %v3248
        %3277 = vmatprep.subr.bf16.mxu0 0
        %3278 = vmatpush1.bf16.msra.mxu0 %v3247
        %3279 = vmatprep.subr.bf16.mxu0 0
        %3280 = vmatpush2.bf16.msra.mxu0 0
        %3281 = vmatprep.subr.bf16.mxu0 0
        %3282 = vmatpush2.bf16.msra.mxu0 0
        %3283 = vmatprep.subr.bf16.mxu0 0
        %3284 = vmatpush2.bf16.msra.mxu0 0
        %3285 = vmatprep.subr.bf16.mxu0 0
        %3286 = vmatpush2.bf16.msra.mxu0 0
        %3287 = vmatprep.subr.bf16.mxu0 0
        %3288 = vmatpush2.bf16.msra.mxu0 0
        %3289 = vmatprep.subr.bf16.mxu0 0
        %3290 = vmatpush2.bf16.msra.mxu0 0
        %3291 = vmatprep.subr.bf16.mxu0 0
        %3292 = vmatpush2.bf16.msra.mxu0 0
        %3293 = vmatprep.subr.bf16.mxu0 0
        %3294 = vmatpush2.bf16.msra.mxu0 0
        %3295 = vmatprep.mubr.bf16.mxu0 0
        %3296 = vmatmul.mubr.bf16.gmra.mxu0 %v3197
        %v3297 = vpop.f32.mrf.mxu0
        %v3298 = vadd.f32 %v3214, %v3297
        %v3299 = vpop.f32.mrf.mxu0
        %v3300 = vpop.f32.mrf.mxu0
        %v3301 = vpop.f32.mrf.mxu0
        %3302 = vdwg.mxu0
        %v3303 = vtanh.pop %v3298
        %v3304 = vpack.c.bf16 %v3303, %v3303
        %v3305 = vld [vmem:[%s18] sm:$0xf]
        %v3306 = vld [vmem:[%s18 + $0x4] sm:$0xf]
        %v3307 = vld [vmem:[%s18 + $0x8] sm:$0xf]
        %v3308 = vld [vmem:[%s18 + $0xc] sm:$0xf]
        %v3309 = vld [vmem:[%s18 + $0x10] sm:$0xf]
        %v3310 = vld [vmem:[%s18 + $0x14] sm:$0xf]
        %v3311 = vld [vmem:[%s18 + $0x18] sm:$0xf]
        %v3312 = vld [vmem:[%s18 + $0x1c] sm:$0xf]
        %v3313 = vld [vmem:[%s18 + $0x20] sm:$0xf]
        %v3314 = vld [vmem:[%s18 + $0x24] sm:$0xf]
        %v3315 = vld [vmem:[%s18 + $0x28] sm:$0xf]
        %v3316 = vld [vmem:[%s18 + $0x2c] sm:$0xf]
        %v3317 = vld [vmem:[%s18 + $0x30] sm:$0xf]
        %v3318 = vld [vmem:[%s18 + $0x34] sm:$0xf]
        %v3319 = vld [vmem:[%s18 + $0x38] sm:$0xf]
        %v3320 = vld [vmem:[%s18 + $0x3c] sm:$0xf]
        %v3321 = vld [vmem:[%s19] sm:$0x1]
        %v3338 = vunpack.c.l.b16 %v3305
        %v3339 = vunpack.c.l.b16 %v3306
        %v3340 = vunpack.c.l.b16 %v3307
        %v3341 = vunpack.c.l.b16 %v3308
        %v3342 = vunpack.c.l.b16 %v3309
        %v3343 = vunpack.c.l.b16 %v3310
        %v3344 = vunpack.c.l.b16 %v3311
        %v3345 = vunpack.c.l.b16 %v3312
        %v3346 = vunpack.c.l.b16 %v3313
        %v3347 = vunpack.c.l.b16 %v3314
        %v3348 = vunpack.c.l.b16 %v3315
        %v3349 = vunpack.c.l.b16 %v3316
        %v3350 = vunpack.c.l.b16 %v3317
        %v3351 = vunpack.c.l.b16 %v3318
        %v3352 = vunpack.c.l.b16 %v3319
        %v3353 = vunpack.c.l.b16 %v3320
        %v3354 = vpack.c.b16 %v3339, %v3338
        %v3355 = vpack.c.b16 %v3341, %v3340
        %v3356 = vpack.c.b16 %v3343, %v3342
        %v3357 = vpack.c.b16 %v3345, %v3344
        %v3358 = vpack.c.b16 %v3347, %v3346
        %v3359 = vpack.c.b16 %v3349, %v3348
        %v3360 = vpack.c.b16 %v3351, %v3350
        %v3361 = vpack.c.b16 %v3353, %v3352
        %3370 = vmatprep.subr.bf16.mxu0 0
        %3371 = vmatpush1.bf16.msra.mxu0 %v3361
        %3372 = vmatprep.subr.bf16.mxu0 0
        %3373 = vmatpush1.bf16.msra.mxu0 %v3360
        %3374 = vmatprep.subr.bf16.mxu0 0
        %3375 = vmatpush1.bf16.msra.mxu0 %v3359
        %3376 = vmatprep.subr.bf16.mxu0 0
        %3377 = vmatpush1.bf16.msra.mxu0 %v3358
        %3378 = vmatprep.subr.bf16.mxu0 0
        %3379 = vmatpush1.bf16.msra.mxu0 %v3357
        %3380 = vmatprep.subr.bf16.mxu0 0
        %3381 = vmatpush1.bf16.msra.mxu0 %v3356
        %3382 = vmatprep.subr.bf16.mxu0 0
        %3383 = vmatpush1.bf16.msra.mxu0 %v3355
        %3384 = vmatprep.subr.bf16.mxu0 0
        %3385 = vmatpush1.bf16.msra.mxu0 %v3354
        %3386 = vmatprep.subr.bf16.mxu0 0
        %3387 = vmatpush2.bf16.msra.mxu0 0
        %3388 = vmatprep.subr.bf16.mxu0 0
        %3389 = vmatpush2.bf16.msra.mxu0 0
        %3390 = vmatprep.subr.bf16.mxu0 0
        %3391 = vmatpush2.bf16.msra.mxu0 0
        %3392 = vmatprep.subr.bf16.mxu0 0
        %3393 = vmatpush2.bf16.msra.mxu0 0
        %3394 = vmatprep.subr.bf16.mxu0 0
        %3395 = vmatpush2.bf16.msra.mxu0 0
        %3396 = vmatprep.subr.bf16.mxu0 0
        %3397 = vmatpush2.bf16.msra.mxu0 0
        %3398 = vmatprep.subr.bf16.mxu0 0
        %3399 = vmatpush2.bf16.msra.mxu0 0
        %3400 = vmatprep.subr.bf16.mxu0 0
        %3401 = vmatpush2.bf16.msra.mxu0 0
        %3402 = vmatprep.mubr.bf16.mxu0 0
        %3403 = vmatmul.mubr.bf16.gmra.mxu0 %v3304
        %v3404 = vpop.f32.mrf.mxu0
        %v3405 = vadd.f32 %v3321, %v3404
        %v3406 = vpop.f32.mrf.mxu0
        %v3407 = vpop.f32.mrf.mxu0
        %v3408 = vpop.f32.mrf.mxu0
        %3409 = vdwg.mxu0
        %v3410 = vmax.f32 %v3405, 0.0
        %v3411 = vlaneseq
        %v3412 = vshrl.u32 %v3411, 7
        %v3413 = vsub.s32 0, %v3412
        %v3414 = vrot.slane %v3410, %v3413
        %3415 = vst [vmem:[%s697] sm:$0xff] %v3414
        %p3416 = scmp.lt.s32.totalorder %s34, 1
        %s3417 = scalar_select %p3416, %s34, 1
        %s3418 = smul.addr %s3417, 8
        %s3419 = scalar_lea.vmem %s20, %s3418
        // Predicated region
        $region117: #{bert_classifier_forward.1} parent=99 // pred_check
          %p3420 = pneg %p482
        $region118: #{bert_classifier_forward.1} parent=99 // pred_check_branch
          %3422 = sbr.rel (%p3420) target = $region120
        $region119: #{bert_classifier_forward.1} parent=99 // pred_region
          _
        $region120: #{bert_classifier_forward.1} parent=99 // pred_fallthru
          _
      $region100: #{bert_classifier_forward.1} parent=5 // pred_fallthru
        _
      %p3423 = scmp.le.s32.totalorder 2, %s29
      // Predicated region
      $region121: #{bert_classifier_forward.1} parent=5 // pred_check
        %p3424 = pneg %p3423
      $region122: #{bert_classifier_forward.1} parent=5 // pred_check_branch
        %3426 = sbr.rel (%p3424) target = $region124
      $region123: #{bert_classifier_forward.1} parent=5 // pred_region
        %s3427 = ssub.s32 %s29, 2
        // Predicated region
        $region125: #{bert_classifier_forward.1} parent=123 // pred_check
          %p3428 = pneg %p488
        $region126: #{bert_classifier_forward.1} parent=123 // pred_check_branch
          %3430 = sbr.rel (%p3428) target = $region128
        $region127: #{bert_classifier_forward.1} parent=123 // pred_region
          %p3431 = scmp.lt.s32.totalorder %s35, 1
          %s3432 = scalar_select %p3431, %s35, 1
          %s3433 = smul.addr %s3432, 8
          %s3434 = scalar_lea.vmem %s20, %s3433
        $region128: #{bert_classifier_forward.1} parent=123 // pred_fallthru
          _
      $region124: #{bert_classifier_forward.1} parent=5 // pred_fallthru
        _
    $region6: #{bert_classifier_forward.1} parent=1 // loop_footer
      %s33 = sadd.s32 1, %s29
    $region7: #{bert_classifier_forward.1} parent=1 // loop_footer_branch
      %28 = sbr.rel target = $region3
    $region8: #{bert_classifier_forward.1} parent=1 // loop_exit
      _
    %3435 = vsyncpa [#allocation3], 1
    %s3436 = scalar_lea.sflag [#allocation3], 1
    %3437 = vsyncpa %s3436, 1
    %3438 = vsyncpa [#allocation5], 1
    %3439 = vsyncpa [#allocation8], 1

</llo_original>
